<compile_context>
chip_gen: v7x
topology: tpu7x:2x2x1
jax: 0.10.0
libtpu: 0.0.40
codegen_flags: <defaults>
</compile_context>

<pallas_src>
import functools

import jax
import jax.numpy as jnp
from jax.experimental import pallas as pl
from jax.experimental.pallas import tpu as pltpu

# ----------------------------- configuration --------------------------------
MULTIPLIER = 0.5                       # keeps channel counts small for the demo
STAGES_REPEATS = [3, 7, 3]
STAGES_OUT_CHANNELS = [24, 48, 96, 192, 1024]   # multiplier == 0.5
FEAT_DIM = 128
IMAGE_SIZE = 112                       # must be 112 so the 7x7 GDC conv is valid
BN_EPS = 1e-5

ACT_DTYPE = jnp.bfloat16               # HBM activations / matmul weights
VMEM_LIMIT = 32 * 1024 * 1024          # explicit scoped-VMEM cap (ok on v5e/v6e/v7x)
_TILE_BUDGET = 6 * 1024 * 1024         # per-block byte target (far below VMEM_LIMIT)


def _round_up(x, m):
    return (x + m - 1) // m * m


def _choose_tile_m(M, bytes_per_row):
    """Pick an M tile: big blocks to amortize per-step overhead, dividing M so
    no pad/slice copies are needed, multiple of 8 (sublane) unless the whole
    slab fits in one grid step."""
    cap = max(8, min(4096, _TILE_BUDGET // max(bytes_per_row, 1)))
    # Small slabs: one grid step, no padding, no slicing (block == full dim,
    # so the (8,128) divisibility rule does not apply).
    if M <= 1024 and M * bytes_per_row <= _TILE_BUDGET:
        return M, M
    # Large slabs: biggest multiple-of-8 divisor of M that leaves >=2 grid
    # steps (keeps both v7x TensorCores busy) and fits the budget.
    best = 0
    limit = min(M // 2, cap)
    t = 8
    while t <= limit:
        if M % t == 0:
            best = t
        t += 8
    if best:
        return best, M
    # Ragged fallback (never hit for this network): pad and slice.
    tile = max(8, (min(cap, 512) // 8) * 8)
    return tile, _round_up(M, tile)


# ----------------------------- pointwise kernel ------------------------------
def _pw_kernel(x_ref, w_ref, b_ref, a_ref, o_ref):
    # y = x @ w on the MXU (bf16 in, f32 accumulate); BN scale is pre-folded
    # into w, so the epilogue is just + bias and PReLU (alpha==1 -> identity).
    y = jnp.dot(x_ref[...], w_ref[...], preferred_element_type=jnp.float32)
    y = y + b_ref[...]
    y = jnp.where(y >= 0.0, y, a_ref[...] * y)
    o_ref[...] = y.astype(o_ref.dtype)


@functools.lru_cache(maxsize=None)
def _pw_fn(m_pad, k, n, tile_m, out_dtype):
    grid = (m_pad // tile_m,)
    return pl.pallas_call(
        _pw_kernel,
        out_shape=jax.ShapeDtypeStruct((m_pad, n), out_dtype),
        grid_spec=pltpu.PrefetchScalarGridSpec(
            num_scalar_prefetch=0,
            grid=grid,
            in_specs=[
                pl.BlockSpec((tile_m, k), lambda i: (i, 0)),   # activations
                pl.BlockSpec((k, n), lambda i: (0, 0)),        # weight (scale folded)
                pl.BlockSpec((1, n), lambda i: (0, 0)),        # bias (BN folded)
                pl.BlockSpec((1, n), lambda i: (0, 0)),        # PReLU alpha
            ],
            out_specs=pl.BlockSpec((tile_m, n), lambda i: (i, 0)),
        ),
        compiler_params=pltpu.CompilerParams(
            dimension_semantics=("parallel",),
            vmem_limit_bytes=VMEM_LIMIT),
    )


def pointwise(x2d, w, bias, alpha, out_dtype=ACT_DTYPE):
    """x2d: (M, K) pixel slab, w: (K, N) bf16.  Returns (M, N) out_dtype."""
    M, K = x2d.shape
    N = w.shape[1]
    x2d = x2d.astype(w.dtype)
    tile_m, m_pad = _choose_tile_m(M, (K + N) * 4)
    xp = x2d if m_pad == M else jnp.pad(x2d, ((0, m_pad - M), (0, 0)))
    out = _pw_fn(m_pad, K, N, tile_m, out_dtype)(
        xp, w,
        bias.reshape(1, N).astype(jnp.float32),
        alpha.reshape(1, N).astype(jnp.float32))
    return out if m_pad == M else out[:M]


# ----------------------------- depthwise kernel ------------------------------
def _make_dw_kernel(K, S, Ho, Wo):
    """KxK depthwise (stride S) on one batch sample.

    x_ref holds the S*S spatial parity components of the padded input
    ((1,Hp,Wp,C) slab when S==1); each tap is a static in-VMEM slice, so no
    tap stack is ever written to HBM.
    """
    def kernel(x_ref, w_ref, b_ref, a_ref, o_ref):
        acc = None
        for di in range(K):
            for dj in range(K):
                comp = (di % S) * S + (dj % S)
                r0, c0 = di // S, dj // S
                tap = x_ref[comp, r0:r0 + Ho, c0:c0 + Wo, :].astype(jnp.float32)
                wt = w_ref[di * K + dj:di * K + dj + 1, :]       # (1, C) f32
                term = tap * wt
                acc = term if acc is None else acc + term
        y = acc + b_ref[...]
        y = jnp.where(y >= 0.0, y, a_ref[...] * y)
        o_ref[0] = y.astype(o_ref.dtype)
    return kernel


@functools.lru_cache(maxsize=None)
def _dw_fn(K, S, B, Hq, Wq, C, Ho, Wo, out_dtype):
    S2 = S * S
    return pl.pallas_call(
        _make_dw_kernel(K, S, Ho, Wo),
        out_shape=jax.ShapeDtypeStruct((B, Ho, Wo, C), out_dtype),
        grid_spec=pltpu.PrefetchScalarGridSpec(
            num_scalar_prefetch=0,
            grid=(B,),
            in_specs=[
                pl.BlockSpec((S2, Hq, Wq, C), lambda b: (b, 0, 0, 0)),  # padded slab
                pl.BlockSpec((K * K, C), lambda b: (0, 0)),             # dw weights (scale folded)
                pl.BlockSpec((1, C), lambda b: (0, 0)),                 # bias
                pl.BlockSpec((1, C), lambda b: (0, 0)),                 # PReLU alpha
            ],
            out_specs=pl.BlockSpec((1, Ho, Wo, C), lambda b: (b, 0, 0, 0)),
        ),
        compiler_params=pltpu.CompilerParams(
            dimension_semantics=("parallel",),
            vmem_limit_bytes=VMEM_LIMIT),
    )


def apply_dw(p, x, ksize, stride, pad, out_dtype=ACT_DTYPE):
    """Depthwise KxK conv + folded BN (+PReLU) on an NHWC tensor."""
    B, H, W, C = x.shape
    S = stride
    Ho = (H + 2 * pad - ksize) // S + 1
    Wo = (W + 2 * pad - ksize) // S + 1
    if pad:
        x = jnp.pad(x, ((0, 0), (pad, pad), (pad, pad), (0, 0)))
    Hp, Wp = H + 2 * pad, W + 2 * pad
    if S == 1:
        Hq, Wq = Hp, Wp
        xq = x                                       # (B*1, Hq, Wq, C)
    else:
        # Parity decomposition: converts the strided KxK taps into unit-stride
        # slices of S*S contiguous components (no strided in-kernel access).
        Hq, Wq = -(-Hp // S), -(-Wp // S)
        if (Hq * S != Hp) or (Wq * S != Wp):
            x = jnp.pad(x, ((0, 0), (0, Hq * S - Hp), (0, Wq * S - Wp), (0, 0)))
        xq = x.reshape(B, Hq, S, Wq, S, C).transpose(0, 2, 4, 1, 3, 5)
        xq = xq.reshape(B * S * S, Hq, Wq, C)
    return _dw_fn(ksize, S, B, Hq, Wq, C, Ho, Wo, out_dtype)(
        xq.astype(ACT_DTYPE), p["w"],
        p["bias"].reshape(1, C).astype(jnp.float32),
        p["alpha"].reshape(1, C).astype(jnp.float32))


# ----------------------------- glue (reshapes etc.) --------------------------
def apply_pw(p, x, out_dtype=ACT_DTYPE):
    B, H, W, C = x.shape
    out = pointwise(x.reshape(B * H * W, C), p["w"], p["bias"], p["alpha"], out_dtype)
    return out.reshape(B, H, W, -1)


def im2col(x, ksize, stride, pad):
    """(kh, kw, cin)-ordered patches of an NHWC tensor -> (B*Ho*Wo, K*K*C)."""
    B, H, W, C = x.shape
    xp = jnp.pad(x, ((0, 0), (pad, pad), (pad, pad), (0, 0)))
    Ho = (H + 2 * pad - ksize) // stride + 1
    Wo = (W + 2 * pad - ksize) // stride + 1
    cols = []
    for di in range(ksize):
        for dj in range(ksize):
            cols.append(xp[:, di:di + stride * (Ho - 1) + 1:stride,
                           dj:dj + stride * (Wo - 1) + 1:stride, :])
    patches = jnp.concatenate(cols, axis=-1).reshape(B * Ho * Wo, ksize * ksize * C)
    return patches, (B, Ho, Wo)


def channel_shuffle_nhwc(x, groups):
    B, H, W, C = x.shape
    x = x.reshape(B, H, W, groups, C // groups)
    x = jnp.swapaxes(x, 3, 4)
    return x.reshape(B, H, W, C)


# ----------------------------- parameter construction ------------------------
def _conv_w(key, shape, fan_in):
    return jax.random.normal(key, shape, jnp.float32) * (2.0 / fan_in) ** 0.5


def _bn_fold(key, c):
    k1, k2, k3 = jax.random.split(key, 3)
    gamma = 1.0 + 0.1 * jax.random.normal(k1, (c,), jnp.float32)
    beta = 0.05 * jax.random.normal(k2, (c,), jnp.float32)
    mean = 0.05 * jax.random.normal(k3, (c,), jnp.float32)
    var = jnp.ones((c,), jnp.float32)
    scale = gamma / jnp.sqrt(var + BN_EPS)
    bias = beta - mean * scale
    return scale, bias


def make_pw(key, cin, cout, prelu):
    kw, kb = jax.random.split(key)
    scale, bias = _bn_fold(kb, cout)                 # single fold: scale/bias consistent
    w = _conv_w(kw, (cin, cout), cin) * scale[None, :]   # BN scale folded into weights
    return dict(w=w.astype(ACT_DTYPE), bias=bias,
                alpha=jnp.full((cout,), 0.25 if prelu else 1.0, jnp.float32))


def make_dw(key, c, ksize, prelu):
    kw, kb = jax.random.split(key)
    scale, bias = _bn_fold(kb, c)
    w = _conv_w(kw, (ksize * ksize, c), ksize * ksize) * scale[None, :]
    return dict(w=w, bias=bias,                      # dw weights stay f32 (tiny)
                alpha=jnp.full((c,), 0.25 if prelu else 1.0, jnp.float32))


def make_block(key, inp, oup, stride):
    bf = oup // 2
    keys = jax.random.split(key, 5)
    p = dict(stride=stride)
    if stride > 1:
        p["b1_dw"] = make_dw(keys[0], inp, 3, False)
        p["b1_pw"] = make_pw(keys[1], inp, bf, True)
        b2_in = inp
    else:
        b2_in = bf
    p["b2_pw1"] = make_pw(keys[2], b2_in, bf, True)
    p["b2_dw"] = make_dw(keys[3], bf, 3, False)
    p["b2_pw2"] = make_pw(keys[4], bf, bf, True)
    return p


def build_params(key):
    keys = iter(jax.random.split(key, 64))
    params = {}
    # NOTE: conv1 weight is stored as (kh*kw*cin, cout) matching the
    # (kh, kw, cin)-major im2col order; real PyTorch (cout,cin,kh,kw) weights
    # would need a permutation to (kh,kw,cin,cout) before reshape.
    params["conv1"] = make_pw(next(keys), 3 * 9, STAGES_OUT_CHANNELS[0], True)
    in_c = STAGES_OUT_CHANNELS[0]
    for name, repeats, out_c in zip(["stage2", "stage3", "stage4"],
                                    STAGES_REPEATS, STAGES_OUT_CHANNELS[1:4]):
        blocks = [make_block(next(keys), in_c, out_c, 2)]
        for _ in range(repeats - 1):
            blocks.append(make_block(next(keys), out_c, out_c, 1))
        params[name] = blocks
        in_c = out_c
    last_c = STAGES_OUT_CHANNELS[-1]
    params["conv5"] = make_pw(next(keys), in_c, last_c, True)
    params["gdc"] = make_dw(next(keys), last_c, 7, True)
    k1, k2, k3 = jax.random.split(next(keys), 3)
    w = _conv_w(k1, (last_c, FEAT_DIM), last_c)
    b_conv = 0.01 * jax.random.normal(k2, (FEAT_DIM,), jnp.float32)
    scale_bn, bias_bn = _bn_fold(k3, FEAT_DIM)
    params["linear"] = dict(
        w=(w * scale_bn[None, :]).astype(ACT_DTYPE),      # conv weight * BN scale
        bias=b_conv * scale_bn + bias_bn,                 # conv bias folded through BN
        alpha=jnp.ones((FEAT_DIM,), jnp.float32),         # no PReLU after bn
    )
    return params


# ----------------------------- forward pass ----------------------------------
def apply_block(p, x):
    if p["stride"] == 1:
        C = x.shape[-1]
        x1, x2 = x[..., : C // 2], x[..., C // 2:]
        b2 = apply_pw(p["b2_pw1"], x2)
        b2 = apply_dw(p["b2_dw"], b2, 3, 1, 1)
        b2 = apply_pw(p["b2_pw2"], b2)
        out = jnp.concatenate([x1, b2], axis=-1)
    else:
        s = p["stride"]
        b1 = apply_dw(p["b1_dw"], x, 3, s, 1)
        b1 = apply_pw(p["b1_pw"], b1)
        b2 = apply_pw(p["b2_pw1"], x)
        b2 = apply_dw(p["b2_dw"], b2, 3, s, 1)
        b2 = apply_pw(p["b2_pw2"], b2)
        out = jnp.concatenate([b1, b2], axis=-1)
    # TODO(synk): concat + channel_shuffle stay as a cheap XLA pass; fully
    # fusing them into the block's out_spec (lane-interleaved write) would need
    # a per-block fused pw->dw->pw kernel and is left as further work.
    return channel_shuffle_nhwc(out, 2)


def forward(params, x_nchw):
    B, C, H, W = x_nchw.shape
    # F.interpolate(..., size=(112,112)), default mode='nearest'
    ih = (jnp.arange(IMAGE_SIZE) * H) // IMAGE_SIZE
    iw = (jnp.arange(IMAGE_SIZE) * W) // IMAGE_SIZE
    x = x_nchw[:, :, ih, :][:, :, :, iw]
    x = jnp.transpose(x, (0, 2, 3, 1)).astype(ACT_DTYPE)      # -> NHWC bf16
    # conv1: 3x3 / stride 2 / pad 1 on 3 channels via im2col + matmul kernel
    patches, (_, Ho, Wo) = im2col(x, 3, 2, 1)
    c1 = params["conv1"]
    x = pointwise(patches, c1["w"], c1["bias"], c1["alpha"]).reshape(B, Ho, Wo, -1)
    for name in ["stage2", "stage3", "stage4"]:
        for blk in params[name]:
            x = apply_block(blk, x)
    x = apply_pw(params["conv5"], x)                          # (B, 7, 7, 1024)
    x = apply_dw(params["gdc"], x, 7, 1, 0)                   # (B, 1, 1, 1024)
    x = x.reshape(B, STAGES_OUT_CHANNELS[-1])
    lin = params["linear"]
    x = pointwise(x, lin["w"], lin["bias"], lin["alpha"], out_dtype=jnp.float32)
    return x                                                  # (B, 128) f32


# TODO(synk): self.maxpool is defined in the module but never used in
# _forward_impl, so it is intentionally not implemented here.

if __name__ == "__main__":
    key = jax.random.PRNGKey(0)
    kx, kp = jax.random.split(key)
    x = jax.random.normal(kx, (2, 3, 16, 16), jnp.float32)    # small NCHW input
    params = build_params(kp)
    out = forward(params, x)
    out = jax.block_until_ready(out)
    assert out.shape == (2, FEAT_DIM), out.shape
    assert bool(jnp.all(jnp.isfinite(out)))
    print("KERNEL_OK")
</pallas_src>

<mosaic_0001>
module attributes {stable_mosaic.version = 11 : i64} {
  func.func @_pw_kernel(%arg0: i32, %arg1: memref<3136x27xbf16, #tpu.memory_space<vmem>>, %arg2: memref<27x24xbf16, #tpu.memory_space<vmem>>, %arg3: memref<1x24xf32, #tpu.memory_space<vmem>>, %arg4: memref<1x24xf32, #tpu.memory_space<vmem>>, %arg5: memref<3136x24xbf16, #tpu.memory_space<vmem>>) attributes {dimension_semantics = [#tpu.dimension_semantics<parallel>], iteration_bounds = array<i64: 2>, scalar_prefetch = 0 : i64, scratch_operands = 0 : i64, tpu.core_type = #tpu.core_type<tc>, window_params = [{transform_indices = @transform_0, window_bounds = array<i64: 3136, 27>}, {pipeline_mode = #tpu.pipeline_mode<synchronous>, transform_indices = @transform_1, window_bounds = array<i64: 27, 24>}, {pipeline_mode = #tpu.pipeline_mode<synchronous>, transform_indices = @transform_2, window_bounds = array<i64: 1, 24>}, {pipeline_mode = #tpu.pipeline_mode<synchronous>, transform_indices = @transform_3, window_bounds = array<i64: 1, 24>}, {transform_indices = @transform_4, window_bounds = array<i64: 3136, 24>}]} {
    %c0 = arith.constant 0 : index
    %c0_0 = arith.constant 0 : index
    %0 = vector.load %arg1[%c0, %c0_0] : memref<3136x27xbf16, #tpu.memory_space<vmem>>, vector<3136x27xbf16>
    %c0_1 = arith.constant 0 : index
    %c0_2 = arith.constant 0 : index
    %1 = vector.load %arg2[%c0_1, %c0_2] : memref<27x24xbf16, #tpu.memory_space<vmem>>, vector<27x24xbf16>
    %cst = arith.constant dense<0.000000e+00> : vector<3136x24xf32>
    %2 = tpu.matmul %0, %1, %cst {dimension_numbers = #tpu.dot_dimension_numbers<[1], [0], [0], [1], [0, 0, 1, 1], [], []>} : vector<3136x27xbf16>, vector<27x24xbf16>, vector<3136x24xf32> -> vector<3136x24xf32>
    %c0_3 = arith.constant 0 : index
    %c0_4 = arith.constant 0 : index
    %3 = vector.load %arg3[%c0_3, %c0_4] : memref<1x24xf32, #tpu.memory_space<vmem>>, vector<1x24xf32>
    %4 = vector.broadcast %3 : vector<1x24xf32> to vector<3136x24xf32>
    %5 = arith.addf %2, %4 : vector<3136x24xf32>
    %cst_5 = arith.constant 0.000000e+00 : f32
    %6 = vector.broadcast %cst_5 : f32 to vector<3136x24xf32>
    %7 = arith.cmpf oge, %5, %6 : vector<3136x24xf32>
    %c0_6 = arith.constant 0 : index
    %c0_7 = arith.constant 0 : index
    %8 = vector.load %arg4[%c0_6, %c0_7] : memref<1x24xf32, #tpu.memory_space<vmem>>, vector<1x24xf32>
    %9 = vector.broadcast %8 : vector<1x24xf32> to vector<3136x24xf32>
    %10 = arith.mulf %9, %5 : vector<3136x24xf32>
    %11 = arith.select %7, %5, %10 : vector<3136x24xi1>, vector<3136x24xf32>
    %12 = arith.truncf %11 : vector<3136x24xf32> to vector<3136x24xbf16>
    %c0_8 = arith.constant 0 : index
    %c0_9 = arith.constant 0 : index
    %13 = vector.load %arg5[%c0_8, %c0_9] : memref<3136x24xbf16, #tpu.memory_space<vmem>>, vector<3136x24xbf16>
    tpu.vector_store %arg5[%c0_8, %c0_9], %12 {strides = array<i32>} : memref<3136x24xbf16, #tpu.memory_space<vmem>>, vector<3136x24xbf16>,
    return
  }
  func.func @transform_0(%arg0: i32) -> (i32, i32) {
    %c0_i32 = arith.constant 0 : i32
    %c0_i32_0 = arith.constant 0 : i32
    return %arg0, %c0_i32 : i32, i32
  }
  func.func @transform_1(%arg0: i32) -> (i32, i32) {
    %c0_i32 = arith.constant 0 : i32
    %c0_i32_0 = arith.constant 0 : i32
    %c0_i32_1 = arith.constant 0 : i32
    return %c0_i32, %c0_i32_0 : i32, i32
  }
  func.func @transform_2(%arg0: i32) -> (i32, i32) {
    %c0_i32 = arith.constant 0 : i32
    %c0_i32_0 = arith.constant 0 : i32
    %c0_i32_1 = arith.constant 0 : i32
    return %c0_i32, %c0_i32_0 : i32, i32
  }
  func.func @transform_3(%arg0: i32) -> (i32, i32) {
    %c0_i32 = arith.constant 0 : i32
    %c0_i32_0 = arith.constant 0 : i32
    %c0_i32_1 = arith.constant 0 : i32
    return %c0_i32, %c0_i32_0 : i32, i32
  }
  func.func @transform_4(%arg0: i32) -> (i32, i32) {
    %c0_i32 = arith.constant 0 : i32
    %c0_i32_0 = arith.constant 0 : i32
    return %arg0, %c0_i32 : i32, i32
  }
}

</mosaic_0001>

<llo_original>
// kernel: tpu_custom_call.1
$region0: #{tpu_custom_call.1}
  #allocation0 [shape = 'u32[]', space=smem, size = 0x4, offset = 0x4, fixed_abs, tag = 'smem constant byte address 0x4 - core index']
  #allocation1 [shape = 'u32[144,128]{1,0:T(1,128)}', space=vmem, size = 0x12000, scoped, tag = 'internal scratch']
  %s0 = inlined_call_operand.vmem [shape: bf16[6272,27], index: 0, kind: input, shape index: {}]
  %s1 = inlined_call_operand.vmem [shape: bf16[27,24], index: 1, kind: input, shape index: {}]
  %s2 = inlined_call_operand.vmem [shape: f32[1,24], index: 2, kind: input, shape index: {}]
  %s3 = inlined_call_operand.vmem [shape: f32[1,24], index: 3, kind: input, shape index: {}]
  %s4 = inlined_call_operand.vmem [shape: bf16[6272,24], index: 4, kind: output, shape index: {}]
  %s5 = sld [smem:[#allocation0]]
  $region49: #{tpu_custom_call.1} parent=0
    _
  %s7 = ssub.s32 1, %s5
  %s8 = scalar_select 0, %s7, %s5
  loop: start=0, step=1, limit=4
  $region2: #{tpu_custom_call.1} parent=0 // loop_pre_header
    _
  $region3: #{tpu_custom_call.1} parent=0 // loop_header
    %s10 = sphi 0, %s14
    %p11 = scmp.ge.s32.totalorder %s10, 4
    %s20 = sphi 0, %s22
    %s23 = sphi 0, %s20
    %s24 = sphi 0, %s23
    %s40 = sphi 0, %s24
    %s44 = sphi 0, %s44
    %s46 = sphi 0, %s44
    %s47 = sphi 0, %s46
    %s61 = sphi 0, %s47
    %s65 = sphi 0, %s65
    %s67 = sphi 0, %s65
    %s68 = sphi 0, %s67
    %s82 = sphi 0, %s68
    %s86 = sphi 0, %s86
    %s88 = sphi 0, %s86
    %s89 = sphi 0, %s88
    %s103 = sphi 0, %s89
    %s109 = sphi 0, %s111
    %s112 = sphi 0, %s109
    %s113 = sphi 0, %s112
    %s129 = sphi 0, %s113
  $region4: #{tpu_custom_call.1} parent=0 // loop_header_branch
    %13 = sbr.rel (%p11) target = $region8
  $region5: #{tpu_custom_call.1} parent=0 // loop_body
    %s15 = ssub.s32 %s10, 1
    %s16 = ssub.s32 %s10, 2
    %s17 = sadd.s32 %s10, 1
    %s18 = ssub.s32 %s10, %s17
    %p19 = scmp.eq.s32.totalorder %s18, 0
    %s21 = sadd.s32 %s20, 1
    %s22 = scalar_select %p19, %s20, %s21
    %p25 = pneg %p19
    %p26 = scmp.eq.s32.totalorder %s10, 1
    %p27 = por %p25, %p26
    %p28 = scmp.ne.s32.totalorder %s20, %s23
    %p29 = scmp.eq.s32.totalorder %s10, 0
    %p30 = por %p28, %p29
    %p31 = scmp.ne.s32.totalorder %s20, %s23
    %p32 = scmp.eq.s32.totalorder %s15, 1
    %p33 = por %p31, %p32
    %p34 = scmp.ne.s32.totalorder %s23, %s24
    %p35 = scmp.eq.s32.totalorder %s15, 0
    %p36 = por %p34, %p35
    %p37 = scmp.ne.s32.totalorder %s23, %s24
    %p38 = scmp.eq.s32.totalorder %s16, 1
    %p39 = por %p37, %p38
    %p41 = scmp.ne.s32.totalorder %s24, %s40
    %p42 = scmp.eq.s32.totalorder %s16, 0
    %p43 = por %p41, %p42
    %s45 = sadd.s32 %s44, 1
    %p48 = scmp.eq.s32.totalorder %s10, 1
    %p49 = scmp.ne.s32.totalorder %s44, %s46
    %p50 = scmp.eq.s32.totalorder %s10, 0
    %p51 = por %p49, %p50
    %p52 = scmp.ne.s32.totalorder %s44, %s46
    %p53 = scmp.eq.s32.totalorder %s15, 1
    %p54 = por %p52, %p53
    %p55 = scmp.ne.s32.totalorder %s46, %s47
    %p56 = scmp.eq.s32.totalorder %s15, 0
    %p57 = por %p55, %p56
    %p58 = scmp.ne.s32.totalorder %s46, %s47
    %p59 = scmp.eq.s32.totalorder %s16, 1
    %p60 = por %p58, %p59
    %p62 = scmp.ne.s32.totalorder %s47, %s61
    %p63 = scmp.eq.s32.totalorder %s16, 0
    %p64 = por %p62, %p63
    %s66 = sadd.s32 %s65, 1
    %p69 = scmp.eq.s32.totalorder %s10, 1
    %p70 = scmp.ne.s32.totalorder %s65, %s67
    %p71 = scmp.eq.s32.totalorder %s10, 0
    %p72 = por %p70, %p71
    %p73 = scmp.ne.s32.totalorder %s65, %s67
    %p74 = scmp.eq.s32.totalorder %s15, 1
    %p75 = por %p73, %p74
    %p76 = scmp.ne.s32.totalorder %s67, %s68
    %p77 = scmp.eq.s32.totalorder %s15, 0
    %p78 = por %p76, %p77
    %p79 = scmp.ne.s32.totalorder %s67, %s68
    %p80 = scmp.eq.s32.totalorder %s16, 1
    %p81 = por %p79, %p80
    %p83 = scmp.ne.s32.totalorder %s68, %s82
    %p84 = scmp.eq.s32.totalorder %s16, 0
    %p85 = por %p83, %p84
    %s87 = sadd.s32 %s86, 1
    %p90 = scmp.eq.s32.totalorder %s10, 1
    %p91 = scmp.ne.s32.totalorder %s86, %s88
    %p92 = scmp.eq.s32.totalorder %s10, 0
    %p93 = por %p91, %p92
    %p94 = scmp.ne.s32.totalorder %s86, %s88
    %p95 = scmp.eq.s32.totalorder %s15, 1
    %p96 = por %p94, %p95
    %p97 = scmp.ne.s32.totalorder %s88, %s89
    %p98 = scmp.eq.s32.totalorder %s15, 0
    %p99 = por %p97, %p98
    %p100 = scmp.ne.s32.totalorder %s88, %s89
    %p101 = scmp.eq.s32.totalorder %s16, 1
    %p102 = por %p100, %p101
    %p104 = scmp.ne.s32.totalorder %s89, %s103
    %p105 = scmp.eq.s32.totalorder %s16, 0
    %p106 = por %p104, %p105
    %s107 = ssub.s32 %s10, %s17
    %p108 = scmp.eq.s32.totalorder %s107, 0
    %s110 = sadd.s32 %s109, 1
    %s111 = scalar_select %p108, %s109, %s110
    %p114 = pneg %p108
    %p115 = scmp.eq.s32.totalorder %s10, 1
    %p116 = por %p114, %p115
    %p117 = scmp.ne.s32.totalorder %s109, %s112
    %p118 = scmp.eq.s32.totalorder %s10, 0
    %p119 = por %p117, %p118
    %p120 = scmp.ne.s32.totalorder %s109, %s112
    %p121 = scmp.eq.s32.totalorder %s15, 1
    %p122 = por %p120, %p121
    %p123 = scmp.ne.s32.totalorder %s112, %s113
    %p124 = scmp.eq.s32.totalorder %s15, 0
    %p125 = por %p123, %p124
    %p126 = scmp.ne.s32.totalorder %s112, %s113
    %p127 = scmp.eq.s32.totalorder %s16, 1
    %p128 = por %p126, %p127
    %p130 = scmp.ne.s32.totalorder %s113, %s129
    %p131 = scmp.eq.s32.totalorder %s16, 0
    %p132 = por %p130, %p131
    %p133 = scmp.le.s32.totalorder 1, %s10
    %p134 = scmp.lt.s32.totalorder %s10, 3
    %p135 = pnand %p133, %p134
    %p136 = pneg %p135
    // Predicated region
    $region9: #{tpu_custom_call.1} parent=5 // pred_check
      _
    $region10: #{tpu_custom_call.1} parent=5 // pred_check_branch
      %138 = sbr.rel (%p135) target = $region12
    $region11: #{tpu_custom_call.1} parent=5 // pred_region
      %s139 = ssub.s32 %s10, 1
      // Predicated region
      $region13: #{tpu_custom_call.1} parent=11 // pred_check
        %p140 = pneg %p57
      $region14: #{tpu_custom_call.1} parent=11 // pred_check_branch
        %142 = sbr.rel (%p140) target = $region16
      $region15: #{tpu_custom_call.1} parent=11 // pred_region
        _
      $region16: #{tpu_custom_call.1} parent=11 // pred_fallthru
        _
      // Predicated region
      $region17: #{tpu_custom_call.1} parent=11 // pred_check
        %p143 = pneg %p78
      $region18: #{tpu_custom_call.1} parent=11 // pred_check_branch
        %145 = sbr.rel (%p143) target = $region20
      $region19: #{tpu_custom_call.1} parent=11 // pred_region
        _
      $region20: #{tpu_custom_call.1} parent=11 // pred_fallthru
        _
      // Predicated region
      $region21: #{tpu_custom_call.1} parent=11 // pred_check
        %p146 = pneg %p99
      $region22: #{tpu_custom_call.1} parent=11 // pred_check_branch
        %148 = sbr.rel (%p146) target = $region24
      $region23: #{tpu_custom_call.1} parent=11 // pred_region
        _
      $region24: #{tpu_custom_call.1} parent=11 // pred_fallthru
        _
    $region12: #{tpu_custom_call.1} parent=5 // pred_fallthru
      _
    %p149 = scmp.lt.s32.totalorder %s10, 2
    // Predicated region
    $region25: #{tpu_custom_call.1} parent=5 // pred_check
      %p150 = pneg %p149
    $region26: #{tpu_custom_call.1} parent=5 // pred_check_branch
      %152 = sbr.rel (%p150) target = $region28
    $region27: #{tpu_custom_call.1} parent=5 // pred_region
      // Predicated region
      $region29: #{tpu_custom_call.1} parent=27 // pred_check
        %p153 = pneg %p30
      $region30: #{tpu_custom_call.1} parent=27 // pred_check_branch
        %155 = sbr.rel (%p153) target = $region32
      $region31: #{tpu_custom_call.1} parent=27 // pred_region
        %s156 = smul.u32 392, %s10
        %p157 = scmp.lt.s32.totalorder %s156, 783
        %s158 = scalar_select %p157, %s156, 783
        %s159 = smul.addr %s158, 4
        %s160 = scalar_lea.vmem %s0, %s159
        %s161 = smul.u32 392, %s10
      $region32: #{tpu_custom_call.1} parent=27 // pred_fallthru
        _
    $region28: #{tpu_custom_call.1} parent=5 // pred_fallthru
      _
    %p162 = scmp.le.s32.totalorder 1, %s10
    %p163 = scmp.lt.s32.totalorder %s10, 3
    %p164 = pnand %p162, %p163
    %p165 = pneg %p164
    // Predicated region
    $region33: #{tpu_custom_call.1} parent=5 // pred_check
      _
    $region34: #{tpu_custom_call.1} parent=5 // pred_check_branch
      %167 = sbr.rel (%p164) target = $region36
    $region35: #{tpu_custom_call.1} parent=5 // pred_region
      %s168 = ssub.s32 %s10, 1
      %s169 = smul.u32 392, %s15
      %p170 = scmp.lt.s32.totalorder %s169, 783
      %s171 = scalar_select %p170, %s169, 783
      %s172 = smul.addr %s171, 4
      %s173 = scalar_lea.vmem %s0, %s172
      %p174 = pneg %p36
      %p175 = pneg %p33
      %p176 = pneg %p57
      %p177 = pneg %p54
      %p178 = pneg %p78
      %p179 = pneg %p75
      %p180 = pneg %p99
      %p181 = pneg %p96
      %p182 = pneg %p125
      %p183 = pneg %p122
      %s184 = smul.u32 392, %s15
      %p185 = scmp.lt.s32.totalorder %s184, 783
      %s186 = scalar_select %p185, %s184, 783
      %s187 = smul.addr %s186, 4
      %s188 = scalar_lea.vmem %s4, %s187
      %s189 = smul.u32 392, %s15
      %p190 = scmp.lt.s32.totalorder %s189, 783
      %s191 = scalar_select %p190, %s189, 783
      %s192 = smul.addr %s191, 4
      %s193 = scalar_lea.vmem %s0, %s192
      %s194 = smul.u32 392, %s15
      %s195 = smul.u32 392, %s15
      %p196 = scmp.lt.s32.totalorder %s195, 783
      %s197 = scalar_select %p196, %s195, 783
      %s198 = smul.addr %s197, 4
      %s199 = scalar_lea.vmem %s4, %s198
      %s200 = smul.u32 392, %s15
      %v202 = vld [vmem:[%s193] sm:$0xf]
      %v203 = vld [vmem:[%s193 + $0x4] sm:$0xf]
      %v204 = vld [vmem:[%s193 + $0x8] sm:$0xf]
      %v205 = vld [vmem:[%s193 + $0xc] sm:$0xf]
      %v206 = vld [vmem:[%s193 + $0x10] sm:$0xf]
      %v207 = vld [vmem:[%s193 + $0x14] sm:$0xf]
      %v208 = vld [vmem:[%s193 + $0x18] sm:$0xf]
      %v209 = vld [vmem:[%s193 + $0x1c] sm:$0xf]
      %v210 = vld [vmem:[%s193 + $0x20] sm:$0xf]
      %v211 = vld [vmem:[%s193 + $0x24] sm:$0xf]
      %v212 = vld [vmem:[%s193 + $0x28] sm:$0xf]
      %v213 = vld [vmem:[%s193 + $0x2c] sm:$0xf]
      %v214 = vld [vmem:[%s193 + $0x30] sm:$0xf]
      %v215 = vld [vmem:[%s193 + $0x34] sm:$0xf]
      %v216 = vld [vmem:[%s193 + $0x38] sm:$0xf]
      %v217 = vld [vmem:[%s193 + $0x3c] sm:$0xf]
      %v218 = vld [vmem:[%s193 + $0x40] sm:$0xf]
      %v219 = vld [vmem:[%s193 + $0x44] sm:$0xf]
      %v220 = vld [vmem:[%s193 + $0x48] sm:$0xf]
      %v221 = vld [vmem:[%s193 + $0x4c] sm:$0xf]
      %v222 = vld [vmem:[%s193 + $0x50] sm:$0xf]
      %v223 = vld [vmem:[%s193 + $0x54] sm:$0xf]
      %v224 = vld [vmem:[%s193 + $0x58] sm:$0xf]
      %v225 = vld [vmem:[%s193 + $0x5c] sm:$0xf]
      %v226 = vld [vmem:[%s193 + $0x60] sm:$0xf]
      %v227 = vld [vmem:[%s193 + $0x64] sm:$0xf]
      %v228 = vld [vmem:[%s193 + $0x68] sm:$0xf]
      %v229 = vld [vmem:[%s193 + $0x6c] sm:$0xf]
      %v230 = vld [vmem:[%s193 + $0x70] sm:$0xf]
      %v231 = vld [vmem:[%s193 + $0x74] sm:$0xf]
      %v232 = vld [vmem:[%s193 + $0x78] sm:$0xf]
      %v233 = vld [vmem:[%s193 + $0x7c] sm:$0xf]
      %v234 = vld [vmem:[%s193 + $0x80] sm:$0xf]
      %v235 = vld [vmem:[%s193 + $0x84] sm:$0xf]
      %v236 = vld [vmem:[%s193 + $0x88] sm:$0xf]
      %v237 = vld [vmem:[%s193 + $0x8c] sm:$0xf]
      %v238 = vld [vmem:[%s193 + $0x90] sm:$0xf]
      %v239 = vld [vmem:[%s193 + $0x94] sm:$0xf]
      %v240 = vld [vmem:[%s193 + $0x98] sm:$0xf]
      %v241 = vld [vmem:[%s193 + $0x9c] sm:$0xf]
      %v242 = vld [vmem:[%s193 + $0xa0] sm:$0xf]
      %v243 = vld [vmem:[%s193 + $0xa4] sm:$0xf]
      %v244 = vld [vmem:[%s193 + $0xa8] sm:$0xf]
      %v245 = vld [vmem:[%s193 + $0xac] sm:$0xf]
      %v246 = vld [vmem:[%s193 + $0xb0] sm:$0xf]
      %v247 = vld [vmem:[%s193 + $0xb4] sm:$0xf]
      %v248 = vld [vmem:[%s193 + $0xb8] sm:$0xf]
      %v249 = vld [vmem:[%s193 + $0xbc] sm:$0xf]
      %v250 = vld [vmem:[%s193 + $0xc0] sm:$0xf]
      %v251 = vld [vmem:[%s193 + $0xc4] sm:$0xf]
      %v252 = vld [vmem:[%s193 + $0xc8] sm:$0xf]
      %v253 = vld [vmem:[%s193 + $0xcc] sm:$0xf]
      %v254 = vld [vmem:[%s193 + $0xd0] sm:$0xf]
      %v255 = vld [vmem:[%s193 + $0xd4] sm:$0xf]
      %v256 = vld [vmem:[%s193 + $0xd8] sm:$0xf]
      %v257 = vld [vmem:[%s193 + $0xdc] sm:$0xf]
      %v258 = vld [vmem:[%s193 + $0xe0] sm:$0xf]
      %v259 = vld [vmem:[%s193 + $0xe4] sm:$0xf]
      %v260 = vld [vmem:[%s193 + $0xe8] sm:$0xf]
      %v261 = vld [vmem:[%s193 + $0xec] sm:$0xf]
      %v262 = vld [vmem:[%s193 + $0xf0] sm:$0xf]
      %v263 = vld [vmem:[%s193 + $0xf4] sm:$0xf]
      %v264 = vld [vmem:[%s193 + $0xf8] sm:$0xf]
      %v265 = vld [vmem:[%s193 + $0xfc] sm:$0xf]
      %v266 = vld [vmem:[%s193 + $0x100] sm:$0xf]
      %v267 = vld [vmem:[%s193 + $0x104] sm:$0xf]
      %v268 = vld [vmem:[%s193 + $0x108] sm:$0xf]
      %v269 = vld [vmem:[%s193 + $0x10c] sm:$0xf]
      %v270 = vld [vmem:[%s193 + $0x110] sm:$0xf]
      %v271 = vld [vmem:[%s193 + $0x114] sm:$0xf]
      %v272 = vld [vmem:[%s193 + $0x118] sm:$0xf]
      %v273 = vld [vmem:[%s193 + $0x11c] sm:$0xf]
      %v274 = vld [vmem:[%s193 + $0x120] sm:$0xf]
      %v275 = vld [vmem:[%s193 + $0x124] sm:$0xf]
      %v276 = vld [vmem:[%s193 + $0x128] sm:$0xf]
      %v277 = vld [vmem:[%s193 + $0x12c] sm:$0xf]
      %v278 = vld [vmem:[%s193 + $0x130] sm:$0xf]
      %v279 = vld [vmem:[%s193 + $0x134] sm:$0xf]
      %v280 = vld [vmem:[%s193 + $0x138] sm:$0xf]
      %v281 = vld [vmem:[%s193 + $0x13c] sm:$0xf]
      %v282 = vld [vmem:[%s193 + $0x140] sm:$0xf]
      %v283 = vld [vmem:[%s193 + $0x144] sm:$0xf]
      %v284 = vld [vmem:[%s193 + $0x148] sm:$0xf]
      %v285 = vld [vmem:[%s193 + $0x14c] sm:$0xf]
      %v286 = vld [vmem:[%s193 + $0x150] sm:$0xf]
      %v287 = vld [vmem:[%s193 + $0x154] sm:$0xf]
      %v288 = vld [vmem:[%s193 + $0x158] sm:$0xf]
      %v289 = vld [vmem:[%s193 + $0x15c] sm:$0xf]
      %v290 = vld [vmem:[%s193 + $0x160] sm:$0xf]
      %v291 = vld [vmem:[%s193 + $0x164] sm:$0xf]
      %v292 = vld [vmem:[%s193 + $0x168] sm:$0xf]
      %v293 = vld [vmem:[%s193 + $0x16c] sm:$0xf]
      %v294 = vld [vmem:[%s193 + $0x170] sm:$0xf]
      %v295 = vld [vmem:[%s193 + $0x174] sm:$0xf]
      %v296 = vld [vmem:[%s193 + $0x178] sm:$0xf]
      %v297 = vld [vmem:[%s193 + $0x17c] sm:$0xf]
      %v298 = vld [vmem:[%s193 + $0x180] sm:$0xf]
      %v299 = vld [vmem:[%s193 + $0x184] sm:$0xf]
      %v300 = vld [vmem:[%s193 + $0x188] sm:$0xf]
      %v301 = vld [vmem:[%s193 + $0x18c] sm:$0xf]
      %v302 = vld [vmem:[%s193 + $0x190] sm:$0xf]
      %v303 = vld [vmem:[%s193 + $0x194] sm:$0xf]
      %v304 = vld [vmem:[%s193 + $0x198] sm:$0xf]
      %v305 = vld [vmem:[%s193 + $0x19c] sm:$0xf]
      %v306 = vld [vmem:[%s193 + $0x1a0] sm:$0xf]
      %v307 = vld [vmem:[%s193 + $0x1a4] sm:$0xf]
      %v308 = vld [vmem:[%s193 + $0x1a8] sm:$0xf]
      %v309 = vld [vmem:[%s193 + $0x1ac] sm:$0xf]
      %v310 = vld [vmem:[%s193 + $0x1b0] sm:$0xf]
      %v311 = vld [vmem:[%s193 + $0x1b4] sm:$0xf]
      %v312 = vld [vmem:[%s193 + $0x1b8] sm:$0xf]
      %v313 = vld [vmem:[%s193 + $0x1bc] sm:$0xf]
      %v314 = vld [vmem:[%s193 + $0x1c0] sm:$0xf]
      %v315 = vld [vmem:[%s193 + $0x1c4] sm:$0xf]
      %v316 = vld [vmem:[%s193 + $0x1c8] sm:$0xf]
      %v317 = vld [vmem:[%s193 + $0x1cc] sm:$0xf]
      %v318 = vld [vmem:[%s193 + $0x1d0] sm:$0xf]
      %v319 = vld [vmem:[%s193 + $0x1d4] sm:$0xf]
      %v320 = vld [vmem:[%s193 + $0x1d8] sm:$0xf]
      %v321 = vld [vmem:[%s193 + $0x1dc] sm:$0xf]
      %v322 = vld [vmem:[%s193 + $0x1e0] sm:$0xf]
      %v323 = vld [vmem:[%s193 + $0x1e4] sm:$0xf]
      %v324 = vld [vmem:[%s193 + $0x1e8] sm:$0xf]
      %v325 = vld [vmem:[%s193 + $0x1ec] sm:$0xf]
      %v326 = vld [vmem:[%s193 + $0x1f0] sm:$0xf]
      %v327 = vld [vmem:[%s193 + $0x1f4] sm:$0xf]
      %v328 = vld [vmem:[%s193 + $0x1f8] sm:$0xf]
      %v329 = vld [vmem:[%s193 + $0x1fc] sm:$0xf]
      %v330 = vld [vmem:[%s193 + $0x200] sm:$0xf]
      %v331 = vld [vmem:[%s193 + $0x204] sm:$0xf]
      %v332 = vld [vmem:[%s193 + $0x208] sm:$0xf]
      %v333 = vld [vmem:[%s193 + $0x20c] sm:$0xf]
      %v334 = vld [vmem:[%s193 + $0x210] sm:$0xf]
      %v335 = vld [vmem:[%s193 + $0x214] sm:$0xf]
      %v336 = vld [vmem:[%s193 + $0x218] sm:$0xf]
      %v337 = vld [vmem:[%s193 + $0x21c] sm:$0xf]
      %v338 = vld [vmem:[%s193 + $0x220] sm:$0xf]
      %v339 = vld [vmem:[%s193 + $0x224] sm:$0xf]
      %v340 = vld [vmem:[%s193 + $0x228] sm:$0xf]
      %v341 = vld [vmem:[%s193 + $0x22c] sm:$0xf]
      %v342 = vld [vmem:[%s193 + $0x230] sm:$0xf]
      %v343 = vld [vmem:[%s193 + $0x234] sm:$0xf]
      %v344 = vld [vmem:[%s193 + $0x238] sm:$0xf]
      %v345 = vld [vmem:[%s193 + $0x23c] sm:$0xf]
      %v346 = vld [vmem:[%s193 + $0x240] sm:$0xf]
      %v347 = vld [vmem:[%s193 + $0x244] sm:$0xf]
      %v348 = vld [vmem:[%s193 + $0x248] sm:$0xf]
      %v349 = vld [vmem:[%s193 + $0x24c] sm:$0xf]
      %v350 = vld [vmem:[%s193 + $0x250] sm:$0xf]
      %v351 = vld [vmem:[%s193 + $0x254] sm:$0xf]
      %v352 = vld [vmem:[%s193 + $0x258] sm:$0xf]
      %v353 = vld [vmem:[%s193 + $0x25c] sm:$0xf]
      %v354 = vld [vmem:[%s193 + $0x260] sm:$0xf]
      %v355 = vld [vmem:[%s193 + $0x264] sm:$0xf]
      %v356 = vld [vmem:[%s193 + $0x268] sm:$0xf]
      %v357 = vld [vmem:[%s193 + $0x26c] sm:$0xf]
      %v358 = vld [vmem:[%s193 + $0x270] sm:$0xf]
      %v359 = vld [vmem:[%s193 + $0x274] sm:$0xf]
      %v360 = vld [vmem:[%s193 + $0x278] sm:$0xf]
      %v361 = vld [vmem:[%s193 + $0x27c] sm:$0xf]
      %v362 = vld [vmem:[%s193 + $0x280] sm:$0xf]
      %v363 = vld [vmem:[%s193 + $0x284] sm:$0xf]
      %v364 = vld [vmem:[%s193 + $0x288] sm:$0xf]
      %v365 = vld [vmem:[%s193 + $0x28c] sm:$0xf]
      %v366 = vld [vmem:[%s193 + $0x290] sm:$0xf]
      %v367 = vld [vmem:[%s193 + $0x294] sm:$0xf]
      %v368 = vld [vmem:[%s193 + $0x298] sm:$0xf]
      %v369 = vld [vmem:[%s193 + $0x29c] sm:$0xf]
      %v370 = vld [vmem:[%s193 + $0x2a0] sm:$0xf]
      %v371 = vld [vmem:[%s193 + $0x2a4] sm:$0xf]
      %v372 = vld [vmem:[%s193 + $0x2a8] sm:$0xf]
      %v373 = vld [vmem:[%s193 + $0x2ac] sm:$0xf]
      %v374 = vld [vmem:[%s193 + $0x2b0] sm:$0xf]
      %v375 = vld [vmem:[%s193 + $0x2b4] sm:$0xf]
      %v376 = vld [vmem:[%s193 + $0x2b8] sm:$0xf]
      %v377 = vld [vmem:[%s193 + $0x2bc] sm:$0xf]
      %v378 = vld [vmem:[%s193 + $0x2c0] sm:$0xf]
      %v379 = vld [vmem:[%s193 + $0x2c4] sm:$0xf]
      %v380 = vld [vmem:[%s193 + $0x2c8] sm:$0xf]
      %v381 = vld [vmem:[%s193 + $0x2cc] sm:$0xf]
      %v382 = vld [vmem:[%s193 + $0x2d0] sm:$0xf]
      %v383 = vld [vmem:[%s193 + $0x2d4] sm:$0xf]
      %v384 = vld [vmem:[%s193 + $0x2d8] sm:$0xf]
      %v385 = vld [vmem:[%s193 + $0x2dc] sm:$0xf]
      %v386 = vld [vmem:[%s193 + $0x2e0] sm:$0xf]
      %v387 = vld [vmem:[%s193 + $0x2e4] sm:$0xf]
      %v388 = vld [vmem:[%s193 + $0x2e8] sm:$0xf]
      %v389 = vld [vmem:[%s193 + $0x2ec] sm:$0xf]
      %v390 = vld [vmem:[%s193 + $0x2f0] sm:$0xf]
      %v391 = vld [vmem:[%s193 + $0x2f4] sm:$0xf]
      %v392 = vld [vmem:[%s193 + $0x2f8] sm:$0xf]
      %v393 = vld [vmem:[%s193 + $0x2fc] sm:$0xf]
      %v394 = vld [vmem:[%s193 + $0x300] sm:$0xf]
      %v395 = vld [vmem:[%s193 + $0x304] sm:$0xf]
      %v396 = vld [vmem:[%s193 + $0x308] sm:$0xf]
      %v397 = vld [vmem:[%s193 + $0x30c] sm:$0xf]
      %v398 = vld [vmem:[%s193 + $0x310] sm:$0xf]
      %v399 = vld [vmem:[%s193 + $0x314] sm:$0xf]
      %v400 = vld [vmem:[%s193 + $0x318] sm:$0xf]
      %v401 = vld [vmem:[%s193 + $0x31c] sm:$0xf]
      %v402 = vld [vmem:[%s193 + $0x320] sm:$0xf]
      %v403 = vld [vmem:[%s193 + $0x324] sm:$0xf]
      %v404 = vld [vmem:[%s193 + $0x328] sm:$0xf]
      %v405 = vld [vmem:[%s193 + $0x32c] sm:$0xf]
      %v406 = vld [vmem:[%s193 + $0x330] sm:$0xf]
      %v407 = vld [vmem:[%s193 + $0x334] sm:$0xf]
      %v408 = vld [vmem:[%s193 + $0x338] sm:$0xf]
      %v409 = vld [vmem:[%s193 + $0x33c] sm:$0xf]
      %v410 = vld [vmem:[%s193 + $0x340] sm:$0xf]
      %v411 = vld [vmem:[%s193 + $0x344] sm:$0xf]
      %v412 = vld [vmem:[%s193 + $0x348] sm:$0xf]
      %v413 = vld [vmem:[%s193 + $0x34c] sm:$0xf]
      %v414 = vld [vmem:[%s193 + $0x350] sm:$0xf]
      %v415 = vld [vmem:[%s193 + $0x354] sm:$0xf]
      %v416 = vld [vmem:[%s193 + $0x358] sm:$0xf]
      %v417 = vld [vmem:[%s193 + $0x35c] sm:$0xf]
      %v418 = vld [vmem:[%s193 + $0x360] sm:$0xf]
      %v419 = vld [vmem:[%s193 + $0x364] sm:$0xf]
      %v420 = vld [vmem:[%s193 + $0x368] sm:$0xf]
      %v421 = vld [vmem:[%s193 + $0x36c] sm:$0xf]
      %v422 = vld [vmem:[%s193 + $0x370] sm:$0xf]
      %v423 = vld [vmem:[%s193 + $0x374] sm:$0xf]
      %v424 = vld [vmem:[%s193 + $0x378] sm:$0xf]
      %v425 = vld [vmem:[%s193 + $0x37c] sm:$0xf]
      %v426 = vld [vmem:[%s193 + $0x380] sm:$0xf]
      %v427 = vld [vmem:[%s193 + $0x384] sm:$0xf]
      %v428 = vld [vmem:[%s193 + $0x388] sm:$0xf]
      %v429 = vld [vmem:[%s193 + $0x38c] sm:$0xf]
      %v430 = vld [vmem:[%s193 + $0x390] sm:$0xf]
      %v431 = vld [vmem:[%s193 + $0x394] sm:$0xf]
      %v432 = vld [vmem:[%s193 + $0x398] sm:$0xf]
      %v433 = vld [vmem:[%s193 + $0x39c] sm:$0xf]
      %v434 = vld [vmem:[%s193 + $0x3a0] sm:$0xf]
      %v435 = vld [vmem:[%s193 + $0x3a4] sm:$0xf]
      %v436 = vld [vmem:[%s193 + $0x3a8] sm:$0xf]
      %v437 = vld [vmem:[%s193 + $0x3ac] sm:$0xf]
      %v438 = vld [vmem:[%s193 + $0x3b0] sm:$0xf]
      %v439 = vld [vmem:[%s193 + $0x3b4] sm:$0xf]
      %v440 = vld [vmem:[%s193 + $0x3b8] sm:$0xf]
      %v441 = vld [vmem:[%s193 + $0x3bc] sm:$0xf]
      %v442 = vld [vmem:[%s193 + $0x3c0] sm:$0xf]
      %v443 = vld [vmem:[%s193 + $0x3c4] sm:$0xf]
      %v444 = vld [vmem:[%s193 + $0x3c8] sm:$0xf]
      %v445 = vld [vmem:[%s193 + $0x3cc] sm:$0xf]
      %v446 = vld [vmem:[%s193 + $0x3d0] sm:$0xf]
      %v447 = vld [vmem:[%s193 + $0x3d4] sm:$0xf]
      %v448 = vld [vmem:[%s193 + $0x3d8] sm:$0xf]
      %v449 = vld [vmem:[%s193 + $0x3dc] sm:$0xf]
      %v450 = vld [vmem:[%s193 + $0x3e0] sm:$0xf]
      %v451 = vld [vmem:[%s193 + $0x3e4] sm:$0xf]
      %v452 = vld [vmem:[%s193 + $0x3e8] sm:$0xf]
      %v453 = vld [vmem:[%s193 + $0x3ec] sm:$0xf]
      %v454 = vld [vmem:[%s193 + $0x3f0] sm:$0xf]
      %v455 = vld [vmem:[%s193 + $0x3f4] sm:$0xf]
      %v456 = vld [vmem:[%s193 + $0x3f8] sm:$0xf]
      %v457 = vld [vmem:[%s193 + $0x3fc] sm:$0xf]
      %v458 = vld [vmem:[%s193 + $0x400] sm:$0xf]
      %v459 = vld [vmem:[%s193 + $0x404] sm:$0xf]
      %v460 = vld [vmem:[%s193 + $0x408] sm:$0xf]
      %v461 = vld [vmem:[%s193 + $0x40c] sm:$0xf]
      %v462 = vld [vmem:[%s193 + $0x410] sm:$0xf]
      %v463 = vld [vmem:[%s193 + $0x414] sm:$0xf]
      %v464 = vld [vmem:[%s193 + $0x418] sm:$0xf]
      %v465 = vld [vmem:[%s193 + $0x41c] sm:$0xf]
      %v466 = vld [vmem:[%s193 + $0x420] sm:$0xf]
      %v467 = vld [vmem:[%s193 + $0x424] sm:$0xf]
      %v468 = vld [vmem:[%s193 + $0x428] sm:$0xf]
      %v469 = vld [vmem:[%s193 + $0x42c] sm:$0xf]
      %v470 = vld [vmem:[%s193 + $0x430] sm:$0xf]
      %v471 = vld [vmem:[%s193 + $0x434] sm:$0xf]
      %v472 = vld [vmem:[%s193 + $0x438] sm:$0xf]
      %v473 = vld [vmem:[%s193 + $0x43c] sm:$0xf]
      %v474 = vld [vmem:[%s193 + $0x440] sm:$0xf]
      %v475 = vld [vmem:[%s193 + $0x444] sm:$0xf]
      %v476 = vld [vmem:[%s193 + $0x448] sm:$0xf]
      %v477 = vld [vmem:[%s193 + $0x44c] sm:$0xf]
      %v478 = vld [vmem:[%s193 + $0x450] sm:$0xf]
      %v479 = vld [vmem:[%s193 + $0x454] sm:$0xf]
      %v480 = vld [vmem:[%s193 + $0x458] sm:$0xf]
      %v481 = vld [vmem:[%s193 + $0x45c] sm:$0xf]
      %v482 = vld [vmem:[%s193 + $0x460] sm:$0xf]
      %v483 = vld [vmem:[%s193 + $0x464] sm:$0xf]
      %v484 = vld [vmem:[%s193 + $0x468] sm:$0xf]
      %v485 = vld [vmem:[%s193 + $0x46c] sm:$0xf]
      %v486 = vld [vmem:[%s193 + $0x470] sm:$0xf]
      %v487 = vld [vmem:[%s193 + $0x474] sm:$0xf]
      %v488 = vld [vmem:[%s193 + $0x478] sm:$0xf]
      %v489 = vld [vmem:[%s193 + $0x47c] sm:$0xf]
      %v490 = vld [vmem:[%s193 + $0x480] sm:$0xf]
      %v491 = vld [vmem:[%s193 + $0x484] sm:$0xf]
      %v492 = vld [vmem:[%s193 + $0x488] sm:$0xf]
      %v493 = vld [vmem:[%s193 + $0x48c] sm:$0xf]
      %v494 = vld [vmem:[%s193 + $0x490] sm:$0xf]
      %v495 = vld [vmem:[%s193 + $0x494] sm:$0xf]
      %v496 = vld [vmem:[%s193 + $0x498] sm:$0xf]
      %v497 = vld [vmem:[%s193 + $0x49c] sm:$0xf]
      %v498 = vld [vmem:[%s193 + $0x4a0] sm:$0xf]
      %v499 = vld [vmem:[%s193 + $0x4a4] sm:$0xf]
      %v500 = vld [vmem:[%s193 + $0x4a8] sm:$0xf]
      %v501 = vld [vmem:[%s193 + $0x4ac] sm:$0xf]
      %v502 = vld [vmem:[%s193 + $0x4b0] sm:$0xf]
      %v503 = vld [vmem:[%s193 + $0x4b4] sm:$0xf]
      %v504 = vld [vmem:[%s193 + $0x4b8] sm:$0xf]
      %v505 = vld [vmem:[%s193 + $0x4bc] sm:$0xf]
      %v506 = vld [vmem:[%s193 + $0x4c0] sm:$0xf]
      %v507 = vld [vmem:[%s193 + $0x4c4] sm:$0xf]
      %v508 = vld [vmem:[%s193 + $0x4c8] sm:$0xf]
      %v509 = vld [vmem:[%s193 + $0x4cc] sm:$0xf]
      %v510 = vld [vmem:[%s193 + $0x4d0] sm:$0xf]
      %v511 = vld [vmem:[%s193 + $0x4d4] sm:$0xf]
      %v512 = vld [vmem:[%s193 + $0x4d8] sm:$0xf]
      %v513 = vld [vmem:[%s193 + $0x4dc] sm:$0xf]
      %v514 = vld [vmem:[%s193 + $0x4e0] sm:$0xf]
      %v515 = vld [vmem:[%s193 + $0x4e4] sm:$0xf]
      %v516 = vld [vmem:[%s193 + $0x4e8] sm:$0xf]
      %v517 = vld [vmem:[%s193 + $0x4ec] sm:$0xf]
      %v518 = vld [vmem:[%s193 + $0x4f0] sm:$0xf]
      %v519 = vld [vmem:[%s193 + $0x4f4] sm:$0xf]
      %v520 = vld [vmem:[%s193 + $0x4f8] sm:$0xf]
      %v521 = vld [vmem:[%s193 + $0x4fc] sm:$0xf]
      %v522 = vld [vmem:[%s193 + $0x500] sm:$0xf]
      %v523 = vld [vmem:[%s193 + $0x504] sm:$0xf]
      %v524 = vld [vmem:[%s193 + $0x508] sm:$0xf]
      %v525 = vld [vmem:[%s193 + $0x50c] sm:$0xf]
      %v526 = vld [vmem:[%s193 + $0x510] sm:$0xf]
      %v527 = vld [vmem:[%s193 + $0x514] sm:$0xf]
      %v528 = vld [vmem:[%s193 + $0x518] sm:$0xf]
      %v529 = vld [vmem:[%s193 + $0x51c] sm:$0xf]
      %v530 = vld [vmem:[%s193 + $0x520] sm:$0xf]
      %v531 = vld [vmem:[%s193 + $0x524] sm:$0xf]
      %v532 = vld [vmem:[%s193 + $0x528] sm:$0xf]
      %v533 = vld [vmem:[%s193 + $0x52c] sm:$0xf]
      %v534 = vld [vmem:[%s193 + $0x530] sm:$0xf]
      %v535 = vld [vmem:[%s193 + $0x534] sm:$0xf]
      %v536 = vld [vmem:[%s193 + $0x538] sm:$0xf]
      %v537 = vld [vmem:[%s193 + $0x53c] sm:$0xf]
      %v538 = vld [vmem:[%s193 + $0x540] sm:$0xf]
      %v539 = vld [vmem:[%s193 + $0x544] sm:$0xf]
      %v540 = vld [vmem:[%s193 + $0x548] sm:$0xf]
      %v541 = vld [vmem:[%s193 + $0x54c] sm:$0xf]
      %v542 = vld [vmem:[%s193 + $0x550] sm:$0xf]
      %v543 = vld [vmem:[%s193 + $0x554] sm:$0xf]
      %v544 = vld [vmem:[%s193 + $0x558] sm:$0xf]
      %v545 = vld [vmem:[%s193 + $0x55c] sm:$0xf]
      %v546 = vld [vmem:[%s193 + $0x560] sm:$0xf]
      %v547 = vld [vmem:[%s193 + $0x564] sm:$0xf]
      %v548 = vld [vmem:[%s193 + $0x568] sm:$0xf]
      %v549 = vld [vmem:[%s193 + $0x56c] sm:$0xf]
      %v550 = vld [vmem:[%s193 + $0x570] sm:$0xf]
      %v551 = vld [vmem:[%s193 + $0x574] sm:$0xf]
      %v552 = vld [vmem:[%s193 + $0x578] sm:$0xf]
      %v553 = vld [vmem:[%s193 + $0x57c] sm:$0xf]
      %v554 = vld [vmem:[%s193 + $0x580] sm:$0xf]
      %v555 = vld [vmem:[%s193 + $0x584] sm:$0xf]
      %v556 = vld [vmem:[%s193 + $0x588] sm:$0xf]
      %v557 = vld [vmem:[%s193 + $0x58c] sm:$0xf]
      %v558 = vld [vmem:[%s193 + $0x590] sm:$0xf]
      %v559 = vld [vmem:[%s193 + $0x594] sm:$0xf]
      %v560 = vld [vmem:[%s193 + $0x598] sm:$0xf]
      %v561 = vld [vmem:[%s193 + $0x59c] sm:$0xf]
      %v562 = vld [vmem:[%s193 + $0x5a0] sm:$0xf]
      %v563 = vld [vmem:[%s193 + $0x5a4] sm:$0xf]
      %v564 = vld [vmem:[%s193 + $0x5a8] sm:$0xf]
      %v565 = vld [vmem:[%s193 + $0x5ac] sm:$0xf]
      %v566 = vld [vmem:[%s193 + $0x5b0] sm:$0xf]
      %v567 = vld [vmem:[%s193 + $0x5b4] sm:$0xf]
      %v568 = vld [vmem:[%s193 + $0x5b8] sm:$0xf]
      %v569 = vld [vmem:[%s193 + $0x5bc] sm:$0xf]
      %v570 = vld [vmem:[%s193 + $0x5c0] sm:$0xf]
      %v571 = vld [vmem:[%s193 + $0x5c4] sm:$0xf]
      %v572 = vld [vmem:[%s193 + $0x5c8] sm:$0xf]
      %v573 = vld [vmem:[%s193 + $0x5cc] sm:$0xf]
      %v574 = vld [vmem:[%s193 + $0x5d0] sm:$0xf]
      %v575 = vld [vmem:[%s193 + $0x5d4] sm:$0xf]
      %v576 = vld [vmem:[%s193 + $0x5d8] sm:$0xf]
      %v577 = vld [vmem:[%s193 + $0x5dc] sm:$0xf]
      %v578 = vld [vmem:[%s193 + $0x5e0] sm:$0xf]
      %v579 = vld [vmem:[%s193 + $0x5e4] sm:$0xf]
      %v580 = vld [vmem:[%s193 + $0x5e8] sm:$0xf]
      %v581 = vld [vmem:[%s193 + $0x5ec] sm:$0xf]
      %v582 = vld [vmem:[%s193 + $0x5f0] sm:$0xf]
      %v583 = vld [vmem:[%s193 + $0x5f4] sm:$0xf]
      %v584 = vld [vmem:[%s193 + $0x5f8] sm:$0xf]
      %v585 = vld [vmem:[%s193 + $0x5fc] sm:$0xf]
      %v586 = vld [vmem:[%s193 + $0x600] sm:$0xf]
      %v587 = vld [vmem:[%s193 + $0x604] sm:$0xf]
      %v588 = vld [vmem:[%s193 + $0x608] sm:$0xf]
      %v589 = vld [vmem:[%s193 + $0x60c] sm:$0xf]
      %v590 = vld [vmem:[%s193 + $0x610] sm:$0xf]
      %v591 = vld [vmem:[%s193 + $0x614] sm:$0xf]
      %v592 = vld [vmem:[%s193 + $0x618] sm:$0xf]
      %v593 = vld [vmem:[%s193 + $0x61c] sm:$0xf]
      %v594 = vld [vmem:[%s1] sm:$0xf]
      %v595 = vld [vmem:[%s1 + $0x4] sm:$0xf]
      %v596 = vld [vmem:[%s1 + $0x8] sm:$0xf]
      %v597 = vld [vmem:[%s1 + $0xc] sm:$0x3]
      %v598 = vld [vmem:[%s2] sm:$0x1]
      %v600 = vlaneseq
      %v601 = vshrl.u32 %v600, 7
      %v602 = vsub.s32 0, %v601
      %v603 = vrot.slane %v598, %v602
      %v997 = vunpack.c.l.b16 %v202
      %v998 = vunpack.c.l.b16 %v203
      %v999 = vunpack.c.l.b16 %v204
      %v1000 = vunpack.c.l.b16 %v205
      %v1001 = vunpack.c.l.b16 %v206
      %v1002 = vunpack.c.l.b16 %v207
      %v1003 = vunpack.c.l.b16 %v208
      %v1004 = vunpack.c.l.b16 %v209
      %v1005 = vunpack.c.l.b16 %v210
      %v1006 = vunpack.c.l.b16 %v211
      %v1007 = vunpack.c.l.b16 %v212
      %v1008 = vunpack.c.l.b16 %v213
      %v1009 = vunpack.c.l.b16 %v214
      %v1010 = vunpack.c.l.b16 %v215
      %v1011 = vunpack.c.l.b16 %v216
      %v1012 = vunpack.c.l.b16 %v217
      %v1013 = vunpack.c.l.b16 %v218
      %v1014 = vunpack.c.l.b16 %v219
      %v1015 = vunpack.c.l.b16 %v220
      %v1016 = vunpack.c.l.b16 %v221
      %v1017 = vunpack.c.l.b16 %v222
      %v1018 = vunpack.c.l.b16 %v223
      %v1019 = vunpack.c.l.b16 %v224
      %v1020 = vunpack.c.l.b16 %v225
      %v1021 = vunpack.c.l.b16 %v226
      %v1022 = vunpack.c.l.b16 %v227
      %v1023 = vunpack.c.l.b16 %v228
      %v1024 = vunpack.c.l.b16 %v229
      %v1025 = vunpack.c.l.b16 %v230
      %v1026 = vunpack.c.l.b16 %v231
      %v1027 = vunpack.c.l.b16 %v232
      %v1028 = vunpack.c.l.b16 %v233
      %v1029 = vunpack.c.l.b16 %v234
      %v1030 = vunpack.c.l.b16 %v235
      %v1031 = vunpack.c.l.b16 %v236
      %v1032 = vunpack.c.l.b16 %v237
      %v1033 = vunpack.c.l.b16 %v238
      %v1034 = vunpack.c.l.b16 %v239
      %v1035 = vunpack.c.l.b16 %v240
      %v1036 = vunpack.c.l.b16 %v241
      %v1037 = vunpack.c.l.b16 %v242
      %v1038 = vunpack.c.l.b16 %v243
      %v1039 = vunpack.c.l.b16 %v244
      %v1040 = vunpack.c.l.b16 %v245
      %v1041 = vunpack.c.l.b16 %v246
      %v1042 = vunpack.c.l.b16 %v247
      %v1043 = vunpack.c.l.b16 %v248
      %v1044 = vunpack.c.l.b16 %v249
      %v1045 = vunpack.c.l.b16 %v250
      %v1046 = vunpack.c.l.b16 %v251
      %v1047 = vunpack.c.l.b16 %v252
      %v1048 = vunpack.c.l.b16 %v253
      %v1049 = vunpack.c.l.b16 %v254
      %v1050 = vunpack.c.l.b16 %v255
      %v1051 = vunpack.c.l.b16 %v256
      %v1052 = vunpack.c.l.b16 %v257
      %v1053 = vunpack.c.l.b16 %v258
      %v1054 = vunpack.c.l.b16 %v259
      %v1055 = vunpack.c.l.b16 %v260
      %v1056 = vunpack.c.l.b16 %v261
      %v1057 = vunpack.c.l.b16 %v262
      %v1058 = vunpack.c.l.b16 %v263
      %v1059 = vunpack.c.l.b16 %v264
      %v1060 = vunpack.c.l.b16 %v265
      %v1061 = vunpack.c.l.b16 %v266
      %v1062 = vunpack.c.l.b16 %v267
      %v1063 = vunpack.c.l.b16 %v268
      %v1064 = vunpack.c.l.b16 %v269
      %v1065 = vunpack.c.l.b16 %v270
      %v1066 = vunpack.c.l.b16 %v271
      %v1067 = vunpack.c.l.b16 %v272
      %v1068 = vunpack.c.l.b16 %v273
      %v1069 = vunpack.c.l.b16 %v274
      %v1070 = vunpack.c.l.b16 %v275
      %v1071 = vunpack.c.l.b16 %v276
      %v1072 = vunpack.c.l.b16 %v277
      %v1073 = vunpack.c.l.b16 %v278
      %v1074 = vunpack.c.l.b16 %v279
      %v1075 = vunpack.c.l.b16 %v280
      %v1076 = vunpack.c.l.b16 %v281
      %v1077 = vunpack.c.l.b16 %v282
      %v1078 = vunpack.c.l.b16 %v283
      %v1079 = vunpack.c.l.b16 %v284
      %v1080 = vunpack.c.l.b16 %v285
      %v1081 = vunpack.c.l.b16 %v286
      %v1082 = vunpack.c.l.b16 %v287
      %v1083 = vunpack.c.l.b16 %v288
      %v1084 = vunpack.c.l.b16 %v289
      %v1085 = vunpack.c.l.b16 %v290
      %v1086 = vunpack.c.l.b16 %v291
      %v1087 = vunpack.c.l.b16 %v292
      %v1088 = vunpack.c.l.b16 %v293
      %v1089 = vunpack.c.l.b16 %v294
      %v1090 = vunpack.c.l.b16 %v295
      %v1091 = vunpack.c.l.b16 %v296
      %v1092 = vunpack.c.l.b16 %v297
      %v1093 = vunpack.c.l.b16 %v298
      %v1094 = vunpack.c.l.b16 %v299
      %v1095 = vunpack.c.l.b16 %v300
      %v1096 = vunpack.c.l.b16 %v301
      %v1097 = vunpack.c.l.b16 %v302
      %v1098 = vunpack.c.l.b16 %v303
      %v1099 = vunpack.c.l.b16 %v304
      %v1100 = vunpack.c.l.b16 %v305
      %v1101 = vunpack.c.l.b16 %v306
      %v1102 = vunpack.c.l.b16 %v307
      %v1103 = vunpack.c.l.b16 %v308
      %v1104 = vunpack.c.l.b16 %v309
      %v1105 = vunpack.c.l.b16 %v310
      %v1106 = vunpack.c.l.b16 %v311
      %v1107 = vunpack.c.l.b16 %v312
      %v1108 = vunpack.c.l.b16 %v313
      %v1109 = vunpack.c.l.b16 %v314
      %v1110 = vunpack.c.l.b16 %v315
      %v1111 = vunpack.c.l.b16 %v316
      %v1112 = vunpack.c.l.b16 %v317
      %v1113 = vunpack.c.l.b16 %v318
      %v1114 = vunpack.c.l.b16 %v319
      %v1115 = vunpack.c.l.b16 %v320
      %v1116 = vunpack.c.l.b16 %v321
      %v1117 = vunpack.c.l.b16 %v322
      %v1118 = vunpack.c.l.b16 %v323
      %v1119 = vunpack.c.l.b16 %v324
      %v1120 = vunpack.c.l.b16 %v325
      %v1121 = vunpack.c.l.b16 %v326
      %v1122 = vunpack.c.l.b16 %v327
      %v1123 = vunpack.c.l.b16 %v328
      %v1124 = vunpack.c.l.b16 %v329
      %v1125 = vunpack.c.l.b16 %v330
      %v1126 = vunpack.c.l.b16 %v331
      %v1127 = vunpack.c.l.b16 %v332
      %v1128 = vunpack.c.l.b16 %v333
      %v1129 = vunpack.c.l.b16 %v334
      %v1130 = vunpack.c.l.b16 %v335
      %v1131 = vunpack.c.l.b16 %v336
      %v1132 = vunpack.c.l.b16 %v337
      %v1133 = vunpack.c.l.b16 %v338
      %v1134 = vunpack.c.l.b16 %v339
      %v1135 = vunpack.c.l.b16 %v340
      %v1136 = vunpack.c.l.b16 %v341
      %v1137 = vunpack.c.l.b16 %v342
      %v1138 = vunpack.c.l.b16 %v343
      %v1139 = vunpack.c.l.b16 %v344
      %v1140 = vunpack.c.l.b16 %v345
      %v1141 = vunpack.c.l.b16 %v346
      %v1142 = vunpack.c.l.b16 %v347
      %v1143 = vunpack.c.l.b16 %v348
      %v1144 = vunpack.c.l.b16 %v349
      %v1145 = vunpack.c.l.b16 %v350
      %v1146 = vunpack.c.l.b16 %v351
      %v1147 = vunpack.c.l.b16 %v352
      %v1148 = vunpack.c.l.b16 %v353
      %v1149 = vunpack.c.l.b16 %v354
      %v1150 = vunpack.c.l.b16 %v355
      %v1151 = vunpack.c.l.b16 %v356
      %v1152 = vunpack.c.l.b16 %v357
      %v1153 = vunpack.c.l.b16 %v358
      %v1154 = vunpack.c.l.b16 %v359
      %v1155 = vunpack.c.l.b16 %v360
      %v1156 = vunpack.c.l.b16 %v361
      %v1157 = vunpack.c.l.b16 %v362
      %v1158 = vunpack.c.l.b16 %v363
      %v1159 = vunpack.c.l.b16 %v364
      %v1160 = vunpack.c.l.b16 %v365
      %v1161 = vunpack.c.l.b16 %v366
      %v1162 = vunpack.c.l.b16 %v367
      %v1163 = vunpack.c.l.b16 %v368
      %v1164 = vunpack.c.l.b16 %v369
      %v1165 = vunpack.c.l.b16 %v370
      %v1166 = vunpack.c.l.b16 %v371
      %v1167 = vunpack.c.l.b16 %v372
      %v1168 = vunpack.c.l.b16 %v373
      %v1169 = vunpack.c.l.b16 %v374
      %v1170 = vunpack.c.l.b16 %v375
      %v1171 = vunpack.c.l.b16 %v376
      %v1172 = vunpack.c.l.b16 %v377
      %v1173 = vunpack.c.l.b16 %v378
      %v1174 = vunpack.c.l.b16 %v379
      %v1175 = vunpack.c.l.b16 %v380
      %v1176 = vunpack.c.l.b16 %v381
      %v1177 = vunpack.c.l.b16 %v382
      %v1178 = vunpack.c.l.b16 %v383
      %v1179 = vunpack.c.l.b16 %v384
      %v1180 = vunpack.c.l.b16 %v385
      %v1181 = vunpack.c.l.b16 %v386
      %v1182 = vunpack.c.l.b16 %v387
      %v1183 = vunpack.c.l.b16 %v388
      %v1184 = vunpack.c.l.b16 %v389
      %v1185 = vunpack.c.l.b16 %v390
      %v1186 = vunpack.c.l.b16 %v391
      %v1187 = vunpack.c.l.b16 %v392
      %v1188 = vunpack.c.l.b16 %v393
      %v1189 = vunpack.c.l.b16 %v394
      %v1190 = vunpack.c.l.b16 %v395
      %v1191 = vunpack.c.l.b16 %v396
      %v1192 = vunpack.c.l.b16 %v397
      %v1193 = vunpack.c.l.b16 %v398
      %v1194 = vunpack.c.l.b16 %v399
      %v1195 = vunpack.c.l.b16 %v400
      %v1196 = vunpack.c.l.b16 %v401
      %v1197 = vunpack.c.l.b16 %v402
      %v1198 = vunpack.c.l.b16 %v403
      %v1199 = vunpack.c.l.b16 %v404
      %v1200 = vunpack.c.l.b16 %v405
      %v1201 = vunpack.c.l.b16 %v406
      %v1202 = vunpack.c.l.b16 %v407
      %v1203 = vunpack.c.l.b16 %v408
      %v1204 = vunpack.c.l.b16 %v409
      %v1205 = vunpack.c.l.b16 %v410
      %v1206 = vunpack.c.l.b16 %v411
      %v1207 = vunpack.c.l.b16 %v412
      %v1208 = vunpack.c.l.b16 %v413
      %v1209 = vunpack.c.l.b16 %v414
      %v1210 = vunpack.c.l.b16 %v415
      %v1211 = vunpack.c.l.b16 %v416
      %v1212 = vunpack.c.l.b16 %v417
      %v1213 = vunpack.c.l.b16 %v418
      %v1214 = vunpack.c.l.b16 %v419
      %v1215 = vunpack.c.l.b16 %v420
      %v1216 = vunpack.c.l.b16 %v421
      %v1217 = vunpack.c.l.b16 %v422
      %v1218 = vunpack.c.l.b16 %v423
      %v1219 = vunpack.c.l.b16 %v424
      %v1220 = vunpack.c.l.b16 %v425
      %v1221 = vunpack.c.l.b16 %v426
      %v1222 = vunpack.c.l.b16 %v427
      %v1223 = vunpack.c.l.b16 %v428
      %v1224 = vunpack.c.l.b16 %v429
      %v1225 = vunpack.c.l.b16 %v430
      %v1226 = vunpack.c.l.b16 %v431
      %v1227 = vunpack.c.l.b16 %v432
      %v1228 = vunpack.c.l.b16 %v433
      %v1229 = vunpack.c.l.b16 %v434
      %v1230 = vunpack.c.l.b16 %v435
      %v1231 = vunpack.c.l.b16 %v436
      %v1232 = vunpack.c.l.b16 %v437
      %v1233 = vunpack.c.l.b16 %v438
      %v1234 = vunpack.c.l.b16 %v439
      %v1235 = vunpack.c.l.b16 %v440
      %v1236 = vunpack.c.l.b16 %v441
      %v1237 = vunpack.c.l.b16 %v442
      %v1238 = vunpack.c.l.b16 %v443
      %v1239 = vunpack.c.l.b16 %v444
      %v1240 = vunpack.c.l.b16 %v445
      %v1241 = vunpack.c.l.b16 %v446
      %v1242 = vunpack.c.l.b16 %v447
      %v1243 = vunpack.c.l.b16 %v448
      %v1244 = vunpack.c.l.b16 %v449
      %v1245 = vunpack.c.l.b16 %v450
      %v1246 = vunpack.c.l.b16 %v451
      %v1247 = vunpack.c.l.b16 %v452
      %v1248 = vunpack.c.l.b16 %v453
      %v1249 = vunpack.c.l.b16 %v454
      %v1250 = vunpack.c.l.b16 %v455
      %v1251 = vunpack.c.l.b16 %v456
      %v1252 = vunpack.c.l.b16 %v457
      %v1253 = vunpack.c.l.b16 %v458
      %v1254 = vunpack.c.l.b16 %v459
      %v1255 = vunpack.c.l.b16 %v460
      %v1256 = vunpack.c.l.b16 %v461
      %v1257 = vunpack.c.l.b16 %v462
      %v1258 = vunpack.c.l.b16 %v463
      %v1259 = vunpack.c.l.b16 %v464
      %v1260 = vunpack.c.l.b16 %v465
      %v1261 = vunpack.c.l.b16 %v466
      %v1262 = vunpack.c.l.b16 %v467
      %v1263 = vunpack.c.l.b16 %v468
      %v1264 = vunpack.c.l.b16 %v469
      %v1265 = vunpack.c.l.b16 %v470
      %v1266 = vunpack.c.l.b16 %v471
      %v1267 = vunpack.c.l.b16 %v472
      %v1268 = vunpack.c.l.b16 %v473
      %v1269 = vunpack.c.l.b16 %v474
      %v1270 = vunpack.c.l.b16 %v475
      %v1271 = vunpack.c.l.b16 %v476
      %v1272 = vunpack.c.l.b16 %v477
      %v1273 = vunpack.c.l.b16 %v478
      %v1274 = vunpack.c.l.b16 %v479
      %v1275 = vunpack.c.l.b16 %v480
      %v1276 = vunpack.c.l.b16 %v481
      %v1277 = vunpack.c.l.b16 %v482
      %v1278 = vunpack.c.l.b16 %v483
      %v1279 = vunpack.c.l.b16 %v484
      %v1280 = vunpack.c.l.b16 %v485
      %v1281 = vunpack.c.l.b16 %v486
      %v1282 = vunpack.c.l.b16 %v487
      %v1283 = vunpack.c.l.b16 %v488
      %v1284 = vunpack.c.l.b16 %v489
      %v1285 = vunpack.c.l.b16 %v490
      %v1286 = vunpack.c.l.b16 %v491
      %v1287 = vunpack.c.l.b16 %v492
      %v1288 = vunpack.c.l.b16 %v493
      %v1289 = vunpack.c.l.b16 %v494
      %v1290 = vunpack.c.l.b16 %v495
      %v1291 = vunpack.c.l.b16 %v496
      %v1292 = vunpack.c.l.b16 %v497
      %v1293 = vunpack.c.l.b16 %v498
      %v1294 = vunpack.c.l.b16 %v499
      %v1295 = vunpack.c.l.b16 %v500
      %v1296 = vunpack.c.l.b16 %v501
      %v1297 = vunpack.c.l.b16 %v502
      %v1298 = vunpack.c.l.b16 %v503
      %v1299 = vunpack.c.l.b16 %v504
      %v1300 = vunpack.c.l.b16 %v505
      %v1301 = vunpack.c.l.b16 %v506
      %v1302 = vunpack.c.l.b16 %v507
      %v1303 = vunpack.c.l.b16 %v508
      %v1304 = vunpack.c.l.b16 %v509
      %v1305 = vunpack.c.l.b16 %v510
      %v1306 = vunpack.c.l.b16 %v511
      %v1307 = vunpack.c.l.b16 %v512
      %v1308 = vunpack.c.l.b16 %v513
      %v1309 = vunpack.c.l.b16 %v514
      %v1310 = vunpack.c.l.b16 %v515
      %v1311 = vunpack.c.l.b16 %v516
      %v1312 = vunpack.c.l.b16 %v517
      %v1313 = vunpack.c.l.b16 %v518
      %v1314 = vunpack.c.l.b16 %v519
      %v1315 = vunpack.c.l.b16 %v520
      %v1316 = vunpack.c.l.b16 %v521
      %v1317 = vunpack.c.l.b16 %v522
      %v1318 = vunpack.c.l.b16 %v523
      %v1319 = vunpack.c.l.b16 %v524
      %v1320 = vunpack.c.l.b16 %v525
      %v1321 = vunpack.c.l.b16 %v526
      %v1322 = vunpack.c.l.b16 %v527
      %v1323 = vunpack.c.l.b16 %v528
      %v1324 = vunpack.c.l.b16 %v529
      %v1325 = vunpack.c.l.b16 %v530
      %v1326 = vunpack.c.l.b16 %v531
      %v1327 = vunpack.c.l.b16 %v532
      %v1328 = vunpack.c.l.b16 %v533
      %v1329 = vunpack.c.l.b16 %v534
      %v1330 = vunpack.c.l.b16 %v535
      %v1331 = vunpack.c.l.b16 %v536
      %v1332 = vunpack.c.l.b16 %v537
      %v1333 = vunpack.c.l.b16 %v538
      %v1334 = vunpack.c.l.b16 %v539
      %v1335 = vunpack.c.l.b16 %v540
      %v1336 = vunpack.c.l.b16 %v541
      %v1337 = vunpack.c.l.b16 %v542
      %v1338 = vunpack.c.l.b16 %v543
      %v1339 = vunpack.c.l.b16 %v544
      %v1340 = vunpack.c.l.b16 %v545
      %v1341 = vunpack.c.l.b16 %v546
      %v1342 = vunpack.c.l.b16 %v547
      %v1343 = vunpack.c.l.b16 %v548
      %v1344 = vunpack.c.l.b16 %v549
      %v1345 = vunpack.c.l.b16 %v550
      %v1346 = vunpack.c.l.b16 %v551
      %v1347 = vunpack.c.l.b16 %v552
      %v1348 = vunpack.c.l.b16 %v553
      %v1349 = vunpack.c.l.b16 %v554
      %v1350 = vunpack.c.l.b16 %v555
      %v1351 = vunpack.c.l.b16 %v556
      %v1352 = vunpack.c.l.b16 %v557
      %v1353 = vunpack.c.l.b16 %v558
      %v1354 = vunpack.c.l.b16 %v559
      %v1355 = vunpack.c.l.b16 %v560
      %v1356 = vunpack.c.l.b16 %v561
      %v1357 = vunpack.c.l.b16 %v562
      %v1358 = vunpack.c.l.b16 %v563
      %v1359 = vunpack.c.l.b16 %v564
      %v1360 = vunpack.c.l.b16 %v565
      %v1361 = vunpack.c.l.b16 %v566
      %v1362 = vunpack.c.l.b16 %v567
      %v1363 = vunpack.c.l.b16 %v568
      %v1364 = vunpack.c.l.b16 %v569
      %v1365 = vunpack.c.l.b16 %v570
      %v1366 = vunpack.c.l.b16 %v571
      %v1367 = vunpack.c.l.b16 %v572
      %v1368 = vunpack.c.l.b16 %v573
      %v1369 = vunpack.c.l.b16 %v574
      %v1370 = vunpack.c.l.b16 %v575
      %v1371 = vunpack.c.l.b16 %v576
      %v1372 = vunpack.c.l.b16 %v577
      %v1373 = vunpack.c.l.b16 %v578
      %v1374 = vunpack.c.l.b16 %v579
      %v1375 = vunpack.c.l.b16 %v580
      %v1376 = vunpack.c.l.b16 %v581
      %v1377 = vunpack.c.l.b16 %v582
      %v1378 = vunpack.c.l.b16 %v583
      %v1379 = vunpack.c.l.b16 %v584
      %v1380 = vunpack.c.l.b16 %v585
      %v1381 = vunpack.c.l.b16 %v586
      %v1382 = vunpack.c.l.b16 %v587
      %v1383 = vunpack.c.l.b16 %v588
      %v1384 = vunpack.c.l.b16 %v589
      %v1385 = vunpack.c.l.b16 %v590
      %v1386 = vunpack.c.l.b16 %v591
      %v1387 = vunpack.c.l.b16 %v592
      %v1388 = vunpack.c.l.b16 %v593
      %v1389 = vpack.c.b16 %v998, %v997
      %v1390 = vpack.c.b16 %v1000, %v999
      %v1391 = vpack.c.b16 %v1002, %v1001
      %v1392 = vpack.c.b16 %v1004, %v1003
      %v1393 = vpack.c.b16 %v1006, %v1005
      %v1394 = vpack.c.b16 %v1008, %v1007
      %v1395 = vpack.c.b16 %v1010, %v1009
      %v1396 = vpack.c.b16 %v1012, %v1011
      %v1397 = vpack.c.b16 %v1014, %v1013
      %v1398 = vpack.c.b16 %v1016, %v1015
      %v1399 = vpack.c.b16 %v1018, %v1017
      %v1400 = vpack.c.b16 %v1020, %v1019
      %v1401 = vpack.c.b16 %v1022, %v1021
      %v1402 = vpack.c.b16 %v1024, %v1023
      %v1403 = vpack.c.b16 %v1026, %v1025
      %v1404 = vpack.c.b16 %v1028, %v1027
      %v1405 = vpack.c.b16 %v1030, %v1029
      %v1406 = vpack.c.b16 %v1032, %v1031
      %v1407 = vpack.c.b16 %v1034, %v1033
      %v1408 = vpack.c.b16 %v1036, %v1035
      %v1409 = vpack.c.b16 %v1038, %v1037
      %v1410 = vpack.c.b16 %v1040, %v1039
      %v1411 = vpack.c.b16 %v1042, %v1041
      %v1412 = vpack.c.b16 %v1044, %v1043
      %v1413 = vpack.c.b16 %v1046, %v1045
      %v1414 = vpack.c.b16 %v1048, %v1047
      %v1415 = vpack.c.b16 %v1050, %v1049
      %v1416 = vpack.c.b16 %v1052, %v1051
      %v1417 = vpack.c.b16 %v1054, %v1053
      %v1418 = vpack.c.b16 %v1056, %v1055
      %v1419 = vpack.c.b16 %v1058, %v1057
      %v1420 = vpack.c.b16 %v1060, %v1059
      %v1421 = vpack.c.b16 %v1062, %v1061
      %v1422 = vpack.c.b16 %v1064, %v1063
      %v1423 = vpack.c.b16 %v1066, %v1065
      %v1424 = vpack.c.b16 %v1068, %v1067
      %v1425 = vpack.c.b16 %v1070, %v1069
      %v1426 = vpack.c.b16 %v1072, %v1071
      %v1427 = vpack.c.b16 %v1074, %v1073
      %v1428 = vpack.c.b16 %v1076, %v1075
      %v1429 = vpack.c.b16 %v1078, %v1077
      %v1430 = vpack.c.b16 %v1080, %v1079
      %v1431 = vpack.c.b16 %v1082, %v1081
      %v1432 = vpack.c.b16 %v1084, %v1083
      %v1433 = vpack.c.b16 %v1086, %v1085
      %v1434 = vpack.c.b16 %v1088, %v1087
      %v1435 = vpack.c.b16 %v1090, %v1089
      %v1436 = vpack.c.b16 %v1092, %v1091
      %v1437 = vpack.c.b16 %v1094, %v1093
      %v1438 = vpack.c.b16 %v1096, %v1095
      %v1439 = vpack.c.b16 %v1098, %v1097
      %v1440 = vpack.c.b16 %v1100, %v1099
      %v1441 = vpack.c.b16 %v1102, %v1101
      %v1442 = vpack.c.b16 %v1104, %v1103
      %v1443 = vpack.c.b16 %v1106, %v1105
      %v1444 = vpack.c.b16 %v1108, %v1107
      %v1445 = vpack.c.b16 %v1110, %v1109
      %v1446 = vpack.c.b16 %v1112, %v1111
      %v1447 = vpack.c.b16 %v1114, %v1113
      %v1448 = vpack.c.b16 %v1116, %v1115
      %v1449 = vpack.c.b16 %v1118, %v1117
      %v1450 = vpack.c.b16 %v1120, %v1119
      %v1451 = vpack.c.b16 %v1122, %v1121
      %v1452 = vpack.c.b16 %v1124, %v1123
      %v1453 = vpack.c.b16 %v1126, %v1125
      %v1454 = vpack.c.b16 %v1128, %v1127
      %v1455 = vpack.c.b16 %v1130, %v1129
      %v1456 = vpack.c.b16 %v1132, %v1131
      %v1457 = vpack.c.b16 %v1134, %v1133
      %v1458 = vpack.c.b16 %v1136, %v1135
      %v1459 = vpack.c.b16 %v1138, %v1137
      %v1460 = vpack.c.b16 %v1140, %v1139
      %v1461 = vpack.c.b16 %v1142, %v1141
      %v1462 = vpack.c.b16 %v1144, %v1143
      %v1463 = vpack.c.b16 %v1146, %v1145
      %v1464 = vpack.c.b16 %v1148, %v1147
      %v1465 = vpack.c.b16 %v1150, %v1149
      %v1466 = vpack.c.b16 %v1152, %v1151
      %v1467 = vpack.c.b16 %v1154, %v1153
      %v1468 = vpack.c.b16 %v1156, %v1155
      %v1469 = vpack.c.b16 %v1158, %v1157
      %v1470 = vpack.c.b16 %v1160, %v1159
      %v1471 = vpack.c.b16 %v1162, %v1161
      %v1472 = vpack.c.b16 %v1164, %v1163
      %v1473 = vpack.c.b16 %v1166, %v1165
      %v1474 = vpack.c.b16 %v1168, %v1167
      %v1475 = vpack.c.b16 %v1170, %v1169
      %v1476 = vpack.c.b16 %v1172, %v1171
      %v1477 = vpack.c.b16 %v1174, %v1173
      %v1478 = vpack.c.b16 %v1176, %v1175
      %v1479 = vpack.c.b16 %v1178, %v1177
      %v1480 = vpack.c.b16 %v1180, %v1179
      %v1481 = vpack.c.b16 %v1182, %v1181
      %v1482 = vpack.c.b16 %v1184, %v1183
      %v1483 = vpack.c.b16 %v1186, %v1185
      %v1484 = vpack.c.b16 %v1188, %v1187
      %v1485 = vpack.c.b16 %v1190, %v1189
      %v1486 = vpack.c.b16 %v1192, %v1191
      %v1487 = vpack.c.b16 %v1194, %v1193
      %v1488 = vpack.c.b16 %v1196, %v1195
      %v1489 = vpack.c.b16 %v1198, %v1197
      %v1490 = vpack.c.b16 %v1200, %v1199
      %v1491 = vpack.c.b16 %v1202, %v1201
      %v1492 = vpack.c.b16 %v1204, %v1203
      %v1493 = vpack.c.b16 %v1206, %v1205
      %v1494 = vpack.c.b16 %v1208, %v1207
      %v1495 = vpack.c.b16 %v1210, %v1209
      %v1496 = vpack.c.b16 %v1212, %v1211
      %v1497 = vpack.c.b16 %v1214, %v1213
      %v1498 = vpack.c.b16 %v1216, %v1215
      %v1499 = vpack.c.b16 %v1218, %v1217
      %v1500 = vpack.c.b16 %v1220, %v1219
      %v1501 = vpack.c.b16 %v1222, %v1221
      %v1502 = vpack.c.b16 %v1224, %v1223
      %v1503 = vpack.c.b16 %v1226, %v1225
      %v1504 = vpack.c.b16 %v1228, %v1227
      %v1505 = vpack.c.b16 %v1230, %v1229
      %v1506 = vpack.c.b16 %v1232, %v1231
      %v1507 = vpack.c.b16 %v1234, %v1233
      %v1508 = vpack.c.b16 %v1236, %v1235
      %v1509 = vpack.c.b16 %v1238, %v1237
      %v1510 = vpack.c.b16 %v1240, %v1239
      %v1511 = vpack.c.b16 %v1242, %v1241
      %v1512 = vpack.c.b16 %v1244, %v1243
      %v1513 = vpack.c.b16 %v1246, %v1245
      %v1514 = vpack.c.b16 %v1248, %v1247
      %v1515 = vpack.c.b16 %v1250, %v1249
      %v1516 = vpack.c.b16 %v1252, %v1251
      %v1517 = vpack.c.b16 %v1254, %v1253
      %v1518 = vpack.c.b16 %v1256, %v1255
      %v1519 = vpack.c.b16 %v1258, %v1257
      %v1520 = vpack.c.b16 %v1260, %v1259
      %v1521 = vpack.c.b16 %v1262, %v1261
      %v1522 = vpack.c.b16 %v1264, %v1263
      %v1523 = vpack.c.b16 %v1266, %v1265
      %v1524 = vpack.c.b16 %v1268, %v1267
      %v1525 = vpack.c.b16 %v1270, %v1269
      %v1526 = vpack.c.b16 %v1272, %v1271
      %v1527 = vpack.c.b16 %v1274, %v1273
      %v1528 = vpack.c.b16 %v1276, %v1275
      %v1529 = vpack.c.b16 %v1278, %v1277
      %v1530 = vpack.c.b16 %v1280, %v1279
      %v1531 = vpack.c.b16 %v1282, %v1281
      %v1532 = vpack.c.b16 %v1284, %v1283
      %v1533 = vpack.c.b16 %v1286, %v1285
      %v1534 = vpack.c.b16 %v1288, %v1287
      %v1535 = vpack.c.b16 %v1290, %v1289
      %v1536 = vpack.c.b16 %v1292, %v1291
      %v1537 = vpack.c.b16 %v1294, %v1293
      %v1538 = vpack.c.b16 %v1296, %v1295
      %v1539 = vpack.c.b16 %v1298, %v1297
      %v1540 = vpack.c.b16 %v1300, %v1299
      %v1541 = vpack.c.b16 %v1302, %v1301
      %v1542 = vpack.c.b16 %v1304, %v1303
      %v1543 = vpack.c.b16 %v1306, %v1305
      %v1544 = vpack.c.b16 %v1308, %v1307
      %v1545 = vpack.c.b16 %v1310, %v1309
      %v1546 = vpack.c.b16 %v1312, %v1311
      %v1547 = vpack.c.b16 %v1314, %v1313
      %v1548 = vpack.c.b16 %v1316, %v1315
      %v1549 = vpack.c.b16 %v1318, %v1317
      %v1550 = vpack.c.b16 %v1320, %v1319
      %v1551 = vpack.c.b16 %v1322, %v1321
      %v1552 = vpack.c.b16 %v1324, %v1323
      %v1553 = vpack.c.b16 %v1326, %v1325
      %v1554 = vpack.c.b16 %v1328, %v1327
      %v1555 = vpack.c.b16 %v1330, %v1329
      %v1556 = vpack.c.b16 %v1332, %v1331
      %v1557 = vpack.c.b16 %v1334, %v1333
      %v1558 = vpack.c.b16 %v1336, %v1335
      %v1559 = vpack.c.b16 %v1338, %v1337
      %v1560 = vpack.c.b16 %v1340, %v1339
      %v1561 = vpack.c.b16 %v1342, %v1341
      %v1562 = vpack.c.b16 %v1344, %v1343
      %v1563 = vpack.c.b16 %v1346, %v1345
      %v1564 = vpack.c.b16 %v1348, %v1347
      %v1565 = vpack.c.b16 %v1350, %v1349
      %v1566 = vpack.c.b16 %v1352, %v1351
      %v1567 = vpack.c.b16 %v1354, %v1353
      %v1568 = vpack.c.b16 %v1356, %v1355
      %v1569 = vpack.c.b16 %v1358, %v1357
      %v1570 = vpack.c.b16 %v1360, %v1359
      %v1571 = vpack.c.b16 %v1362, %v1361
      %v1572 = vpack.c.b16 %v1364, %v1363
      %v1573 = vpack.c.b16 %v1366, %v1365
      %v1574 = vpack.c.b16 %v1368, %v1367
      %v1575 = vpack.c.b16 %v1370, %v1369
      %v1576 = vpack.c.b16 %v1372, %v1371
      %v1577 = vpack.c.b16 %v1374, %v1373
      %v1578 = vpack.c.b16 %v1376, %v1375
      %v1579 = vpack.c.b16 %v1378, %v1377
      %v1580 = vpack.c.b16 %v1380, %v1379
      %v1581 = vpack.c.b16 %v1382, %v1381
      %v1582 = vpack.c.b16 %v1384, %v1383
      %v1583 = vpack.c.b16 %v1386, %v1385
      %v1584 = vpack.c.b16 %v1388, %v1387
      %v1589 = vunpack.c.l.b16 %v594
      %v1590 = vunpack.c.l.b16 %v595
      %v1591 = vunpack.c.l.b16 %v596
      %v1592 = vunpack.c.l.b16 %v597
      %v1593 = vpack.c.b16 %v1590, %v1589
      %v1594 = vpack.c.b16 %v1592, %v1591
      %vm1596 = vcmask 220160
      %v1598 = vsel %vm1596, %v1389, 0
      %v1601 = vsel %vm1596, %v1390, 0
      %v1604 = vsel %vm1596, %v1391, 0
      %v1607 = vsel %vm1596, %v1392, 0
      %v1610 = vsel %vm1596, %v1393, 0
      %v1613 = vsel %vm1596, %v1394, 0
      %v1616 = vsel %vm1596, %v1395, 0
      %v1619 = vsel %vm1596, %v1396, 0
      %v1622 = vsel %vm1596, %v1397, 0
      %v1625 = vsel %vm1596, %v1398, 0
      %v1628 = vsel %vm1596, %v1399, 0
      %v1631 = vsel %vm1596, %v1400, 0
      %v1634 = vsel %vm1596, %v1401, 0
      %v1637 = vsel %vm1596, %v1402, 0
      %v1640 = vsel %vm1596, %v1403, 0
      %v1643 = vsel %vm1596, %v1404, 0
      %v1646 = vsel %vm1596, %v1405, 0
      %v1649 = vsel %vm1596, %v1406, 0
      %v1652 = vsel %vm1596, %v1407, 0
      %v1655 = vsel %vm1596, %v1408, 0
      %v1658 = vsel %vm1596, %v1409, 0
      %v1661 = vsel %vm1596, %v1410, 0
      %v1664 = vsel %vm1596, %v1411, 0
      %v1667 = vsel %vm1596, %v1412, 0
      %v1670 = vsel %vm1596, %v1413, 0
      %v1673 = vsel %vm1596, %v1414, 0
      %v1676 = vsel %vm1596, %v1415, 0
      %v1679 = vsel %vm1596, %v1416, 0
      %v1682 = vsel %vm1596, %v1417, 0
      %v1685 = vsel %vm1596, %v1418, 0
      %v1688 = vsel %vm1596, %v1419, 0
      %v1691 = vsel %vm1596, %v1420, 0
      %v1694 = vsel %vm1596, %v1421, 0
      %v1697 = vsel %vm1596, %v1422, 0
      %v1700 = vsel %vm1596, %v1423, 0
      %v1703 = vsel %vm1596, %v1424, 0
      %v1706 = vsel %vm1596, %v1425, 0
      %v1709 = vsel %vm1596, %v1426, 0
      %v1712 = vsel %vm1596, %v1427, 0
      %v1715 = vsel %vm1596, %v1428, 0
      %v1718 = vsel %vm1596, %v1429, 0
      %v1721 = vsel %vm1596, %v1430, 0
      %v1724 = vsel %vm1596, %v1431, 0
      %v1727 = vsel %vm1596, %v1432, 0
      %v1730 = vsel %vm1596, %v1433, 0
      %v1733 = vsel %vm1596, %v1434, 0
      %v1736 = vsel %vm1596, %v1435, 0
      %v1739 = vsel %vm1596, %v1436, 0
      %v1742 = vsel %vm1596, %v1437, 0
      %v1745 = vsel %vm1596, %v1438, 0
      %v1748 = vsel %vm1596, %v1439, 0
      %v1751 = vsel %vm1596, %v1440, 0
      %v1754 = vsel %vm1596, %v1441, 0
      %v1757 = vsel %vm1596, %v1442, 0
      %v1760 = vsel %vm1596, %v1443, 0
      %v1763 = vsel %vm1596, %v1444, 0
      %v1766 = vsel %vm1596, %v1445, 0
      %v1769 = vsel %vm1596, %v1446, 0
      %v1772 = vsel %vm1596, %v1447, 0
      %v1775 = vsel %vm1596, %v1448, 0
      %v1778 = vsel %vm1596, %v1449, 0
      %v1781 = vsel %vm1596, %v1450, 0
      %v1784 = vsel %vm1596, %v1451, 0
      %v1787 = vsel %vm1596, %v1452, 0
      %v1790 = vsel %vm1596, %v1453, 0
      %v1793 = vsel %vm1596, %v1454, 0
      %v1796 = vsel %vm1596, %v1455, 0
      %v1799 = vsel %vm1596, %v1456, 0
      %v1802 = vsel %vm1596, %v1457, 0
      %v1805 = vsel %vm1596, %v1458, 0
      %v1808 = vsel %vm1596, %v1459, 0
      %v1811 = vsel %vm1596, %v1460, 0
      %v1814 = vsel %vm1596, %v1461, 0
      %v1817 = vsel %vm1596, %v1462, 0
      %v1820 = vsel %vm1596, %v1463, 0
      %v1823 = vsel %vm1596, %v1464, 0
      %v1826 = vsel %vm1596, %v1465, 0
      %v1829 = vsel %vm1596, %v1466, 0
      %v1832 = vsel %vm1596, %v1467, 0
      %v1835 = vsel %vm1596, %v1468, 0
      %v1838 = vsel %vm1596, %v1469, 0
      %v1841 = vsel %vm1596, %v1470, 0
      %v1844 = vsel %vm1596, %v1471, 0
      %v1847 = vsel %vm1596, %v1472, 0
      %v1850 = vsel %vm1596, %v1473, 0
      %v1853 = vsel %vm1596, %v1474, 0
      %v1856 = vsel %vm1596, %v1475, 0
      %v1859 = vsel %vm1596, %v1476, 0
      %v1862 = vsel %vm1596, %v1477, 0
      %v1865 = vsel %vm1596, %v1478, 0
      %v1868 = vsel %vm1596, %v1479, 0
      %v1871 = vsel %vm1596, %v1480, 0
      %v1874 = vsel %vm1596, %v1481, 0
      %v1877 = vsel %vm1596, %v1482, 0
      %v1880 = vsel %vm1596, %v1483, 0
      %v1883 = vsel %vm1596, %v1484, 0
      %v1886 = vsel %vm1596, %v1485, 0
      %v1889 = vsel %vm1596, %v1486, 0
      %v1892 = vsel %vm1596, %v1487, 0
      %v1895 = vsel %vm1596, %v1488, 0
      %v1898 = vsel %vm1596, %v1489, 0
      %v1901 = vsel %vm1596, %v1490, 0
      %v1904 = vsel %vm1596, %v1491, 0
      %v1907 = vsel %vm1596, %v1492, 0
      %v1910 = vsel %vm1596, %v1493, 0
      %v1913 = vsel %vm1596, %v1494, 0
      %v1916 = vsel %vm1596, %v1495, 0
      %v1919 = vsel %vm1596, %v1496, 0
      %v1922 = vsel %vm1596, %v1497, 0
      %v1925 = vsel %vm1596, %v1498, 0
      %v1928 = vsel %vm1596, %v1499, 0
      %v1931 = vsel %vm1596, %v1500, 0
      %v1934 = vsel %vm1596, %v1501, 0
      %v1937 = vsel %vm1596, %v1502, 0
      %v1940 = vsel %vm1596, %v1503, 0
      %v1943 = vsel %vm1596, %v1504, 0
      %v1946 = vsel %vm1596, %v1505, 0
      %v1949 = vsel %vm1596, %v1506, 0
      %v1952 = vsel %vm1596, %v1507, 0
      %v1955 = vsel %vm1596, %v1508, 0
      %v1958 = vsel %vm1596, %v1509, 0
      %v1961 = vsel %vm1596, %v1510, 0
      %v1964 = vsel %vm1596, %v1511, 0
      %v1967 = vsel %vm1596, %v1512, 0
      %v1970 = vsel %vm1596, %v1513, 0
      %v1973 = vsel %vm1596, %v1514, 0
      %v1976 = vsel %vm1596, %v1515, 0
      %v1979 = vsel %vm1596, %v1516, 0
      %v1982 = vsel %vm1596, %v1517, 0
      %v1985 = vsel %vm1596, %v1518, 0
      %v1988 = vsel %vm1596, %v1519, 0
      %v1991 = vsel %vm1596, %v1520, 0
      %v1994 = vsel %vm1596, %v1521, 0
      %v1997 = vsel %vm1596, %v1522, 0
      %v2000 = vsel %vm1596, %v1523, 0
      %v2003 = vsel %vm1596, %v1524, 0
      %v2006 = vsel %vm1596, %v1525, 0
      %v2009 = vsel %vm1596, %v1526, 0
      %v2012 = vsel %vm1596, %v1527, 0
      %v2015 = vsel %vm1596, %v1528, 0
      %v2018 = vsel %vm1596, %v1529, 0
      %v2021 = vsel %vm1596, %v1530, 0
      %v2024 = vsel %vm1596, %v1531, 0
      %v2027 = vsel %vm1596, %v1532, 0
      %v2030 = vsel %vm1596, %v1533, 0
      %v2033 = vsel %vm1596, %v1534, 0
      %v2036 = vsel %vm1596, %v1535, 0
      %v2039 = vsel %vm1596, %v1536, 0
      %v2042 = vsel %vm1596, %v1537, 0
      %v2045 = vsel %vm1596, %v1538, 0
      %v2048 = vsel %vm1596, %v1539, 0
      %v2051 = vsel %vm1596, %v1540, 0
      %v2054 = vsel %vm1596, %v1541, 0
      %v2057 = vsel %vm1596, %v1542, 0
      %v2060 = vsel %vm1596, %v1543, 0
      %v2063 = vsel %vm1596, %v1544, 0
      %v2066 = vsel %vm1596, %v1545, 0
      %v2069 = vsel %vm1596, %v1546, 0
      %v2072 = vsel %vm1596, %v1547, 0
      %v2075 = vsel %vm1596, %v1548, 0
      %v2078 = vsel %vm1596, %v1549, 0
      %v2081 = vsel %vm1596, %v1550, 0
      %v2084 = vsel %vm1596, %v1551, 0
      %v2087 = vsel %vm1596, %v1552, 0
      %v2090 = vsel %vm1596, %v1553, 0
      %v2093 = vsel %vm1596, %v1554, 0
      %v2096 = vsel %vm1596, %v1555, 0
      %v2099 = vsel %vm1596, %v1556, 0
      %v2102 = vsel %vm1596, %v1557, 0
      %v2105 = vsel %vm1596, %v1558, 0
      %v2108 = vsel %vm1596, %v1559, 0
      %v2111 = vsel %vm1596, %v1560, 0
      %v2114 = vsel %vm1596, %v1561, 0
      %v2117 = vsel %vm1596, %v1562, 0
      %v2120 = vsel %vm1596, %v1563, 0
      %v2123 = vsel %vm1596, %v1564, 0
      %v2126 = vsel %vm1596, %v1565, 0
      %v2129 = vsel %vm1596, %v1566, 0
      %v2132 = vsel %vm1596, %v1567, 0
      %v2135 = vsel %vm1596, %v1568, 0
      %v2138 = vsel %vm1596, %v1569, 0
      %v2141 = vsel %vm1596, %v1570, 0
      %v2144 = vsel %vm1596, %v1571, 0
      %v2147 = vsel %vm1596, %v1572, 0
      %v2150 = vsel %vm1596, %v1573, 0
      %v2153 = vsel %vm1596, %v1574, 0
      %v2156 = vsel %vm1596, %v1575, 0
      %v2159 = vsel %vm1596, %v1576, 0
      %v2162 = vsel %vm1596, %v1577, 0
      %v2165 = vsel %vm1596, %v1578, 0
      %v2168 = vsel %vm1596, %v1579, 0
      %v2171 = vsel %vm1596, %v1580, 0
      %v2174 = vsel %vm1596, %v1581, 0
      %v2177 = vsel %vm1596, %v1582, 0
      %v2180 = vsel %vm1596, %v1583, 0
      %v2183 = vsel %vm1596, %v1584, 0
      %vm2185 = vcmask 1044480
      %vm2186 = vcmask 1045504
      %v2187 = vsel %vm2185, 4294967295, 65535
      %v2188 = vsel %vm2186, %v2187, 0
      %v2190 = vand.u32 %v1594, %v2188
      %2192 = vmatprep.subr.bf16.mxu0 0
      %2193 = vmatpush1.bf16.msra.mxu0 %v1593
      %2194 = vmatprep.subr.bf16.mxu0 0
      %2195 = vmatpush1.bf16.msra.mxu0 %v2190
      %2196 = vmatprep.subr.bf16.mxu0 0
      %2197 = vmatpush1.bf16.msra.mxu0 0
      %2198 = vmatprep.subr.bf16.mxu0 0
      %2199 = vmatpush1.bf16.msra.mxu0 0
      %2200 = vmatprep.subr.bf16.mxu0 0
      %2201 = vmatpush1.bf16.msra.mxu0 0
      %2202 = vmatprep.subr.bf16.mxu0 0
      %2203 = vmatpush1.bf16.msra.mxu0 0
      %2204 = vmatprep.subr.bf16.mxu0 0
      %2205 = vmatpush1.bf16.msra.mxu0 0
      %2206 = vmatprep.subr.bf16.mxu0 0
      %2207 = vmatpush1.bf16.msra.mxu0 0
      %2208 = vmatprep.subr.bf16.mxu0 0
      %2209 = vmatpush1.bf16.msra.mxu0 0
      %2210 = vmatprep.subr.bf16.mxu0 0
      %2211 = vmatpush1.bf16.msra.mxu0 0
      %2212 = vmatprep.subr.bf16.mxu0 0
      %2213 = vmatpush1.bf16.msra.mxu0 0
      %2214 = vmatprep.subr.bf16.mxu0 0
      %2215 = vmatpush1.bf16.msra.mxu0 0
      %2216 = vmatprep.subr.bf16.mxu0 0
      %2217 = vmatpush1.bf16.msra.mxu0 0
      %2218 = vmatprep.subr.bf16.mxu0 0
      %2219 = vmatpush1.bf16.msra.mxu0 0
      %2220 = vmatprep.subr.bf16.mxu0 0
      %2221 = vmatpush1.bf16.msra.mxu0 0
      %2222 = vmatprep.subr.bf16.mxu0 0
      %2223 = vmatpush1.bf16.msra.mxu0 0
      %2224 = vmatprep.mubr.bf16.mxu0 0
      %2225 = vmatmul.mubr.bf16.gmra.mrb[0].mxu0 %v1598
      %v2226 = vpop.f32.mrb[0].mxu0
      %v2227 = vadd.f32 %v603, %v2226
      %v2228 = vpop.f32.mrb[0].mxu0
      %v2229 = vpop.f32.mrb[0].mxu0
      %v2230 = vadd.f32 %v603, %v2229
      %v2231 = vpop.f32.mrb[0].mxu0
      %2232 = vmatprep.mubr.bf16.mxu0 0
      %2233 = vmatmul.mubr.bf16.gmra.mrb[0].mxu0 %v1601
      %v2234 = vpop.f32.mrb[0].mxu0
      %v2235 = vadd.f32 %v603, %v2234
      %v2236 = vpop.f32.mrb[0].mxu0
      %v2237 = vpop.f32.mrb[0].mxu0
      %v2238 = vadd.f32 %v603, %v2237
      %v2239 = vpop.f32.mrb[0].mxu0
      %2240 = vmatprep.mubr.bf16.mxu0 0
      %2241 = vmatmul.mubr.bf16.gmra.mrb[0].mxu0 %v1604
      %v2242 = vpop.f32.mrb[0].mxu0
      %v2243 = vadd.f32 %v603, %v2242
      %v2244 = vpop.f32.mrb[0].mxu0
      %v2245 = vpop.f32.mrb[0].mxu0
      %v2246 = vadd.f32 %v603, %v2245
      %v2247 = vpop.f32.mrb[0].mxu0
      %2248 = vmatprep.mubr.bf16.mxu0 0
      %2249 = vmatmul.mubr.bf16.gmra.mrb[0].mxu0 %v1607
      %v2250 = vpop.f32.mrb[0].mxu0
      %v2251 = vadd.f32 %v603, %v2250
      %v2252 = vpop.f32.mrb[0].mxu0
      %v2253 = vpop.f32.mrb[0].mxu0
      %v2254 = vadd.f32 %v603, %v2253
      %v2255 = vpop.f32.mrb[0].mxu0
      %2256 = vmatprep.mubr.bf16.mxu0 0
      %2257 = vmatmul.mubr.bf16.gmra.mrb[0].mxu0 %v1610
      %v2258 = vpop.f32.mrb[0].mxu0
      %v2259 = vadd.f32 %v603, %v2258
      %v2260 = vpop.f32.mrb[0].mxu0
      %v2261 = vpop.f32.mrb[0].mxu0
      %v2262 = vadd.f32 %v603, %v2261
      %v2263 = vpop.f32.mrb[0].mxu0
      %2264 = vmatprep.mubr.bf16.mxu0 0
      %2265 = vmatmul.mubr.bf16.gmra.mrb[0].mxu0 %v1613
      %v2266 = vpop.f32.mrb[0].mxu0
      %v2267 = vadd.f32 %v603, %v2266
      %v2268 = vpop.f32.mrb[0].mxu0
      %v2269 = vpop.f32.mrb[0].mxu0
      %v2270 = vadd.f32 %v603, %v2269
      %v2271 = vpop.f32.mrb[0].mxu0
      %2272 = vmatprep.mubr.bf16.mxu0 0
      %2273 = vmatmul.mubr.bf16.gmra.mrb[0].mxu0 %v1616
      %v2274 = vpop.f32.mrb[0].mxu0
      %v2275 = vadd.f32 %v603, %v2274
      %v2276 = vpop.f32.mrb[0].mxu0
      %v2277 = vpop.f32.mrb[0].mxu0
      %v2278 = vadd.f32 %v603, %v2277
      %v2279 = vpop.f32.mrb[0].mxu0
      %2280 = vmatprep.mubr.bf16.mxu0 0
      %2281 = vmatmul.mubr.bf16.gmra.mrb[0].mxu0 %v1619
      %v2282 = vpop.f32.mrb[0].mxu0
      %v2283 = vadd.f32 %v603, %v2282
      %v2284 = vpop.f32.mrb[0].mxu0
      %v2285 = vpop.f32.mrb[0].mxu0
      %v2286 = vadd.f32 %v603, %v2285
      %v2287 = vpop.f32.mrb[0].mxu0
      %2288 = vmatprep.mubr.bf16.mxu0 0
      %2289 = vmatmul.mubr.bf16.gmra.mrb[0].mxu0 %v1622
      %v2290 = vpop.f32.mrb[0].mxu0
      %v2291 = vadd.f32 %v603, %v2290
      %v2292 = vpop.f32.mrb[0].mxu0
      %v2293 = vpop.f32.mrb[0].mxu0
      %v2294 = vadd.f32 %v603, %v2293
      %v2295 = vpop.f32.mrb[0].mxu0
      %2296 = vmatprep.mubr.bf16.mxu0 0
      %2297 = vmatmul.mubr.bf16.gmra.mrb[0].mxu0 %v1625
      %v2298 = vpop.f32.mrb[0].mxu0
      %v2299 = vadd.f32 %v603, %v2298
      %v2300 = vpop.f32.mrb[0].mxu0
      %v2301 = vpop.f32.mrb[0].mxu0
      %v2302 = vadd.f32 %v603, %v2301
      %v2303 = vpop.f32.mrb[0].mxu0
      %2304 = vmatprep.mubr.bf16.mxu0 0
      %2305 = vmatmul.mubr.bf16.gmra.mrb[0].mxu0 %v1628
      %v2306 = vpop.f32.mrb[0].mxu0
      %v2307 = vadd.f32 %v603, %v2306
      %v2308 = vpop.f32.mrb[0].mxu0
      %v2309 = vpop.f32.mrb[0].mxu0
      %v2310 = vadd.f32 %v603, %v2309
      %v2311 = vpop.f32.mrb[0].mxu0
      %2312 = vmatprep.mubr.bf16.mxu0 0
      %2313 = vmatmul.mubr.bf16.gmra.mrb[0].mxu0 %v1631
      %v2314 = vpop.f32.mrb[0].mxu0
      %v2315 = vadd.f32 %v603, %v2314
      %v2316 = vpop.f32.mrb[0].mxu0
      %v2317 = vpop.f32.mrb[0].mxu0
      %v2318 = vadd.f32 %v603, %v2317
      %v2319 = vpop.f32.mrb[0].mxu0
      %2320 = vmatprep.mubr.bf16.mxu0 0
      %2321 = vmatmul.mubr.bf16.gmra.mrb[0].mxu0 %v1634
      %v2322 = vpop.f32.mrb[0].mxu0
      %v2323 = vadd.f32 %v603, %v2322
      %v2324 = vpop.f32.mrb[0].mxu0
      %v2325 = vpop.f32.mrb[0].mxu0
      %v2326 = vadd.f32 %v603, %v2325
      %v2327 = vpop.f32.mrb[0].mxu0
      %2328 = vmatprep.mubr.bf16.mxu0 0
      %2329 = vmatmul.mubr.bf16.gmra.mrb[0].mxu0 %v1637
      %v2330 = vpop.f32.mrb[0].mxu0
      %v2331 = vadd.f32 %v603, %v2330
      %v2332 = vpop.f32.mrb[0].mxu0
      %v2333 = vpop.f32.mrb[0].mxu0
      %v2334 = vadd.f32 %v603, %v2333
      %v2335 = vpop.f32.mrb[0].mxu0
      %2336 = vmatprep.mubr.bf16.mxu0 0
      %2337 = vmatmul.mubr.bf16.gmra.mrb[0].mxu0 %v1640
      %v2338 = vpop.f32.mrb[0].mxu0
      %v2339 = vadd.f32 %v603, %v2338
      %v2340 = vpop.f32.mrb[0].mxu0
      %v2341 = vpop.f32.mrb[0].mxu0
      %v2342 = vadd.f32 %v603, %v2341
      %v2343 = vpop.f32.mrb[0].mxu0
      %2344 = vmatprep.mubr.bf16.mxu0 0
      %2345 = vmatmul.mubr.bf16.gmra.mrb[0].mxu0 %v1643
      %v2346 = vpop.f32.mrb[0].mxu0
      %v2347 = vadd.f32 %v603, %v2346
      %v2348 = vpop.f32.mrb[0].mxu0
      %v2349 = vpop.f32.mrb[0].mxu0
      %v2350 = vadd.f32 %v603, %v2349
      %v2351 = vpop.f32.mrb[0].mxu0
      %2352 = vmatprep.mubr.bf16.mxu0 0
      %2353 = vmatmul.mubr.bf16.gmra.mrb[0].mxu0 %v1646
      %v2354 = vpop.f32.mrb[0].mxu0
      %v2355 = vadd.f32 %v603, %v2354
      %v2356 = vpop.f32.mrb[0].mxu0
      %v2357 = vpop.f32.mrb[0].mxu0
      %v2358 = vadd.f32 %v603, %v2357
      %v2359 = vpop.f32.mrb[0].mxu0
      %2360 = vmatprep.mubr.bf16.mxu0 0
      %2361 = vmatmul.mubr.bf16.gmra.mrb[0].mxu0 %v1649
      %v2362 = vpop.f32.mrb[0].mxu0
      %v2363 = vadd.f32 %v603, %v2362
      %v2364 = vpop.f32.mrb[0].mxu0
      %v2365 = vpop.f32.mrb[0].mxu0
      %v2366 = vadd.f32 %v603, %v2365
      %v2367 = vpop.f32.mrb[0].mxu0
      %2368 = vmatprep.mubr.bf16.mxu0 0
      %2369 = vmatmul.mubr.bf16.gmra.mrb[0].mxu0 %v1652
      %v2370 = vpop.f32.mrb[0].mxu0
      %v2371 = vadd.f32 %v603, %v2370
      %v2372 = vpop.f32.mrb[0].mxu0
      %v2373 = vpop.f32.mrb[0].mxu0
      %v2374 = vadd.f32 %v603, %v2373
      %v2375 = vpop.f32.mrb[0].mxu0
      %2376 = vmatprep.mubr.bf16.mxu0 0
      %2377 = vmatmul.mubr.bf16.gmra.mrb[0].mxu0 %v1655
      %v2378 = vpop.f32.mrb[0].mxu0
      %v2379 = vadd.f32 %v603, %v2378
      %v2380 = vpop.f32.mrb[0].mxu0
      %v2381 = vpop.f32.mrb[0].mxu0
      %v2382 = vadd.f32 %v603, %v2381
      %v2383 = vpop.f32.mrb[0].mxu0
      %2384 = vmatprep.mubr.bf16.mxu0 0
      %2385 = vmatmul.mubr.bf16.gmra.mrb[0].mxu0 %v1658
      %v2386 = vpop.f32.mrb[0].mxu0
      %v2387 = vadd.f32 %v603, %v2386
      %v2388 = vpop.f32.mrb[0].mxu0
      %v2389 = vpop.f32.mrb[0].mxu0
      %v2390 = vadd.f32 %v603, %v2389
      %v2391 = vpop.f32.mrb[0].mxu0
      %2392 = vmatprep.mubr.bf16.mxu0 0
      %2393 = vmatmul.mubr.bf16.gmra.mrb[0].mxu0 %v1661
      %v2394 = vpop.f32.mrb[0].mxu0
      %v2395 = vadd.f32 %v603, %v2394
      %v2396 = vpop.f32.mrb[0].mxu0
      %v2397 = vpop.f32.mrb[0].mxu0
      %v2398 = vadd.f32 %v603, %v2397
      %v2399 = vpop.f32.mrb[0].mxu0
      %2400 = vmatprep.mubr.bf16.mxu0 0
      %2401 = vmatmul.mubr.bf16.gmra.mrb[0].mxu0 %v1664
      %v2402 = vpop.f32.mrb[0].mxu0
      %v2403 = vadd.f32 %v603, %v2402
      %v2404 = vpop.f32.mrb[0].mxu0
      %v2405 = vpop.f32.mrb[0].mxu0
      %v2406 = vadd.f32 %v603, %v2405
      %v2407 = vpop.f32.mrb[0].mxu0
      %2408 = vmatprep.mubr.bf16.mxu0 0
      %2409 = vmatmul.mubr.bf16.gmra.mrb[0].mxu0 %v1667
      %v2410 = vpop.f32.mrb[0].mxu0
      %v2411 = vadd.f32 %v603, %v2410
      %v2412 = vpop.f32.mrb[0].mxu0
      %v2413 = vpop.f32.mrb[0].mxu0
      %v2414 = vadd.f32 %v603, %v2413
      %v2415 = vpop.f32.mrb[0].mxu0
      %2416 = vmatprep.mubr.bf16.mxu0 0
      %2417 = vmatmul.mubr.bf16.gmra.mrb[0].mxu0 %v1670
      %v2418 = vpop.f32.mrb[0].mxu0
      %v2419 = vadd.f32 %v603, %v2418
      %v2420 = vpop.f32.mrb[0].mxu0
      %v2421 = vpop.f32.mrb[0].mxu0
      %v2422 = vadd.f32 %v603, %v2421
      %v2423 = vpop.f32.mrb[0].mxu0
      %2424 = vmatprep.mubr.bf16.mxu0 0
      %2425 = vmatmul.mubr.bf16.gmra.mrb[0].mxu0 %v1673
      %v2426 = vpop.f32.mrb[0].mxu0
      %v2427 = vadd.f32 %v603, %v2426
      %v2428 = vpop.f32.mrb[0].mxu0
      %v2429 = vpop.f32.mrb[0].mxu0
      %v2430 = vadd.f32 %v603, %v2429
      %v2431 = vpop.f32.mrb[0].mxu0
      %2432 = vmatprep.mubr.bf16.mxu0 0
      %2433 = vmatmul.mubr.bf16.gmra.mrb[0].mxu0 %v1676
      %v2434 = vpop.f32.mrb[0].mxu0
      %v2435 = vadd.f32 %v603, %v2434
      %v2436 = vpop.f32.mrb[0].mxu0
      %v2437 = vpop.f32.mrb[0].mxu0
      %v2438 = vadd.f32 %v603, %v2437
      %v2439 = vpop.f32.mrb[0].mxu0
      %2440 = vmatprep.mubr.bf16.mxu0 0
      %2441 = vmatmul.mubr.bf16.gmra.mrb[0].mxu0 %v1679
      %v2442 = vpop.f32.mrb[0].mxu0
      %v2443 = vadd.f32 %v603, %v2442
      %v2444 = vpop.f32.mrb[0].mxu0
      %v2445 = vpop.f32.mrb[0].mxu0
      %v2446 = vadd.f32 %v603, %v2445
      %v2447 = vpop.f32.mrb[0].mxu0
      %2448 = vmatprep.mubr.bf16.mxu0 0
      %2449 = vmatmul.mubr.bf16.gmra.mrb[0].mxu0 %v1682
      %v2450 = vpop.f32.mrb[0].mxu0
      %v2451 = vadd.f32 %v603, %v2450
      %v2452 = vpop.f32.mrb[0].mxu0
      %v2453 = vpop.f32.mrb[0].mxu0
      %v2454 = vadd.f32 %v603, %v2453
      %v2455 = vpop.f32.mrb[0].mxu0
      %2456 = vmatprep.mubr.bf16.mxu0 0
      %2457 = vmatmul.mubr.bf16.gmra.mrb[0].mxu0 %v1685
      %v2458 = vpop.f32.mrb[0].mxu0
      %v2459 = vadd.f32 %v603, %v2458
      %v2460 = vpop.f32.mrb[0].mxu0
      %v2461 = vpop.f32.mrb[0].mxu0
      %v2462 = vadd.f32 %v603, %v2461
      %v2463 = vpop.f32.mrb[0].mxu0
      %2464 = vmatprep.mubr.bf16.mxu0 0
      %2465 = vmatmul.mubr.bf16.gmra.mrb[0].mxu0 %v1688
      %v2466 = vpop.f32.mrb[0].mxu0
      %v2467 = vadd.f32 %v603, %v2466
      %v2468 = vpop.f32.mrb[0].mxu0
      %v2469 = vpop.f32.mrb[0].mxu0
      %v2470 = vadd.f32 %v603, %v2469
      %v2471 = vpop.f32.mrb[0].mxu0
      %2472 = vmatprep.mubr.bf16.mxu0 0
      %2473 = vmatmul.mubr.bf16.gmra.mrb[0].mxu0 %v1691
      %v2474 = vpop.f32.mrb[0].mxu0
      %v2475 = vadd.f32 %v603, %v2474
      %v2476 = vpop.f32.mrb[0].mxu0
      %v2477 = vpop.f32.mrb[0].mxu0
      %v2478 = vadd.f32 %v603, %v2477
      %v2479 = vpop.f32.mrb[0].mxu0
      %2480 = vmatprep.mubr.bf16.mxu0 0
      %2481 = vmatmul.mubr.bf16.gmra.mrb[0].mxu0 %v1694
      %v2482 = vpop.f32.mrb[0].mxu0
      %v2483 = vadd.f32 %v603, %v2482
      %v2484 = vpop.f32.mrb[0].mxu0
      %v2485 = vpop.f32.mrb[0].mxu0
      %v2486 = vadd.f32 %v603, %v2485
      %v2487 = vpop.f32.mrb[0].mxu0
      %2488 = vmatprep.mubr.bf16.mxu0 0
      %2489 = vmatmul.mubr.bf16.gmra.mrb[0].mxu0 %v1697
      %v2490 = vpop.f32.mrb[0].mxu0
      %v2491 = vadd.f32 %v603, %v2490
      %v2492 = vpop.f32.mrb[0].mxu0
      %v2493 = vpop.f32.mrb[0].mxu0
      %v2494 = vadd.f32 %v603, %v2493
      %v2495 = vpop.f32.mrb[0].mxu0
      %2496 = vmatprep.mubr.bf16.mxu0 0
      %2497 = vmatmul.mubr.bf16.gmra.mrb[0].mxu0 %v1700
      %v2498 = vpop.f32.mrb[0].mxu0
      %v2499 = vadd.f32 %v603, %v2498
      %v2500 = vpop.f32.mrb[0].mxu0
      %v2501 = vpop.f32.mrb[0].mxu0
      %v2502 = vadd.f32 %v603, %v2501
      %v2503 = vpop.f32.mrb[0].mxu0
      %2504 = vmatprep.mubr.bf16.mxu0 0
      %2505 = vmatmul.mubr.bf16.gmra.mrb[0].mxu0 %v1703
      %v2506 = vpop.f32.mrb[0].mxu0
      %v2507 = vadd.f32 %v603, %v2506
      %v2508 = vpop.f32.mrb[0].mxu0
      %v2509 = vpop.f32.mrb[0].mxu0
      %v2510 = vadd.f32 %v603, %v2509
      %v2511 = vpop.f32.mrb[0].mxu0
      %2512 = vmatprep.mubr.bf16.mxu0 0
      %2513 = vmatmul.mubr.bf16.gmra.mrb[0].mxu0 %v1706
      %v2514 = vpop.f32.mrb[0].mxu0
      %v2515 = vadd.f32 %v603, %v2514
      %v2516 = vpop.f32.mrb[0].mxu0
      %v2517 = vpop.f32.mrb[0].mxu0
      %v2518 = vadd.f32 %v603, %v2517
      %v2519 = vpop.f32.mrb[0].mxu0
      %2520 = vmatprep.mubr.bf16.mxu0 0
      %2521 = vmatmul.mubr.bf16.gmra.mrb[0].mxu0 %v1709
      %v2522 = vpop.f32.mrb[0].mxu0
      %v2523 = vadd.f32 %v603, %v2522
      %v2524 = vpop.f32.mrb[0].mxu0
      %v2525 = vpop.f32.mrb[0].mxu0
      %v2526 = vadd.f32 %v603, %v2525
      %v2527 = vpop.f32.mrb[0].mxu0
      %2528 = vmatprep.mubr.bf16.mxu0 0
      %2529 = vmatmul.mubr.bf16.gmra.mrb[0].mxu0 %v1712
      %v2530 = vpop.f32.mrb[0].mxu0
      %v2531 = vadd.f32 %v603, %v2530
      %v2532 = vpop.f32.mrb[0].mxu0
      %v2533 = vpop.f32.mrb[0].mxu0
      %v2534 = vadd.f32 %v603, %v2533
      %v2535 = vpop.f32.mrb[0].mxu0
      %2536 = vmatprep.mubr.bf16.mxu0 0
      %2537 = vmatmul.mubr.bf16.gmra.mrb[0].mxu0 %v1715
      %v2538 = vpop.f32.mrb[0].mxu0
      %v2539 = vadd.f32 %v603, %v2538
      %v2540 = vpop.f32.mrb[0].mxu0
      %v2541 = vpop.f32.mrb[0].mxu0
      %v2542 = vadd.f32 %v603, %v2541
      %v2543 = vpop.f32.mrb[0].mxu0
      %2544 = vmatprep.mubr.bf16.mxu0 0
      %2545 = vmatmul.mubr.bf16.gmra.mrb[0].mxu0 %v1718
      %v2546 = vpop.f32.mrb[0].mxu0
      %v2547 = vadd.f32 %v603, %v2546
      %v2548 = vpop.f32.mrb[0].mxu0
      %v2549 = vpop.f32.mrb[0].mxu0
      %v2550 = vadd.f32 %v603, %v2549
      %v2551 = vpop.f32.mrb[0].mxu0
      %2552 = vmatprep.mubr.bf16.mxu0 0
      %2553 = vmatmul.mubr.bf16.gmra.mrb[0].mxu0 %v1721
      %v2554 = vpop.f32.mrb[0].mxu0
      %v2555 = vadd.f32 %v603, %v2554
      %v2556 = vpop.f32.mrb[0].mxu0
      %v2557 = vpop.f32.mrb[0].mxu0
      %v2558 = vadd.f32 %v603, %v2557
      %v2559 = vpop.f32.mrb[0].mxu0
      %2560 = vmatprep.mubr.bf16.mxu0 0
      %2561 = vmatmul.mubr.bf16.gmra.mrb[0].mxu0 %v1724
      %v2562 = vpop.f32.mrb[0].mxu0
      %v2563 = vadd.f32 %v603, %v2562
      %v2564 = vpop.f32.mrb[0].mxu0
      %v2565 = vpop.f32.mrb[0].mxu0
      %v2566 = vadd.f32 %v603, %v2565
      %v2567 = vpop.f32.mrb[0].mxu0
      %2568 = vmatprep.mubr.bf16.mxu0 0
      %2569 = vmatmul.mubr.bf16.gmra.mrb[0].mxu0 %v1727
      %v2570 = vpop.f32.mrb[0].mxu0
      %v2571 = vadd.f32 %v603, %v2570
      %v2572 = vpop.f32.mrb[0].mxu0
      %v2573 = vpop.f32.mrb[0].mxu0
      %v2574 = vadd.f32 %v603, %v2573
      %v2575 = vpop.f32.mrb[0].mxu0
      %2576 = vmatprep.mubr.bf16.mxu0 0
      %2577 = vmatmul.mubr.bf16.gmra.mrb[0].mxu0 %v1730
      %v2578 = vpop.f32.mrb[0].mxu0
      %v2579 = vadd.f32 %v603, %v2578
      %v2580 = vpop.f32.mrb[0].mxu0
      %v2581 = vpop.f32.mrb[0].mxu0
      %v2582 = vadd.f32 %v603, %v2581
      %v2583 = vpop.f32.mrb[0].mxu0
      %2584 = vmatprep.mubr.bf16.mxu0 0
      %2585 = vmatmul.mubr.bf16.gmra.mrb[0].mxu0 %v1733
      %v2586 = vpop.f32.mrb[0].mxu0
      %v2587 = vadd.f32 %v603, %v2586
      %v2588 = vpop.f32.mrb[0].mxu0
      %v2589 = vpop.f32.mrb[0].mxu0
      %v2590 = vadd.f32 %v603, %v2589
      %v2591 = vpop.f32.mrb[0].mxu0
      %2592 = vmatprep.mubr.bf16.mxu0 0
      %2593 = vmatmul.mubr.bf16.gmra.mrb[0].mxu0 %v1736
      %v2594 = vpop.f32.mrb[0].mxu0
      %v2595 = vadd.f32 %v603, %v2594
      %v2596 = vpop.f32.mrb[0].mxu0
      %v2597 = vpop.f32.mrb[0].mxu0
      %v2598 = vadd.f32 %v603, %v2597
      %v2599 = vpop.f32.mrb[0].mxu0
      %2600 = vmatprep.mubr.bf16.mxu0 0
      %2601 = vmatmul.mubr.bf16.gmra.mrb[0].mxu0 %v1739
      %v2602 = vpop.f32.mrb[0].mxu0
      %v2603 = vadd.f32 %v603, %v2602
      %v2604 = vpop.f32.mrb[0].mxu0
      %v2605 = vpop.f32.mrb[0].mxu0
      %v2606 = vadd.f32 %v603, %v2605
      %v2607 = vpop.f32.mrb[0].mxu0
      %2608 = vmatprep.mubr.bf16.mxu0 0
      %2609 = vmatmul.mubr.bf16.gmra.mrb[0].mxu0 %v1742
      %v2610 = vpop.f32.mrb[0].mxu0
      %v2611 = vadd.f32 %v603, %v2610
      %v2612 = vpop.f32.mrb[0].mxu0
      %v2613 = vpop.f32.mrb[0].mxu0
      %v2614 = vadd.f32 %v603, %v2613
      %v2615 = vpop.f32.mrb[0].mxu0
      %2616 = vmatprep.mubr.bf16.mxu0 0
      %2617 = vmatmul.mubr.bf16.gmra.mrb[0].mxu0 %v1745
      %v2618 = vpop.f32.mrb[0].mxu0
      %v2619 = vadd.f32 %v603, %v2618
      %v2620 = vpop.f32.mrb[0].mxu0
      %v2621 = vpop.f32.mrb[0].mxu0
      %v2622 = vadd.f32 %v603, %v2621
      %v2623 = vpop.f32.mrb[0].mxu0
      %2624 = vmatprep.mubr.bf16.mxu0 0
      %2625 = vmatmul.mubr.bf16.gmra.mrb[0].mxu0 %v1748
      %v2626 = vpop.f32.mrb[0].mxu0
      %v2627 = vadd.f32 %v603, %v2626
      %v2628 = vpop.f32.mrb[0].mxu0
      %v2629 = vpop.f32.mrb[0].mxu0
      %v2630 = vadd.f32 %v603, %v2629
      %v2631 = vpop.f32.mrb[0].mxu0
      %2632 = vmatprep.mubr.bf16.mxu0 0
      %2633 = vmatmul.mubr.bf16.gmra.mrb[0].mxu0 %v1751
      %v2634 = vpop.f32.mrb[0].mxu0
      %v2635 = vadd.f32 %v603, %v2634
      %v2636 = vpop.f32.mrb[0].mxu0
      %v2637 = vpop.f32.mrb[0].mxu0
      %v2638 = vadd.f32 %v603, %v2637
      %v2639 = vpop.f32.mrb[0].mxu0
      %2640 = vmatprep.mubr.bf16.mxu0 0
      %2641 = vmatmul.mubr.bf16.gmra.mrb[0].mxu0 %v1754
      %v2642 = vpop.f32.mrb[0].mxu0
      %v2643 = vadd.f32 %v603, %v2642
      %v2644 = vpop.f32.mrb[0].mxu0
      %v2645 = vpop.f32.mrb[0].mxu0
      %v2646 = vadd.f32 %v603, %v2645
      %v2647 = vpop.f32.mrb[0].mxu0
      %2648 = vmatprep.mubr.bf16.mxu0 0
      %2649 = vmatmul.mubr.bf16.gmra.mrb[0].mxu0 %v1757
      %v2650 = vpop.f32.mrb[0].mxu0
      %v2651 = vadd.f32 %v603, %v2650
      %v2652 = vpop.f32.mrb[0].mxu0
      %v2653 = vpop.f32.mrb[0].mxu0
      %v2654 = vadd.f32 %v603, %v2653
      %v2655 = vpop.f32.mrb[0].mxu0
      %2656 = vmatprep.mubr.bf16.mxu0 0
      %2657 = vmatmul.mubr.bf16.gmra.mrb[0].mxu0 %v1760
      %v2658 = vpop.f32.mrb[0].mxu0
      %v2659 = vadd.f32 %v603, %v2658
      %v2660 = vpop.f32.mrb[0].mxu0
      %v2661 = vpop.f32.mrb[0].mxu0
      %v2662 = vadd.f32 %v603, %v2661
      %v2663 = vpop.f32.mrb[0].mxu0
      %2664 = vmatprep.mubr.bf16.mxu0 0
      %2665 = vmatmul.mubr.bf16.gmra.mrb[0].mxu0 %v1763
      %v2666 = vpop.f32.mrb[0].mxu0
      %v2667 = vadd.f32 %v603, %v2666
      %v2668 = vpop.f32.mrb[0].mxu0
      %v2669 = vpop.f32.mrb[0].mxu0
      %v2670 = vadd.f32 %v603, %v2669
      %v2671 = vpop.f32.mrb[0].mxu0
      %2672 = vmatprep.mubr.bf16.mxu0 0
      %2673 = vmatmul.mubr.bf16.gmra.mrb[0].mxu0 %v1766
      %v2674 = vpop.f32.mrb[0].mxu0
      %v2675 = vadd.f32 %v603, %v2674
      %v2676 = vpop.f32.mrb[0].mxu0
      %v2677 = vpop.f32.mrb[0].mxu0
      %v2678 = vadd.f32 %v603, %v2677
      %v2679 = vpop.f32.mrb[0].mxu0
      %2680 = vmatprep.mubr.bf16.mxu0 0
      %2681 = vmatmul.mubr.bf16.gmra.mrb[0].mxu0 %v1769
      %v2682 = vpop.f32.mrb[0].mxu0
      %v2683 = vadd.f32 %v603, %v2682
      %v2684 = vpop.f32.mrb[0].mxu0
      %v2685 = vpop.f32.mrb[0].mxu0
      %v2686 = vadd.f32 %v603, %v2685
      %v2687 = vpop.f32.mrb[0].mxu0
      %2688 = vmatprep.mubr.bf16.mxu0 0
      %2689 = vmatmul.mubr.bf16.gmra.mrb[0].mxu0 %v1772
      %v2690 = vpop.f32.mrb[0].mxu0
      %v2691 = vadd.f32 %v603, %v2690
      %v2692 = vpop.f32.mrb[0].mxu0
      %v2693 = vpop.f32.mrb[0].mxu0
      %v2694 = vadd.f32 %v603, %v2693
      %v2695 = vpop.f32.mrb[0].mxu0
      %2696 = vmatprep.mubr.bf16.mxu0 0
      %2697 = vmatmul.mubr.bf16.gmra.mrb[0].mxu0 %v1775
      %v2698 = vpop.f32.mrb[0].mxu0
      %v2699 = vadd.f32 %v603, %v2698
      %v2700 = vpop.f32.mrb[0].mxu0
      %v2701 = vpop.f32.mrb[0].mxu0
      %v2702 = vadd.f32 %v603, %v2701
      %v2703 = vpop.f32.mrb[0].mxu0
      %2704 = vmatprep.mubr.bf16.mxu0 0
      %2705 = vmatmul.mubr.bf16.gmra.mrb[0].mxu0 %v1778
      %v2706 = vpop.f32.mrb[0].mxu0
      %v2707 = vadd.f32 %v603, %v2706
      %v2708 = vpop.f32.mrb[0].mxu0
      %v2709 = vpop.f32.mrb[0].mxu0
      %v2710 = vadd.f32 %v603, %v2709
      %v2711 = vpop.f32.mrb[0].mxu0
      %2712 = vmatprep.mubr.bf16.mxu0 0
      %2713 = vmatmul.mubr.bf16.gmra.mrb[0].mxu0 %v1781
      %v2714 = vpop.f32.mrb[0].mxu0
      %v2715 = vadd.f32 %v603, %v2714
      %v2716 = vpop.f32.mrb[0].mxu0
      %v2717 = vpop.f32.mrb[0].mxu0
      %v2718 = vadd.f32 %v603, %v2717
      %v2719 = vpop.f32.mrb[0].mxu0
      %2720 = vmatprep.mubr.bf16.mxu0 0
      %2721 = vmatmul.mubr.bf16.gmra.mrb[0].mxu0 %v1784
      %v2722 = vpop.f32.mrb[0].mxu0
      %v2723 = vadd.f32 %v603, %v2722
      %v2724 = vpop.f32.mrb[0].mxu0
      %v2725 = vpop.f32.mrb[0].mxu0
      %v2726 = vadd.f32 %v603, %v2725
      %v2727 = vpop.f32.mrb[0].mxu0
      %2728 = vmatprep.mubr.bf16.mxu0 0
      %2729 = vmatmul.mubr.bf16.gmra.mrb[0].mxu0 %v1787
      %v2730 = vpop.f32.mrb[0].mxu0
      %v2731 = vadd.f32 %v603, %v2730
      %v2732 = vpop.f32.mrb[0].mxu0
      %v2733 = vpop.f32.mrb[0].mxu0
      %v2734 = vadd.f32 %v603, %v2733
      %v2735 = vpop.f32.mrb[0].mxu0
      %2736 = vmatprep.mubr.bf16.mxu0 0
      %2737 = vmatmul.mubr.bf16.gmra.mrb[0].mxu0 %v1790
      %v2738 = vpop.f32.mrb[0].mxu0
      %v2739 = vadd.f32 %v603, %v2738
      %v2740 = vpop.f32.mrb[0].mxu0
      %v2741 = vpop.f32.mrb[0].mxu0
      %v2742 = vadd.f32 %v603, %v2741
      %v2743 = vpop.f32.mrb[0].mxu0
      %2744 = vmatprep.mubr.bf16.mxu0 0
      %2745 = vmatmul.mubr.bf16.gmra.mrb[0].mxu0 %v1793
      %v2746 = vpop.f32.mrb[0].mxu0
      %v2747 = vadd.f32 %v603, %v2746
      %v2748 = vpop.f32.mrb[0].mxu0
      %v2749 = vpop.f32.mrb[0].mxu0
      %v2750 = vadd.f32 %v603, %v2749
      %v2751 = vpop.f32.mrb[0].mxu0
      %2752 = vmatprep.mubr.bf16.mxu0 0
      %2753 = vmatmul.mubr.bf16.gmra.mrb[0].mxu0 %v1796
      %v2754 = vpop.f32.mrb[0].mxu0
      %v2755 = vadd.f32 %v603, %v2754
      %v2756 = vpop.f32.mrb[0].mxu0
      %v2757 = vpop.f32.mrb[0].mxu0
      %v2758 = vadd.f32 %v603, %v2757
      %v2759 = vpop.f32.mrb[0].mxu0
      %2760 = vmatprep.mubr.bf16.mxu0 0
      %2761 = vmatmul.mubr.bf16.gmra.mrb[0].mxu0 %v1799
      %v2762 = vpop.f32.mrb[0].mxu0
      %v2763 = vadd.f32 %v603, %v2762
      %v2764 = vpop.f32.mrb[0].mxu0
      %v2765 = vpop.f32.mrb[0].mxu0
      %v2766 = vadd.f32 %v603, %v2765
      %v2767 = vpop.f32.mrb[0].mxu0
      %2768 = vmatprep.mubr.bf16.mxu0 0
      %2769 = vmatmul.mubr.bf16.gmra.mrb[0].mxu0 %v1802
      %v2770 = vpop.f32.mrb[0].mxu0
      %v2771 = vadd.f32 %v603, %v2770
      %v2772 = vpop.f32.mrb[0].mxu0
      %v2773 = vpop.f32.mrb[0].mxu0
      %v2774 = vadd.f32 %v603, %v2773
      %v2775 = vpop.f32.mrb[0].mxu0
      %2776 = vmatprep.mubr.bf16.mxu0 0
      %2777 = vmatmul.mubr.bf16.gmra.mrb[0].mxu0 %v1805
      %v2778 = vpop.f32.mrb[0].mxu0
      %v2779 = vadd.f32 %v603, %v2778
      %v2780 = vpop.f32.mrb[0].mxu0
      %v2781 = vpop.f32.mrb[0].mxu0
      %v2782 = vadd.f32 %v603, %v2781
      %v2783 = vpop.f32.mrb[0].mxu0
      %2784 = vmatprep.mubr.bf16.mxu0 0
      %2785 = vmatmul.mubr.bf16.gmra.mrb[0].mxu0 %v1808
      %v2786 = vpop.f32.mrb[0].mxu0
      %v2787 = vadd.f32 %v603, %v2786
      %v2788 = vpop.f32.mrb[0].mxu0
      %v2789 = vpop.f32.mrb[0].mxu0
      %v2790 = vadd.f32 %v603, %v2789
      %v2791 = vpop.f32.mrb[0].mxu0
      %2792 = vmatprep.mubr.bf16.mxu0 0
      %2793 = vmatmul.mubr.bf16.gmra.mrb[0].mxu0 %v1811
      %v2794 = vpop.f32.mrb[0].mxu0
      %v2795 = vadd.f32 %v603, %v2794
      %v2796 = vpop.f32.mrb[0].mxu0
      %v2797 = vpop.f32.mrb[0].mxu0
      %v2798 = vadd.f32 %v603, %v2797
      %v2799 = vpop.f32.mrb[0].mxu0
      %2800 = vmatprep.mubr.bf16.mxu0 0
      %2801 = vmatmul.mubr.bf16.gmra.mrb[0].mxu0 %v1814
      %v2802 = vpop.f32.mrb[0].mxu0
      %v2803 = vadd.f32 %v603, %v2802
      %v2804 = vpop.f32.mrb[0].mxu0
      %v2805 = vpop.f32.mrb[0].mxu0
      %v2806 = vadd.f32 %v603, %v2805
      %v2807 = vpop.f32.mrb[0].mxu0
      %2808 = vmatprep.mubr.bf16.mxu0 0
      %2809 = vmatmul.mubr.bf16.gmra.mrb[0].mxu0 %v1817
      %v2810 = vpop.f32.mrb[0].mxu0
      %v2811 = vadd.f32 %v603, %v2810
      %v2812 = vpop.f32.mrb[0].mxu0
      %v2813 = vpop.f32.mrb[0].mxu0
      %v2814 = vadd.f32 %v603, %v2813
      %v2815 = vpop.f32.mrb[0].mxu0
      %2816 = vmatprep.mubr.bf16.mxu0 0
      %2817 = vmatmul.mubr.bf16.gmra.mrb[0].mxu0 %v1820
      %v2818 = vpop.f32.mrb[0].mxu0
      %v2819 = vadd.f32 %v603, %v2818
      %v2820 = vpop.f32.mrb[0].mxu0
      %v2821 = vpop.f32.mrb[0].mxu0
      %v2822 = vadd.f32 %v603, %v2821
      %v2823 = vpop.f32.mrb[0].mxu0
      %2824 = vmatprep.mubr.bf16.mxu0 0
      %2825 = vmatmul.mubr.bf16.gmra.mrb[0].mxu0 %v1823
      %v2826 = vpop.f32.mrb[0].mxu0
      %v2827 = vadd.f32 %v603, %v2826
      %v2828 = vpop.f32.mrb[0].mxu0
      %v2829 = vpop.f32.mrb[0].mxu0
      %v2830 = vadd.f32 %v603, %v2829
      %v2831 = vpop.f32.mrb[0].mxu0
      %2832 = vmatprep.mubr.bf16.mxu0 0
      %2833 = vmatmul.mubr.bf16.gmra.mrb[0].mxu0 %v1826
      %v2834 = vpop.f32.mrb[0].mxu0
      %v2835 = vadd.f32 %v603, %v2834
      %v2836 = vpop.f32.mrb[0].mxu0
      %v2837 = vpop.f32.mrb[0].mxu0
      %v2838 = vadd.f32 %v603, %v2837
      %v2839 = vpop.f32.mrb[0].mxu0
      %2840 = vmatprep.mubr.bf16.mxu0 0
      %2841 = vmatmul.mubr.bf16.gmra.mrb[0].mxu0 %v1829
      %v2842 = vpop.f32.mrb[0].mxu0
      %v2843 = vadd.f32 %v603, %v2842
      %v2844 = vpop.f32.mrb[0].mxu0
      %v2845 = vpop.f32.mrb[0].mxu0
      %v2846 = vadd.f32 %v603, %v2845
      %v2847 = vpop.f32.mrb[0].mxu0
      %2848 = vmatprep.mubr.bf16.mxu0 0
      %2849 = vmatmul.mubr.bf16.gmra.mrb[0].mxu0 %v1832
      %v2850 = vpop.f32.mrb[0].mxu0
      %v2851 = vadd.f32 %v603, %v2850
      %v2852 = vpop.f32.mrb[0].mxu0
      %v2853 = vpop.f32.mrb[0].mxu0
      %v2854 = vadd.f32 %v603, %v2853
      %v2855 = vpop.f32.mrb[0].mxu0
      %2856 = vmatprep.mubr.bf16.mxu0 0
      %2857 = vmatmul.mubr.bf16.gmra.mrb[0].mxu0 %v1835
      %v2858 = vpop.f32.mrb[0].mxu0
      %v2859 = vadd.f32 %v603, %v2858
      %v2860 = vpop.f32.mrb[0].mxu0
      %v2861 = vpop.f32.mrb[0].mxu0
      %v2862 = vadd.f32 %v603, %v2861
      %v2863 = vpop.f32.mrb[0].mxu0
      %2864 = vmatprep.mubr.bf16.mxu0 0
      %2865 = vmatmul.mubr.bf16.gmra.mrb[0].mxu0 %v1838
      %v2866 = vpop.f32.mrb[0].mxu0
      %v2867 = vadd.f32 %v603, %v2866
      %v2868 = vpop.f32.mrb[0].mxu0
      %v2869 = vpop.f32.mrb[0].mxu0
      %v2870 = vadd.f32 %v603, %v2869
      %v2871 = vpop.f32.mrb[0].mxu0
      %2872 = vmatprep.mubr.bf16.mxu0 0
      %2873 = vmatmul.mubr.bf16.gmra.mrb[0].mxu0 %v1841
      %v2874 = vpop.f32.mrb[0].mxu0
      %v2875 = vadd.f32 %v603, %v2874
      %v2876 = vpop.f32.mrb[0].mxu0
      %v2877 = vpop.f32.mrb[0].mxu0
      %v2878 = vadd.f32 %v603, %v2877
      %v2879 = vpop.f32.mrb[0].mxu0
      %2880 = vmatprep.mubr.bf16.mxu0 0
      %2881 = vmatmul.mubr.bf16.gmra.mrb[0].mxu0 %v1844
      %v2882 = vpop.f32.mrb[0].mxu0
      %v2883 = vadd.f32 %v603, %v2882
      %v2884 = vpop.f32.mrb[0].mxu0
      %v2885 = vpop.f32.mrb[0].mxu0
      %v2886 = vadd.f32 %v603, %v2885
      %v2887 = vpop.f32.mrb[0].mxu0
      %2888 = vmatprep.mubr.bf16.mxu0 0
      %2889 = vmatmul.mubr.bf16.gmra.mrb[0].mxu0 %v1847
      %v2890 = vpop.f32.mrb[0].mxu0
      %v2891 = vadd.f32 %v603, %v2890
      %v2892 = vpop.f32.mrb[0].mxu0
      %v2893 = vpop.f32.mrb[0].mxu0
      %v2894 = vadd.f32 %v603, %v2893
      %v2895 = vpop.f32.mrb[0].mxu0
      %2896 = vmatprep.mubr.bf16.mxu0 0
      %2897 = vmatmul.mubr.bf16.gmra.mrb[0].mxu0 %v1850
      %v2898 = vpop.f32.mrb[0].mxu0
      %v2899 = vadd.f32 %v603, %v2898
      %v2900 = vpop.f32.mrb[0].mxu0
      %v2901 = vpop.f32.mrb[0].mxu0
      %v2902 = vadd.f32 %v603, %v2901
      %v2903 = vpop.f32.mrb[0].mxu0
      %2904 = vmatprep.mubr.bf16.mxu0 0
      %2905 = vmatmul.mubr.bf16.gmra.mrb[0].mxu0 %v1853
      %v2906 = vpop.f32.mrb[0].mxu0
      %v2907 = vadd.f32 %v603, %v2906
      %v2908 = vpop.f32.mrb[0].mxu0
      %v2909 = vpop.f32.mrb[0].mxu0
      %v2910 = vadd.f32 %v603, %v2909
      %v2911 = vpop.f32.mrb[0].mxu0
      %2912 = vmatprep.mubr.bf16.mxu0 0
      %2913 = vmatmul.mubr.bf16.gmra.mrb[0].mxu0 %v1856
      %v2914 = vpop.f32.mrb[0].mxu0
      %v2915 = vadd.f32 %v603, %v2914
      %v2916 = vpop.f32.mrb[0].mxu0
      %v2917 = vpop.f32.mrb[0].mxu0
      %v2918 = vadd.f32 %v603, %v2917
      %v2919 = vpop.f32.mrb[0].mxu0
      %2920 = vmatprep.mubr.bf16.mxu0 0
      %2921 = vmatmul.mubr.bf16.gmra.mrb[0].mxu0 %v1859
      %v2922 = vpop.f32.mrb[0].mxu0
      %v2923 = vadd.f32 %v603, %v2922
      %v2924 = vpop.f32.mrb[0].mxu0
      %v2925 = vpop.f32.mrb[0].mxu0
      %v2926 = vadd.f32 %v603, %v2925
      %v2927 = vpop.f32.mrb[0].mxu0
      %2928 = vmatprep.mubr.bf16.mxu0 0
      %2929 = vmatmul.mubr.bf16.gmra.mrb[0].mxu0 %v1862
      %v2930 = vpop.f32.mrb[0].mxu0
      %v2931 = vadd.f32 %v603, %v2930
      %v2932 = vpop.f32.mrb[0].mxu0
      %v2933 = vpop.f32.mrb[0].mxu0
      %v2934 = vadd.f32 %v603, %v2933
      %v2935 = vpop.f32.mrb[0].mxu0
      %2936 = vmatprep.mubr.bf16.mxu0 0
      %2937 = vmatmul.mubr.bf16.gmra.mrb[0].mxu0 %v1865
      %v2938 = vpop.f32.mrb[0].mxu0
      %v2939 = vadd.f32 %v603, %v2938
      %v2940 = vpop.f32.mrb[0].mxu0
      %v2941 = vpop.f32.mrb[0].mxu0
      %v2942 = vadd.f32 %v603, %v2941
      %v2943 = vpop.f32.mrb[0].mxu0
      %2944 = vmatprep.mubr.bf16.mxu0 0
      %2945 = vmatmul.mubr.bf16.gmra.mrb[0].mxu0 %v1868
      %v2946 = vpop.f32.mrb[0].mxu0
      %v2947 = vadd.f32 %v603, %v2946
      %v2948 = vpop.f32.mrb[0].mxu0
      %v2949 = vpop.f32.mrb[0].mxu0
      %v2950 = vadd.f32 %v603, %v2949
      %v2951 = vpop.f32.mrb[0].mxu0
      %2952 = vmatprep.mubr.bf16.mxu0 0
      %2953 = vmatmul.mubr.bf16.gmra.mrb[0].mxu0 %v1871
      %v2954 = vpop.f32.mrb[0].mxu0
      %v2955 = vadd.f32 %v603, %v2954
      %v2956 = vpop.f32.mrb[0].mxu0
      %v2957 = vpop.f32.mrb[0].mxu0
      %v2958 = vadd.f32 %v603, %v2957
      %v2959 = vpop.f32.mrb[0].mxu0
      %2960 = vmatprep.mubr.bf16.mxu0 0
      %2961 = vmatmul.mubr.bf16.gmra.mrb[0].mxu0 %v1874
      %v2962 = vpop.f32.mrb[0].mxu0
      %v2963 = vadd.f32 %v603, %v2962
      %v2964 = vpop.f32.mrb[0].mxu0
      %v2965 = vpop.f32.mrb[0].mxu0
      %v2966 = vadd.f32 %v603, %v2965
      %v2967 = vpop.f32.mrb[0].mxu0
      %2968 = vmatprep.mubr.bf16.mxu0 0
      %2969 = vmatmul.mubr.bf16.gmra.mrb[0].mxu0 %v1877
      %v2970 = vpop.f32.mrb[0].mxu0
      %v2971 = vadd.f32 %v603, %v2970
      %v2972 = vpop.f32.mrb[0].mxu0
      %v2973 = vpop.f32.mrb[0].mxu0
      %v2974 = vadd.f32 %v603, %v2973
      %v2975 = vpop.f32.mrb[0].mxu0
      %2976 = vmatprep.mubr.bf16.mxu0 0
      %2977 = vmatmul.mubr.bf16.gmra.mrb[0].mxu0 %v1880
      %v2978 = vpop.f32.mrb[0].mxu0
      %v2979 = vadd.f32 %v603, %v2978
      %v2980 = vpop.f32.mrb[0].mxu0
      %v2981 = vpop.f32.mrb[0].mxu0
      %v2982 = vadd.f32 %v603, %v2981
      %v2983 = vpop.f32.mrb[0].mxu0
      %2984 = vmatprep.mubr.bf16.mxu0 0
      %2985 = vmatmul.mubr.bf16.gmra.mrb[0].mxu0 %v1883
      %v2986 = vpop.f32.mrb[0].mxu0
      %v2987 = vadd.f32 %v603, %v2986
      %v2988 = vpop.f32.mrb[0].mxu0
      %v2989 = vpop.f32.mrb[0].mxu0
      %v2990 = vadd.f32 %v603, %v2989
      %v2991 = vpop.f32.mrb[0].mxu0
      %2992 = vmatprep.mubr.bf16.mxu0 0
      %2993 = vmatmul.mubr.bf16.gmra.mrb[0].mxu0 %v1886
      %v2994 = vpop.f32.mrb[0].mxu0
      %v2995 = vadd.f32 %v603, %v2994
      %v2996 = vpop.f32.mrb[0].mxu0
      %v2997 = vpop.f32.mrb[0].mxu0
      %v2998 = vadd.f32 %v603, %v2997
      %v2999 = vpop.f32.mrb[0].mxu0
      %3000 = vmatprep.mubr.bf16.mxu0 0
      %3001 = vmatmul.mubr.bf16.gmra.mrb[0].mxu0 %v1889
      %v3002 = vpop.f32.mrb[0].mxu0
      %v3003 = vadd.f32 %v603, %v3002
      %v3004 = vpop.f32.mrb[0].mxu0
      %v3005 = vpop.f32.mrb[0].mxu0
      %v3006 = vadd.f32 %v603, %v3005
      %v3007 = vpop.f32.mrb[0].mxu0
      %3008 = vmatprep.mubr.bf16.mxu0 0
      %3009 = vmatmul.mubr.bf16.gmra.mrb[0].mxu0 %v1892
      %v3010 = vpop.f32.mrb[0].mxu0
      %v3011 = vadd.f32 %v603, %v3010
      %v3012 = vpop.f32.mrb[0].mxu0
      %v3013 = vpop.f32.mrb[0].mxu0
      %v3014 = vadd.f32 %v603, %v3013
      %v3015 = vpop.f32.mrb[0].mxu0
      %3016 = vmatprep.mubr.bf16.mxu0 0
      %3017 = vmatmul.mubr.bf16.gmra.mrb[0].mxu0 %v1895
      %v3018 = vpop.f32.mrb[0].mxu0
      %v3019 = vadd.f32 %v603, %v3018
      %v3020 = vpop.f32.mrb[0].mxu0
      %v3021 = vpop.f32.mrb[0].mxu0
      %v3022 = vadd.f32 %v603, %v3021
      %v3023 = vpop.f32.mrb[0].mxu0
      %3024 = vmatprep.mubr.bf16.mxu0 0
      %3025 = vmatmul.mubr.bf16.gmra.mrb[0].mxu0 %v1898
      %v3026 = vpop.f32.mrb[0].mxu0
      %v3027 = vadd.f32 %v603, %v3026
      %v3028 = vpop.f32.mrb[0].mxu0
      %v3029 = vpop.f32.mrb[0].mxu0
      %v3030 = vadd.f32 %v603, %v3029
      %v3031 = vpop.f32.mrb[0].mxu0
      %3032 = vmatprep.mubr.bf16.mxu0 0
      %3033 = vmatmul.mubr.bf16.gmra.mrb[0].mxu0 %v1901
      %v3034 = vpop.f32.mrb[0].mxu0
      %v3035 = vadd.f32 %v603, %v3034
      %v3036 = vpop.f32.mrb[0].mxu0
      %v3037 = vpop.f32.mrb[0].mxu0
      %v3038 = vadd.f32 %v603, %v3037
      %v3039 = vpop.f32.mrb[0].mxu0
      %3040 = vmatprep.mubr.bf16.mxu0 0
      %3041 = vmatmul.mubr.bf16.gmra.mrb[0].mxu0 %v1904
      %v3042 = vpop.f32.mrb[0].mxu0
      %v3043 = vadd.f32 %v603, %v3042
      %v3044 = vpop.f32.mrb[0].mxu0
      %v3045 = vpop.f32.mrb[0].mxu0
      %v3046 = vadd.f32 %v603, %v3045
      %v3047 = vpop.f32.mrb[0].mxu0
      %3048 = vmatprep.mubr.bf16.mxu0 0
      %3049 = vmatmul.mubr.bf16.gmra.mrb[0].mxu0 %v1907
      %v3050 = vpop.f32.mrb[0].mxu0
      %v3051 = vadd.f32 %v603, %v3050
      %v3052 = vpop.f32.mrb[0].mxu0
      %v3053 = vpop.f32.mrb[0].mxu0
      %v3054 = vadd.f32 %v603, %v3053
      %v3055 = vpop.f32.mrb[0].mxu0
      %3056 = vmatprep.mubr.bf16.mxu0 0
      %3057 = vmatmul.mubr.bf16.gmra.mrb[0].mxu0 %v1910
      %v3058 = vpop.f32.mrb[0].mxu0
      %v3059 = vadd.f32 %v603, %v3058
      %v3060 = vpop.f32.mrb[0].mxu0
      %v3061 = vpop.f32.mrb[0].mxu0
      %v3062 = vadd.f32 %v603, %v3061
      %v3063 = vpop.f32.mrb[0].mxu0
      %3064 = vmatprep.mubr.bf16.mxu0 0
      %3065 = vmatmul.mubr.bf16.gmra.mrb[0].mxu0 %v1913
      %v3066 = vpop.f32.mrb[0].mxu0
      %v3067 = vadd.f32 %v603, %v3066
      %v3068 = vpop.f32.mrb[0].mxu0
      %v3069 = vpop.f32.mrb[0].mxu0
      %v3070 = vadd.f32 %v603, %v3069
      %v3071 = vpop.f32.mrb[0].mxu0
      %3072 = vmatprep.mubr.bf16.mxu0 0
      %3073 = vmatmul.mubr.bf16.gmra.mrb[0].mxu0 %v1916
      %v3074 = vpop.f32.mrb[0].mxu0
      %v3075 = vadd.f32 %v603, %v3074
      %v3076 = vpop.f32.mrb[0].mxu0
      %v3077 = vpop.f32.mrb[0].mxu0
      %v3078 = vadd.f32 %v603, %v3077
      %v3079 = vpop.f32.mrb[0].mxu0
      %3080 = vmatprep.mubr.bf16.mxu0 0
      %3081 = vmatmul.mubr.bf16.gmra.mrb[0].mxu0 %v1919
      %v3082 = vpop.f32.mrb[0].mxu0
      %v3083 = vadd.f32 %v603, %v3082
      %v3084 = vpop.f32.mrb[0].mxu0
      %v3085 = vpop.f32.mrb[0].mxu0
      %v3086 = vadd.f32 %v603, %v3085
      %v3087 = vpop.f32.mrb[0].mxu0
      %3088 = vmatprep.mubr.bf16.mxu0 0
      %3089 = vmatmul.mubr.bf16.gmra.mrb[0].mxu0 %v1922
      %v3090 = vpop.f32.mrb[0].mxu0
      %v3091 = vadd.f32 %v603, %v3090
      %v3092 = vpop.f32.mrb[0].mxu0
      %v3093 = vpop.f32.mrb[0].mxu0
      %v3094 = vadd.f32 %v603, %v3093
      %v3095 = vpop.f32.mrb[0].mxu0
      %3096 = vmatprep.mubr.bf16.mxu0 0
      %3097 = vmatmul.mubr.bf16.gmra.mrb[0].mxu0 %v1925
      %v3098 = vpop.f32.mrb[0].mxu0
      %v3099 = vadd.f32 %v603, %v3098
      %v3100 = vpop.f32.mrb[0].mxu0
      %v3101 = vpop.f32.mrb[0].mxu0
      %v3102 = vadd.f32 %v603, %v3101
      %v3103 = vpop.f32.mrb[0].mxu0
      %3104 = vmatprep.mubr.bf16.mxu0 0
      %3105 = vmatmul.mubr.bf16.gmra.mrb[0].mxu0 %v1928
      %v3106 = vpop.f32.mrb[0].mxu0
      %v3107 = vadd.f32 %v603, %v3106
      %v3108 = vpop.f32.mrb[0].mxu0
      %v3109 = vpop.f32.mrb[0].mxu0
      %v3110 = vadd.f32 %v603, %v3109
      %v3111 = vpop.f32.mrb[0].mxu0
      %3112 = vmatprep.mubr.bf16.mxu0 0
      %3113 = vmatmul.mubr.bf16.gmra.mrb[0].mxu0 %v1931
      %v3114 = vpop.f32.mrb[0].mxu0
      %v3115 = vadd.f32 %v603, %v3114
      %v3116 = vpop.f32.mrb[0].mxu0
      %v3117 = vpop.f32.mrb[0].mxu0
      %v3118 = vadd.f32 %v603, %v3117
      %v3119 = vpop.f32.mrb[0].mxu0
      %3120 = vmatprep.mubr.bf16.mxu0 0
      %3121 = vmatmul.mubr.bf16.gmra.mrb[0].mxu0 %v1934
      %v3122 = vpop.f32.mrb[0].mxu0
      %v3123 = vadd.f32 %v603, %v3122
      %v3124 = vpop.f32.mrb[0].mxu0
      %v3125 = vpop.f32.mrb[0].mxu0
      %v3126 = vadd.f32 %v603, %v3125
      %v3127 = vpop.f32.mrb[0].mxu0
      %3128 = vmatprep.mubr.bf16.mxu0 0
      %3129 = vmatmul.mubr.bf16.gmra.mrb[0].mxu0 %v1937
      %v3130 = vpop.f32.mrb[0].mxu0
      %v3131 = vadd.f32 %v603, %v3130
      %v3132 = vpop.f32.mrb[0].mxu0
      %v3133 = vpop.f32.mrb[0].mxu0
      %v3134 = vadd.f32 %v603, %v3133
      %v3135 = vpop.f32.mrb[0].mxu0
      %3136 = vmatprep.mubr.bf16.mxu0 0
      %3137 = vmatmul.mubr.bf16.gmra.mrb[0].mxu0 %v1940
      %v3138 = vpop.f32.mrb[0].mxu0
      %v3139 = vadd.f32 %v603, %v3138
      %v3140 = vpop.f32.mrb[0].mxu0
      %v3141 = vpop.f32.mrb[0].mxu0
      %v3142 = vadd.f32 %v603, %v3141
      %v3143 = vpop.f32.mrb[0].mxu0
      %3144 = vmatprep.mubr.bf16.mxu0 0
      %3145 = vmatmul.mubr.bf16.gmra.mrb[0].mxu0 %v1943
      %v3146 = vpop.f32.mrb[0].mxu0
      %v3147 = vadd.f32 %v603, %v3146
      %v3148 = vpop.f32.mrb[0].mxu0
      %v3149 = vpop.f32.mrb[0].mxu0
      %v3150 = vadd.f32 %v603, %v3149
      %v3151 = vpop.f32.mrb[0].mxu0
      %3152 = vmatprep.mubr.bf16.mxu0 0
      %3153 = vmatmul.mubr.bf16.gmra.mrb[0].mxu0 %v1946
      %v3154 = vpop.f32.mrb[0].mxu0
      %v3155 = vadd.f32 %v603, %v3154
      %v3156 = vpop.f32.mrb[0].mxu0
      %v3157 = vpop.f32.mrb[0].mxu0
      %v3158 = vadd.f32 %v603, %v3157
      %v3159 = vpop.f32.mrb[0].mxu0
      %3160 = vmatprep.mubr.bf16.mxu0 0
      %3161 = vmatmul.mubr.bf16.gmra.mrb[0].mxu0 %v1949
      %v3162 = vpop.f32.mrb[0].mxu0
      %v3163 = vadd.f32 %v603, %v3162
      %v3164 = vpop.f32.mrb[0].mxu0
      %v3165 = vpop.f32.mrb[0].mxu0
      %v3166 = vadd.f32 %v603, %v3165
      %v3167 = vpop.f32.mrb[0].mxu0
      %3168 = vmatprep.mubr.bf16.mxu0 0
      %3169 = vmatmul.mubr.bf16.gmra.mrb[0].mxu0 %v1952
      %v3170 = vpop.f32.mrb[0].mxu0
      %v3171 = vadd.f32 %v603, %v3170
      %v3172 = vpop.f32.mrb[0].mxu0
      %v3173 = vpop.f32.mrb[0].mxu0
      %v3174 = vadd.f32 %v603, %v3173
      %v3175 = vpop.f32.mrb[0].mxu0
      %3176 = vmatprep.mubr.bf16.mxu0 0
      %3177 = vmatmul.mubr.bf16.gmra.mrb[0].mxu0 %v1955
      %v3178 = vpop.f32.mrb[0].mxu0
      %v3179 = vadd.f32 %v603, %v3178
      %v3180 = vpop.f32.mrb[0].mxu0
      %v3181 = vpop.f32.mrb[0].mxu0
      %v3182 = vadd.f32 %v603, %v3181
      %v3183 = vpop.f32.mrb[0].mxu0
      %3184 = vmatprep.mubr.bf16.mxu0 0
      %3185 = vmatmul.mubr.bf16.gmra.mrb[0].mxu0 %v1958
      %v3186 = vpop.f32.mrb[0].mxu0
      %v3187 = vadd.f32 %v603, %v3186
      %v3188 = vpop.f32.mrb[0].mxu0
      %v3189 = vpop.f32.mrb[0].mxu0
      %v3190 = vadd.f32 %v603, %v3189
      %v3191 = vpop.f32.mrb[0].mxu0
      %3192 = vmatprep.mubr.bf16.mxu0 0
      %3193 = vmatmul.mubr.bf16.gmra.mrb[0].mxu0 %v1961
      %v3194 = vpop.f32.mrb[0].mxu0
      %v3195 = vadd.f32 %v603, %v3194
      %v3196 = vpop.f32.mrb[0].mxu0
      %v3197 = vpop.f32.mrb[0].mxu0
      %v3198 = vadd.f32 %v603, %v3197
      %v3199 = vpop.f32.mrb[0].mxu0
      %3200 = vmatprep.mubr.bf16.mxu0 0
      %3201 = vmatmul.mubr.bf16.gmra.mrb[0].mxu0 %v1964
      %v3202 = vpop.f32.mrb[0].mxu0
      %v3203 = vadd.f32 %v603, %v3202
      %v3204 = vpop.f32.mrb[0].mxu0
      %v3205 = vpop.f32.mrb[0].mxu0
      %v3206 = vadd.f32 %v603, %v3205
      %v3207 = vpop.f32.mrb[0].mxu0
      %3208 = vmatprep.mubr.bf16.mxu0 0
      %3209 = vmatmul.mubr.bf16.gmra.mrb[0].mxu0 %v1967
      %v3210 = vpop.f32.mrb[0].mxu0
      %v3211 = vadd.f32 %v603, %v3210
      %v3212 = vpop.f32.mrb[0].mxu0
      %v3213 = vpop.f32.mrb[0].mxu0
      %v3214 = vadd.f32 %v603, %v3213
      %v3215 = vpop.f32.mrb[0].mxu0
      %3216 = vmatprep.mubr.bf16.mxu0 0
      %3217 = vmatmul.mubr.bf16.gmra.mrb[0].mxu0 %v1970
      %v3218 = vpop.f32.mrb[0].mxu0
      %v3219 = vadd.f32 %v603, %v3218
      %v3220 = vpop.f32.mrb[0].mxu0
      %v3221 = vpop.f32.mrb[0].mxu0
      %v3222 = vadd.f32 %v603, %v3221
      %v3223 = vpop.f32.mrb[0].mxu0
      %3224 = vmatprep.mubr.bf16.mxu0 0
      %3225 = vmatmul.mubr.bf16.gmra.mrb[0].mxu0 %v1973
      %v3226 = vpop.f32.mrb[0].mxu0
      %v3227 = vadd.f32 %v603, %v3226
      %v3228 = vpop.f32.mrb[0].mxu0
      %v3229 = vpop.f32.mrb[0].mxu0
      %v3230 = vadd.f32 %v603, %v3229
      %v3231 = vpop.f32.mrb[0].mxu0
      %3232 = vmatprep.mubr.bf16.mxu0 0
      %3233 = vmatmul.mubr.bf16.gmra.mrb[0].mxu0 %v1976
      %v3234 = vpop.f32.mrb[0].mxu0
      %v3235 = vadd.f32 %v603, %v3234
      %v3236 = vpop.f32.mrb[0].mxu0
      %v3237 = vpop.f32.mrb[0].mxu0
      %v3238 = vadd.f32 %v603, %v3237
      %v3239 = vpop.f32.mrb[0].mxu0
      %3240 = vmatprep.mubr.bf16.mxu0 0
      %3241 = vmatmul.mubr.bf16.gmra.mrb[0].mxu0 %v1979
      %v3242 = vpop.f32.mrb[0].mxu0
      %v3243 = vadd.f32 %v603, %v3242
      %v3244 = vpop.f32.mrb[0].mxu0
      %v3245 = vpop.f32.mrb[0].mxu0
      %v3246 = vadd.f32 %v603, %v3245
      %v3247 = vpop.f32.mrb[0].mxu0
      %3248 = vmatprep.mubr.bf16.mxu0 0
      %3249 = vmatmul.mubr.bf16.gmra.mrb[0].mxu0 %v1982
      %v3250 = vpop.f32.mrb[0].mxu0
      %v3251 = vadd.f32 %v603, %v3250
      %v3252 = vpop.f32.mrb[0].mxu0
      %v3253 = vpop.f32.mrb[0].mxu0
      %v3254 = vadd.f32 %v603, %v3253
      %v3255 = vpop.f32.mrb[0].mxu0
      %3256 = vmatprep.mubr.bf16.mxu0 0
      %3257 = vmatmul.mubr.bf16.gmra.mrb[0].mxu0 %v1985
      %v3258 = vpop.f32.mrb[0].mxu0
      %v3259 = vadd.f32 %v603, %v3258
      %v3260 = vpop.f32.mrb[0].mxu0
      %v3261 = vpop.f32.mrb[0].mxu0
      %v3262 = vadd.f32 %v603, %v3261
      %v3263 = vpop.f32.mrb[0].mxu0
      %3264 = vmatprep.mubr.bf16.mxu0 0
      %3265 = vmatmul.mubr.bf16.gmra.mrb[0].mxu0 %v1988
      %v3266 = vpop.f32.mrb[0].mxu0
      %v3267 = vadd.f32 %v603, %v3266
      %v3268 = vpop.f32.mrb[0].mxu0
      %v3269 = vpop.f32.mrb[0].mxu0
      %v3270 = vadd.f32 %v603, %v3269
      %v3271 = vpop.f32.mrb[0].mxu0
      %3272 = vmatprep.mubr.bf16.mxu0 0
      %3273 = vmatmul.mubr.bf16.gmra.mrb[0].mxu0 %v1991
      %v3274 = vpop.f32.mrb[0].mxu0
      %v3275 = vadd.f32 %v603, %v3274
      %v3276 = vpop.f32.mrb[0].mxu0
      %v3277 = vpop.f32.mrb[0].mxu0
      %v3278 = vadd.f32 %v603, %v3277
      %v3279 = vpop.f32.mrb[0].mxu0
      %3280 = vmatprep.mubr.bf16.mxu0 0
      %3281 = vmatmul.mubr.bf16.gmra.mrb[0].mxu0 %v1994
      %v3282 = vpop.f32.mrb[0].mxu0
      %v3283 = vadd.f32 %v603, %v3282
      %v3284 = vpop.f32.mrb[0].mxu0
      %v3285 = vpop.f32.mrb[0].mxu0
      %v3286 = vadd.f32 %v603, %v3285
      %v3287 = vpop.f32.mrb[0].mxu0
      %3288 = vmatprep.mubr.bf16.mxu0 0
      %3289 = vmatmul.mubr.bf16.gmra.mrb[0].mxu0 %v1997
      %v3290 = vpop.f32.mrb[0].mxu0
      %v3291 = vadd.f32 %v603, %v3290
      %v3292 = vpop.f32.mrb[0].mxu0
      %v3293 = vpop.f32.mrb[0].mxu0
      %v3294 = vadd.f32 %v603, %v3293
      %v3295 = vpop.f32.mrb[0].mxu0
      %3296 = vmatprep.mubr.bf16.mxu0 0
      %3297 = vmatmul.mubr.bf16.gmra.mrb[0].mxu0 %v2000
      %v3298 = vpop.f32.mrb[0].mxu0
      %v3299 = vadd.f32 %v603, %v3298
      %v3300 = vpop.f32.mrb[0].mxu0
      %v3301 = vpop.f32.mrb[0].mxu0
      %v3302 = vadd.f32 %v603, %v3301
      %v3303 = vpop.f32.mrb[0].mxu0
      %3304 = vmatprep.mubr.bf16.mxu0 0
      %3305 = vmatmul.mubr.bf16.gmra.mrb[0].mxu0 %v2003
      %v3306 = vpop.f32.mrb[0].mxu0
      %v3307 = vadd.f32 %v603, %v3306
      %v3308 = vpop.f32.mrb[0].mxu0
      %v3309 = vpop.f32.mrb[0].mxu0
      %v3310 = vadd.f32 %v603, %v3309
      %v3311 = vpop.f32.mrb[0].mxu0
      %3312 = vmatprep.mubr.bf16.mxu0 0
      %3313 = vmatmul.mubr.bf16.gmra.mrb[0].mxu0 %v2006
      %v3314 = vpop.f32.mrb[0].mxu0
      %v3315 = vadd.f32 %v603, %v3314
      %v3316 = vpop.f32.mrb[0].mxu0
      %v3317 = vpop.f32.mrb[0].mxu0
      %v3318 = vadd.f32 %v603, %v3317
      %v3319 = vpop.f32.mrb[0].mxu0
      %3320 = vmatprep.mubr.bf16.mxu0 0
      %3321 = vmatmul.mubr.bf16.gmra.mrb[0].mxu0 %v2009
      %v3322 = vpop.f32.mrb[0].mxu0
      %v3323 = vadd.f32 %v603, %v3322
      %v3324 = vpop.f32.mrb[0].mxu0
      %v3325 = vpop.f32.mrb[0].mxu0
      %v3326 = vadd.f32 %v603, %v3325
      %v3327 = vpop.f32.mrb[0].mxu0
      %3328 = vmatprep.mubr.bf16.mxu0 0
      %3329 = vmatmul.mubr.bf16.gmra.mrb[0].mxu0 %v2012
      %v3330 = vpop.f32.mrb[0].mxu0
      %v3331 = vadd.f32 %v603, %v3330
      %v3332 = vpop.f32.mrb[0].mxu0
      %v3333 = vpop.f32.mrb[0].mxu0
      %v3334 = vadd.f32 %v603, %v3333
      %v3335 = vpop.f32.mrb[0].mxu0
      %3336 = vmatprep.mubr.bf16.mxu0 0
      %3337 = vmatmul.mubr.bf16.gmra.mrb[0].mxu0 %v2015
      %v3338 = vpop.f32.mrb[0].mxu0
      %v3339 = vadd.f32 %v603, %v3338
      %v3340 = vpop.f32.mrb[0].mxu0
      %v3341 = vpop.f32.mrb[0].mxu0
      %v3342 = vadd.f32 %v603, %v3341
      %v3343 = vpop.f32.mrb[0].mxu0
      %3344 = vmatprep.mubr.bf16.mxu0 0
      %3345 = vmatmul.mubr.bf16.gmra.mrb[0].mxu0 %v2018
      %v3346 = vpop.f32.mrb[0].mxu0
      %v3347 = vadd.f32 %v603, %v3346
      %v3348 = vpop.f32.mrb[0].mxu0
      %v3349 = vpop.f32.mrb[0].mxu0
      %v3350 = vadd.f32 %v603, %v3349
      %v3351 = vpop.f32.mrb[0].mxu0
      %3352 = vmatprep.mubr.bf16.mxu0 0
      %3353 = vmatmul.mubr.bf16.gmra.mrb[0].mxu0 %v2021
      %v3354 = vpop.f32.mrb[0].mxu0
      %v3355 = vadd.f32 %v603, %v3354
      %v3356 = vpop.f32.mrb[0].mxu0
      %v3357 = vpop.f32.mrb[0].mxu0
      %v3358 = vadd.f32 %v603, %v3357
      %v3359 = vpop.f32.mrb[0].mxu0
      %3360 = vmatprep.mubr.bf16.mxu0 0
      %3361 = vmatmul.mubr.bf16.gmra.mrb[0].mxu0 %v2024
      %v3362 = vpop.f32.mrb[0].mxu0
      %v3363 = vadd.f32 %v603, %v3362
      %v3364 = vpop.f32.mrb[0].mxu0
      %v3365 = vpop.f32.mrb[0].mxu0
      %v3366 = vadd.f32 %v603, %v3365
      %v3367 = vpop.f32.mrb[0].mxu0
      %3368 = vmatprep.mubr.bf16.mxu0 0
      %3369 = vmatmul.mubr.bf16.gmra.mrb[0].mxu0 %v2027
      %v3370 = vpop.f32.mrb[0].mxu0
      %v3371 = vadd.f32 %v603, %v3370
      %v3372 = vpop.f32.mrb[0].mxu0
      %v3373 = vpop.f32.mrb[0].mxu0
      %v3374 = vadd.f32 %v603, %v3373
      %v3375 = vpop.f32.mrb[0].mxu0
      %3376 = vmatprep.mubr.bf16.mxu0 0
      %3377 = vmatmul.mubr.bf16.gmra.mrb[0].mxu0 %v2030
      %v3378 = vpop.f32.mrb[0].mxu0
      %v3379 = vadd.f32 %v603, %v3378
      %v3380 = vpop.f32.mrb[0].mxu0
      %v3381 = vpop.f32.mrb[0].mxu0
      %v3382 = vadd.f32 %v603, %v3381
      %v3383 = vpop.f32.mrb[0].mxu0
      %3384 = vmatprep.mubr.bf16.mxu0 0
      %3385 = vmatmul.mubr.bf16.gmra.mrb[0].mxu0 %v2033
      %v3386 = vpop.f32.mrb[0].mxu0
      %v3387 = vadd.f32 %v603, %v3386
      %v3388 = vpop.f32.mrb[0].mxu0
      %v3389 = vpop.f32.mrb[0].mxu0
      %v3390 = vadd.f32 %v603, %v3389
      %v3391 = vpop.f32.mrb[0].mxu0
      %3392 = vmatprep.mubr.bf16.mxu0 0
      %3393 = vmatmul.mubr.bf16.gmra.mrb[0].mxu0 %v2036
      %v3394 = vpop.f32.mrb[0].mxu0
      %v3395 = vadd.f32 %v603, %v3394
      %v3396 = vpop.f32.mrb[0].mxu0
      %v3397 = vpop.f32.mrb[0].mxu0
      %v3398 = vadd.f32 %v603, %v3397
      %v3399 = vpop.f32.mrb[0].mxu0
      %3400 = vmatprep.mubr.bf16.mxu0 0
      %3401 = vmatmul.mubr.bf16.gmra.mrb[0].mxu0 %v2039
      %v3402 = vpop.f32.mrb[0].mxu0
      %v3403 = vadd.f32 %v603, %v3402
      %v3404 = vpop.f32.mrb[0].mxu0
      %v3405 = vpop.f32.mrb[0].mxu0
      %v3406 = vadd.f32 %v603, %v3405
      %v3407 = vpop.f32.mrb[0].mxu0
      %3408 = vmatprep.mubr.bf16.mxu0 0
      %3409 = vmatmul.mubr.bf16.gmra.mrb[0].mxu0 %v2042
      %v3410 = vpop.f32.mrb[0].mxu0
      %v3411 = vadd.f32 %v603, %v3410
      %v3412 = vpop.f32.mrb[0].mxu0
      %v3413 = vpop.f32.mrb[0].mxu0
      %v3414 = vadd.f32 %v603, %v3413
      %v3415 = vpop.f32.mrb[0].mxu0
      %3416 = vmatprep.mubr.bf16.mxu0 0
      %3417 = vmatmul.mubr.bf16.gmra.mrb[0].mxu0 %v2045
      %v3418 = vpop.f32.mrb[0].mxu0
      %v3419 = vadd.f32 %v603, %v3418
      %v3420 = vpop.f32.mrb[0].mxu0
      %v3421 = vpop.f32.mrb[0].mxu0
      %v3422 = vadd.f32 %v603, %v3421
      %v3423 = vpop.f32.mrb[0].mxu0
      %3424 = vmatprep.mubr.bf16.mxu0 0
      %3425 = vmatmul.mubr.bf16.gmra.mrb[0].mxu0 %v2048
      %v3426 = vpop.f32.mrb[0].mxu0
      %v3427 = vadd.f32 %v603, %v3426
      %v3428 = vpop.f32.mrb[0].mxu0
      %v3429 = vpop.f32.mrb[0].mxu0
      %v3430 = vadd.f32 %v603, %v3429
      %v3431 = vpop.f32.mrb[0].mxu0
      %3432 = vmatprep.mubr.bf16.mxu0 0
      %3433 = vmatmul.mubr.bf16.gmra.mrb[0].mxu0 %v2051
      %v3434 = vpop.f32.mrb[0].mxu0
      %v3435 = vadd.f32 %v603, %v3434
      %v3436 = vpop.f32.mrb[0].mxu0
      %v3437 = vpop.f32.mrb[0].mxu0
      %v3438 = vadd.f32 %v603, %v3437
      %v3439 = vpop.f32.mrb[0].mxu0
      %3440 = vmatprep.mubr.bf16.mxu0 0
      %3441 = vmatmul.mubr.bf16.gmra.mrb[0].mxu0 %v2054
      %v3442 = vpop.f32.mrb[0].mxu0
      %v3443 = vadd.f32 %v603, %v3442
      %v3444 = vpop.f32.mrb[0].mxu0
      %v3445 = vpop.f32.mrb[0].mxu0
      %v3446 = vadd.f32 %v603, %v3445
      %v3447 = vpop.f32.mrb[0].mxu0
      %3448 = vmatprep.mubr.bf16.mxu0 0
      %3449 = vmatmul.mubr.bf16.gmra.mrb[0].mxu0 %v2057
      %v3450 = vpop.f32.mrb[0].mxu0
      %v3451 = vadd.f32 %v603, %v3450
      %v3452 = vpop.f32.mrb[0].mxu0
      %v3453 = vpop.f32.mrb[0].mxu0
      %v3454 = vadd.f32 %v603, %v3453
      %v3455 = vpop.f32.mrb[0].mxu0
      %3456 = vmatprep.mubr.bf16.mxu0 0
      %3457 = vmatmul.mubr.bf16.gmra.mrb[0].mxu0 %v2060
      %v3458 = vpop.f32.mrb[0].mxu0
      %v3459 = vadd.f32 %v603, %v3458
      %v3460 = vpop.f32.mrb[0].mxu0
      %v3461 = vpop.f32.mrb[0].mxu0
      %v3462 = vadd.f32 %v603, %v3461
      %v3463 = vpop.f32.mrb[0].mxu0
      %3464 = vmatprep.mubr.bf16.mxu0 0
      %3465 = vmatmul.mubr.bf16.gmra.mrb[0].mxu0 %v2063
      %v3466 = vpop.f32.mrb[0].mxu0
      %v3467 = vadd.f32 %v603, %v3466
      %v3468 = vpop.f32.mrb[0].mxu0
      %v3469 = vpop.f32.mrb[0].mxu0
      %v3470 = vadd.f32 %v603, %v3469
      %v3471 = vpop.f32.mrb[0].mxu0
      %3472 = vmatprep.mubr.bf16.mxu0 0
      %3473 = vmatmul.mubr.bf16.gmra.mrb[0].mxu0 %v2066
      %v3474 = vpop.f32.mrb[0].mxu0
      %v3475 = vadd.f32 %v603, %v3474
      %v3476 = vpop.f32.mrb[0].mxu0
      %v3477 = vpop.f32.mrb[0].mxu0
      %v3478 = vadd.f32 %v603, %v3477
      %v3479 = vpop.f32.mrb[0].mxu0
      %3480 = vmatprep.mubr.bf16.mxu0 0
      %3481 = vmatmul.mubr.bf16.gmra.mrb[0].mxu0 %v2069
      %v3482 = vpop.f32.mrb[0].mxu0
      %v3483 = vadd.f32 %v603, %v3482
      %v3484 = vpop.f32.mrb[0].mxu0
      %v3485 = vpop.f32.mrb[0].mxu0
      %v3486 = vadd.f32 %v603, %v3485
      %v3487 = vpop.f32.mrb[0].mxu0
      %3488 = vmatprep.mubr.bf16.mxu0 0
      %3489 = vmatmul.mubr.bf16.gmra.mrb[0].mxu0 %v2072
      %v3490 = vpop.f32.mrb[0].mxu0
      %v3491 = vadd.f32 %v603, %v3490
      %v3492 = vpop.f32.mrb[0].mxu0
      %v3493 = vpop.f32.mrb[0].mxu0
      %v3494 = vadd.f32 %v603, %v3493
      %v3495 = vpop.f32.mrb[0].mxu0
      %3496 = vmatprep.mubr.bf16.mxu0 0
      %3497 = vmatmul.mubr.bf16.gmra.mrb[0].mxu0 %v2075
      %v3498 = vpop.f32.mrb[0].mxu0
      %v3499 = vadd.f32 %v603, %v3498
      %v3500 = vpop.f32.mrb[0].mxu0
      %v3501 = vpop.f32.mrb[0].mxu0
      %v3502 = vadd.f32 %v603, %v3501
      %v3503 = vpop.f32.mrb[0].mxu0
      %3504 = vmatprep.mubr.bf16.mxu0 0
      %3505 = vmatmul.mubr.bf16.gmra.mrb[0].mxu0 %v2078
      %v3506 = vpop.f32.mrb[0].mxu0
      %v3507 = vadd.f32 %v603, %v3506
      %v3508 = vpop.f32.mrb[0].mxu0
      %v3509 = vpop.f32.mrb[0].mxu0
      %v3510 = vadd.f32 %v603, %v3509
      %v3511 = vpop.f32.mrb[0].mxu0
      %3512 = vmatprep.mubr.bf16.mxu0 0
      %3513 = vmatmul.mubr.bf16.gmra.mrb[0].mxu0 %v2081
      %v3514 = vpop.f32.mrb[0].mxu0
      %v3515 = vadd.f32 %v603, %v3514
      %v3516 = vpop.f32.mrb[0].mxu0
      %v3517 = vpop.f32.mrb[0].mxu0
      %v3518 = vadd.f32 %v603, %v3517
      %v3519 = vpop.f32.mrb[0].mxu0
      %3520 = vmatprep.mubr.bf16.mxu0 0
      %3521 = vmatmul.mubr.bf16.gmra.mrb[0].mxu0 %v2084
      %v3522 = vpop.f32.mrb[0].mxu0
      %v3523 = vadd.f32 %v603, %v3522
      %v3524 = vpop.f32.mrb[0].mxu0
      %v3525 = vpop.f32.mrb[0].mxu0
      %v3526 = vadd.f32 %v603, %v3525
      %v3527 = vpop.f32.mrb[0].mxu0
      %3528 = vmatprep.mubr.bf16.mxu0 0
      %3529 = vmatmul.mubr.bf16.gmra.mrb[0].mxu0 %v2087
      %v3530 = vpop.f32.mrb[0].mxu0
      %v3531 = vadd.f32 %v603, %v3530
      %v3532 = vpop.f32.mrb[0].mxu0
      %v3533 = vpop.f32.mrb[0].mxu0
      %v3534 = vadd.f32 %v603, %v3533
      %v3535 = vpop.f32.mrb[0].mxu0
      %3536 = vmatprep.mubr.bf16.mxu0 0
      %3537 = vmatmul.mubr.bf16.gmra.mrb[0].mxu0 %v2090
      %v3538 = vpop.f32.mrb[0].mxu0
      %v3539 = vadd.f32 %v603, %v3538
      %v3540 = vpop.f32.mrb[0].mxu0
      %v3541 = vpop.f32.mrb[0].mxu0
      %v3542 = vadd.f32 %v603, %v3541
      %v3543 = vpop.f32.mrb[0].mxu0
      %3544 = vmatprep.mubr.bf16.mxu0 0
      %3545 = vmatmul.mubr.bf16.gmra.mrb[0].mxu0 %v2093
      %v3546 = vpop.f32.mrb[0].mxu0
      %v3547 = vadd.f32 %v603, %v3546
      %v3548 = vpop.f32.mrb[0].mxu0
      %v3549 = vpop.f32.mrb[0].mxu0
      %v3550 = vadd.f32 %v603, %v3549
      %v3551 = vpop.f32.mrb[0].mxu0
      %3552 = vmatprep.mubr.bf16.mxu0 0
      %3553 = vmatmul.mubr.bf16.gmra.mrb[0].mxu0 %v2096
      %v3554 = vpop.f32.mrb[0].mxu0
      %v3555 = vadd.f32 %v603, %v3554
      %v3556 = vpop.f32.mrb[0].mxu0
      %v3557 = vpop.f32.mrb[0].mxu0
      %v3558 = vadd.f32 %v603, %v3557
      %v3559 = vpop.f32.mrb[0].mxu0
      %3560 = vmatprep.mubr.bf16.mxu0 0
      %3561 = vmatmul.mubr.bf16.gmra.mrb[0].mxu0 %v2099
      %v3562 = vpop.f32.mrb[0].mxu0
      %v3563 = vadd.f32 %v603, %v3562
      %v3564 = vpop.f32.mrb[0].mxu0
      %v3565 = vpop.f32.mrb[0].mxu0
      %v3566 = vadd.f32 %v603, %v3565
      %v3567 = vpop.f32.mrb[0].mxu0
      %3568 = vmatprep.mubr.bf16.mxu0 0
      %3569 = vmatmul.mubr.bf16.gmra.mrb[0].mxu0 %v2102
      %v3570 = vpop.f32.mrb[0].mxu0
      %v3571 = vadd.f32 %v603, %v3570
      %v3572 = vpop.f32.mrb[0].mxu0
      %v3573 = vpop.f32.mrb[0].mxu0
      %v3574 = vadd.f32 %v603, %v3573
      %v3575 = vpop.f32.mrb[0].mxu0
      %3576 = vmatprep.mubr.bf16.mxu0 0
      %3577 = vmatmul.mubr.bf16.gmra.mrb[0].mxu0 %v2105
      %v3578 = vpop.f32.mrb[0].mxu0
      %v3579 = vadd.f32 %v603, %v3578
      %v3580 = vpop.f32.mrb[0].mxu0
      %v3581 = vpop.f32.mrb[0].mxu0
      %v3582 = vadd.f32 %v603, %v3581
      %v3583 = vpop.f32.mrb[0].mxu0
      %3584 = vmatprep.mubr.bf16.mxu0 0
      %3585 = vmatmul.mubr.bf16.gmra.mrb[0].mxu0 %v2108
      %v3586 = vpop.f32.mrb[0].mxu0
      %v3587 = vadd.f32 %v603, %v3586
      %v3588 = vpop.f32.mrb[0].mxu0
      %v3589 = vpop.f32.mrb[0].mxu0
      %v3590 = vadd.f32 %v603, %v3589
      %v3591 = vpop.f32.mrb[0].mxu0
      %3592 = vmatprep.mubr.bf16.mxu0 0
      %3593 = vmatmul.mubr.bf16.gmra.mrb[0].mxu0 %v2111
      %v3594 = vpop.f32.mrb[0].mxu0
      %v3595 = vadd.f32 %v603, %v3594
      %v3596 = vpop.f32.mrb[0].mxu0
      %v3597 = vpop.f32.mrb[0].mxu0
      %v3598 = vadd.f32 %v603, %v3597
      %v3599 = vpop.f32.mrb[0].mxu0
      %3600 = vmatprep.mubr.bf16.mxu0 0
      %3601 = vmatmul.mubr.bf16.gmra.mrb[0].mxu0 %v2114
      %v3602 = vpop.f32.mrb[0].mxu0
      %v3603 = vadd.f32 %v603, %v3602
      %v3604 = vpop.f32.mrb[0].mxu0
      %v3605 = vpop.f32.mrb[0].mxu0
      %v3606 = vadd.f32 %v603, %v3605
      %v3607 = vpop.f32.mrb[0].mxu0
      %3608 = vmatprep.mubr.bf16.mxu0 0
      %3609 = vmatmul.mubr.bf16.gmra.mrb[0].mxu0 %v2117
      %v3610 = vpop.f32.mrb[0].mxu0
      %v3611 = vadd.f32 %v603, %v3610
      %v3612 = vpop.f32.mrb[0].mxu0
      %v3613 = vpop.f32.mrb[0].mxu0
      %v3614 = vadd.f32 %v603, %v3613
      %v3615 = vpop.f32.mrb[0].mxu0
      %3616 = vmatprep.mubr.bf16.mxu0 0
      %3617 = vmatmul.mubr.bf16.gmra.mrb[0].mxu0 %v2120
      %v3618 = vpop.f32.mrb[0].mxu0
      %v3619 = vadd.f32 %v603, %v3618
      %v3620 = vpop.f32.mrb[0].mxu0
      %v3621 = vpop.f32.mrb[0].mxu0
      %v3622 = vadd.f32 %v603, %v3621
      %v3623 = vpop.f32.mrb[0].mxu0
      %3624 = vmatprep.mubr.bf16.mxu0 0
      %3625 = vmatmul.mubr.bf16.gmra.mrb[0].mxu0 %v2123
      %v3626 = vpop.f32.mrb[0].mxu0
      %v3627 = vadd.f32 %v603, %v3626
      %v3628 = vpop.f32.mrb[0].mxu0
      %v3629 = vpop.f32.mrb[0].mxu0
      %v3630 = vadd.f32 %v603, %v3629
      %v3631 = vpop.f32.mrb[0].mxu0
      %3632 = vmatprep.mubr.bf16.mxu0 0
      %3633 = vmatmul.mubr.bf16.gmra.mrb[0].mxu0 %v2126
      %v3634 = vpop.f32.mrb[0].mxu0
      %v3635 = vadd.f32 %v603, %v3634
      %v3636 = vpop.f32.mrb[0].mxu0
      %v3637 = vpop.f32.mrb[0].mxu0
      %v3638 = vadd.f32 %v603, %v3637
      %v3639 = vpop.f32.mrb[0].mxu0
      %3640 = vmatprep.mubr.bf16.mxu0 0
      %3641 = vmatmul.mubr.bf16.gmra.mrb[0].mxu0 %v2129
      %v3642 = vpop.f32.mrb[0].mxu0
      %v3643 = vadd.f32 %v603, %v3642
      %v3644 = vpop.f32.mrb[0].mxu0
      %v3645 = vpop.f32.mrb[0].mxu0
      %v3646 = vadd.f32 %v603, %v3645
      %v3647 = vpop.f32.mrb[0].mxu0
      %3648 = vmatprep.mubr.bf16.mxu0 0
      %3649 = vmatmul.mubr.bf16.gmra.mrb[0].mxu0 %v2132
      %v3650 = vpop.f32.mrb[0].mxu0
      %v3651 = vadd.f32 %v603, %v3650
      %v3652 = vpop.f32.mrb[0].mxu0
      %v3653 = vpop.f32.mrb[0].mxu0
      %v3654 = vadd.f32 %v603, %v3653
      %v3655 = vpop.f32.mrb[0].mxu0
      %3656 = vmatprep.mubr.bf16.mxu0 0
      %3657 = vmatmul.mubr.bf16.gmra.mrb[0].mxu0 %v2135
      %v3658 = vpop.f32.mrb[0].mxu0
      %v3659 = vadd.f32 %v603, %v3658
      %v3660 = vpop.f32.mrb[0].mxu0
      %v3661 = vpop.f32.mrb[0].mxu0
      %v3662 = vadd.f32 %v603, %v3661
      %v3663 = vpop.f32.mrb[0].mxu0
      %3664 = vmatprep.mubr.bf16.mxu0 0
      %3665 = vmatmul.mubr.bf16.gmra.mrb[0].mxu0 %v2138
      %v3666 = vpop.f32.mrb[0].mxu0
      %v3667 = vadd.f32 %v603, %v3666
      %v3668 = vpop.f32.mrb[0].mxu0
      %v3669 = vpop.f32.mrb[0].mxu0
      %v3670 = vadd.f32 %v603, %v3669
      %v3671 = vpop.f32.mrb[0].mxu0
      %3672 = vmatprep.mubr.bf16.mxu0 0
      %3673 = vmatmul.mubr.bf16.gmra.mrb[0].mxu0 %v2141
      %v3674 = vpop.f32.mrb[0].mxu0
      %v3675 = vadd.f32 %v603, %v3674
      %v3676 = vpop.f32.mrb[0].mxu0
      %v3677 = vpop.f32.mrb[0].mxu0
      %v3678 = vadd.f32 %v603, %v3677
      %v3679 = vpop.f32.mrb[0].mxu0
      %3680 = vmatprep.mubr.bf16.mxu0 0
      %3681 = vmatmul.mubr.bf16.gmra.mrb[0].mxu0 %v2144
      %v3682 = vpop.f32.mrb[0].mxu0
      %v3683 = vadd.f32 %v603, %v3682
      %v3684 = vpop.f32.mrb[0].mxu0
      %v3685 = vpop.f32.mrb[0].mxu0
      %v3686 = vadd.f32 %v603, %v3685
      %v3687 = vpop.f32.mrb[0].mxu0
      %3688 = vmatprep.mubr.bf16.mxu0 0
      %3689 = vmatmul.mubr.bf16.gmra.mrb[0].mxu0 %v2147
      %v3690 = vpop.f32.mrb[0].mxu0
      %v3691 = vadd.f32 %v603, %v3690
      %v3692 = vpop.f32.mrb[0].mxu0
      %v3693 = vpop.f32.mrb[0].mxu0
      %v3694 = vadd.f32 %v603, %v3693
      %v3695 = vpop.f32.mrb[0].mxu0
      %3696 = vmatprep.mubr.bf16.mxu0 0
      %3697 = vmatmul.mubr.bf16.gmra.mrb[0].mxu0 %v2150
      %v3698 = vpop.f32.mrb[0].mxu0
      %v3699 = vadd.f32 %v603, %v3698
      %v3700 = vpop.f32.mrb[0].mxu0
      %v3701 = vpop.f32.mrb[0].mxu0
      %v3702 = vadd.f32 %v603, %v3701
      %v3703 = vpop.f32.mrb[0].mxu0
      %3704 = vmatprep.mubr.bf16.mxu0 0
      %3705 = vmatmul.mubr.bf16.gmra.mrb[0].mxu0 %v2153
      %v3706 = vpop.f32.mrb[0].mxu0
      %v3707 = vadd.f32 %v603, %v3706
      %v3708 = vpop.f32.mrb[0].mxu0
      %v3709 = vpop.f32.mrb[0].mxu0
      %v3710 = vadd.f32 %v603, %v3709
      %v3711 = vpop.f32.mrb[0].mxu0
      %3712 = vmatprep.mubr.bf16.mxu0 0
      %3713 = vmatmul.mubr.bf16.gmra.mrb[0].mxu0 %v2156
      %v3714 = vpop.f32.mrb[0].mxu0
      %v3715 = vadd.f32 %v603, %v3714
      %v3716 = vpop.f32.mrb[0].mxu0
      %v3717 = vpop.f32.mrb[0].mxu0
      %v3718 = vadd.f32 %v603, %v3717
      %v3719 = vpop.f32.mrb[0].mxu0
      %3720 = vmatprep.mubr.bf16.mxu0 0
      %3721 = vmatmul.mubr.bf16.gmra.mrb[0].mxu0 %v2159
      %v3722 = vpop.f32.mrb[0].mxu0
      %v3723 = vadd.f32 %v603, %v3722
      %v3724 = vpop.f32.mrb[0].mxu0
      %v3725 = vpop.f32.mrb[0].mxu0
      %v3726 = vadd.f32 %v603, %v3725
      %v3727 = vpop.f32.mrb[0].mxu0
      %3728 = vmatprep.mubr.bf16.mxu0 0
      %3729 = vmatmul.mubr.bf16.gmra.mrb[0].mxu0 %v2162
      %v3730 = vpop.f32.mrb[0].mxu0
      %v3731 = vadd.f32 %v603, %v3730
      %v3732 = vpop.f32.mrb[0].mxu0
      %v3733 = vpop.f32.mrb[0].mxu0
      %v3734 = vadd.f32 %v603, %v3733
      %v3735 = vpop.f32.mrb[0].mxu0
      %3736 = vmatprep.mubr.bf16.mxu0 0
      %3737 = vmatmul.mubr.bf16.gmra.mrb[0].mxu0 %v2165
      %v3738 = vpop.f32.mrb[0].mxu0
      %v3739 = vadd.f32 %v603, %v3738
      %v3740 = vpop.f32.mrb[0].mxu0
      %v3741 = vpop.f32.mrb[0].mxu0
      %v3742 = vadd.f32 %v603, %v3741
      %v3743 = vpop.f32.mrb[0].mxu0
      %3744 = vmatprep.mubr.bf16.mxu0 0
      %3745 = vmatmul.mubr.bf16.gmra.mrb[0].mxu0 %v2168
      %v3746 = vpop.f32.mrb[0].mxu0
      %v3747 = vadd.f32 %v603, %v3746
      %v3748 = vpop.f32.mrb[0].mxu0
      %v3749 = vpop.f32.mrb[0].mxu0
      %v3750 = vadd.f32 %v603, %v3749
      %v3751 = vpop.f32.mrb[0].mxu0
      %3752 = vmatprep.mubr.bf16.mxu0 0
      %3753 = vmatmul.mubr.bf16.gmra.mrb[0].mxu0 %v2171
      %v3754 = vpop.f32.mrb[0].mxu0
      %v3755 = vadd.f32 %v603, %v3754
      %v3756 = vpop.f32.mrb[0].mxu0
      %v3757 = vpop.f32.mrb[0].mxu0
      %v3758 = vadd.f32 %v603, %v3757
      %v3759 = vpop.f32.mrb[0].mxu0
      %3760 = vmatprep.mubr.bf16.mxu0 0
      %3761 = vmatmul.mubr.bf16.gmra.mrb[0].mxu0 %v2174
      %v3762 = vpop.f32.mrb[0].mxu0
      %v3763 = vadd.f32 %v603, %v3762
      %v3764 = vpop.f32.mrb[0].mxu0
      %v3765 = vpop.f32.mrb[0].mxu0
      %v3766 = vadd.f32 %v603, %v3765
      %v3767 = vpop.f32.mrb[0].mxu0
      %3768 = vmatprep.mubr.bf16.mxu0 0
      %3769 = vmatmul.mubr.bf16.gmra.mrb[0].mxu0 %v2177
      %v3770 = vpop.f32.mrb[0].mxu0
      %v3771 = vadd.f32 %v603, %v3770
      %v3772 = vpop.f32.mrb[0].mxu0
      %v3773 = vpop.f32.mrb[0].mxu0
      %v3774 = vadd.f32 %v603, %v3773
      %v3775 = vpop.f32.mrb[0].mxu0
      %3776 = vmatprep.mubr.bf16.mxu0 0
      %3777 = vmatmul.mubr.bf16.gmra.mrb[0].mxu0 %v2180
      %v3778 = vpop.f32.mrb[0].mxu0
      %v3779 = vadd.f32 %v603, %v3778
      %v3780 = vpop.f32.mrb[0].mxu0
      %v3781 = vpop.f32.mrb[0].mxu0
      %v3782 = vadd.f32 %v603, %v3781
      %v3783 = vpop.f32.mrb[0].mxu0
      %3784 = vmatprep.mubr.bf16.mxu0 0
      %3785 = vmatmul.mubr.bf16.gmra.mrb[0].mxu0 %v2183
      %v3786 = vpop.f32.mrb[0].mxu0
      %v3787 = vadd.f32 %v603, %v3786
      %v3788 = vpop.f32.mrb[0].mxu0
      %v3789 = vpop.f32.mrb[0].mxu0
      %v3790 = vadd.f32 %v603, %v3789
      %v3791 = vpop.f32.mrb[0].mxu0
      %3792 = vdwg.mxu0
      %vm3793 = vcmp.ge.f32.partialorder %v2227, 0.0
      %vm3794 = vcmp.ge.f32.partialorder %v2230, 0.0
      %vm3795 = vcmp.ge.f32.partialorder %v2235, 0.0
      %vm3796 = vcmp.ge.f32.partialorder %v2238, 0.0
      %vm3797 = vcmp.ge.f32.partialorder %v2243, 0.0
      %vm3798 = vcmp.ge.f32.partialorder %v2246, 0.0
      %vm3799 = vcmp.ge.f32.partialorder %v2251, 0.0
      %vm3800 = vcmp.ge.f32.partialorder %v2254, 0.0
      %vm3801 = vcmp.ge.f32.partialorder %v2259, 0.0
      %vm3802 = vcmp.ge.f32.partialorder %v2262, 0.0
      %vm3803 = vcmp.ge.f32.partialorder %v2267, 0.0
      %vm3804 = vcmp.ge.f32.partialorder %v2270, 0.0
      %vm3805 = vcmp.ge.f32.partialorder %v2275, 0.0
      %vm3806 = vcmp.ge.f32.partialorder %v2278, 0.0
      %vm3807 = vcmp.ge.f32.partialorder %v2283, 0.0
      %vm3808 = vcmp.ge.f32.partialorder %v2286, 0.0
      %vm3809 = vcmp.ge.f32.partialorder %v2291, 0.0
      %vm3810 = vcmp.ge.f32.partialorder %v2294, 0.0
      %vm3811 = vcmp.ge.f32.partialorder %v2299, 0.0
      %vm3812 = vcmp.ge.f32.partialorder %v2302, 0.0
      %vm3813 = vcmp.ge.f32.partialorder %v2307, 0.0
      %vm3814 = vcmp.ge.f32.partialorder %v2310, 0.0
      %vm3815 = vcmp.ge.f32.partialorder %v2315, 0.0
      %vm3816 = vcmp.ge.f32.partialorder %v2318, 0.0
      %vm3817 = vcmp.ge.f32.partialorder %v2323, 0.0
      %vm3818 = vcmp.ge.f32.partialorder %v2326, 0.0
      %vm3819 = vcmp.ge.f32.partialorder %v2331, 0.0
      %vm3820 = vcmp.ge.f32.partialorder %v2334, 0.0
      %vm3821 = vcmp.ge.f32.partialorder %v2339, 0.0
      %vm3822 = vcmp.ge.f32.partialorder %v2342, 0.0
      %vm3823 = vcmp.ge.f32.partialorder %v2347, 0.0
      %vm3824 = vcmp.ge.f32.partialorder %v2350, 0.0
      %vm3825 = vcmp.ge.f32.partialorder %v2355, 0.0
      %vm3826 = vcmp.ge.f32.partialorder %v2358, 0.0
      %vm3827 = vcmp.ge.f32.partialorder %v2363, 0.0
      %vm3828 = vcmp.ge.f32.partialorder %v2366, 0.0
      %vm3829 = vcmp.ge.f32.partialorder %v2371, 0.0
      %vm3830 = vcmp.ge.f32.partialorder %v2374, 0.0
      %vm3831 = vcmp.ge.f32.partialorder %v2379, 0.0
      %vm3832 = vcmp.ge.f32.partialorder %v2382, 0.0
      %vm3833 = vcmp.ge.f32.partialorder %v2387, 0.0
      %vm3834 = vcmp.ge.f32.partialorder %v2390, 0.0
      %vm3835 = vcmp.ge.f32.partialorder %v2395, 0.0
      %vm3836 = vcmp.ge.f32.partialorder %v2398, 0.0
      %vm3837 = vcmp.ge.f32.partialorder %v2403, 0.0
      %vm3838 = vcmp.ge.f32.partialorder %v2406, 0.0
      %vm3839 = vcmp.ge.f32.partialorder %v2411, 0.0
      %vm3840 = vcmp.ge.f32.partialorder %v2414, 0.0
      %vm3841 = vcmp.ge.f32.partialorder %v2419, 0.0
      %vm3842 = vcmp.ge.f32.partialorder %v2422, 0.0
      %vm3843 = vcmp.ge.f32.partialorder %v2427, 0.0
      %vm3844 = vcmp.ge.f32.partialorder %v2430, 0.0
      %vm3845 = vcmp.ge.f32.partialorder %v2435, 0.0
      %vm3846 = vcmp.ge.f32.partialorder %v2438, 0.0
      %vm3847 = vcmp.ge.f32.partialorder %v2443, 0.0
      %vm3848 = vcmp.ge.f32.partialorder %v2446, 0.0
      %vm3849 = vcmp.ge.f32.partialorder %v2451, 0.0
      %vm3850 = vcmp.ge.f32.partialorder %v2454, 0.0
      %vm3851 = vcmp.ge.f32.partialorder %v2459, 0.0
      %vm3852 = vcmp.ge.f32.partialorder %v2462, 0.0
      %vm3853 = vcmp.ge.f32.partialorder %v2467, 0.0
      %vm3854 = vcmp.ge.f32.partialorder %v2470, 0.0
      %vm3855 = vcmp.ge.f32.partialorder %v2475, 0.0
      %vm3856 = vcmp.ge.f32.partialorder %v2478, 0.0
      %vm3857 = vcmp.ge.f32.partialorder %v2483, 0.0
      %vm3858 = vcmp.ge.f32.partialorder %v2486, 0.0
      %vm3859 = vcmp.ge.f32.partialorder %v2491, 0.0
      %vm3860 = vcmp.ge.f32.partialorder %v2494, 0.0
      %vm3861 = vcmp.ge.f32.partialorder %v2499, 0.0
      %vm3862 = vcmp.ge.f32.partialorder %v2502, 0.0
      %vm3863 = vcmp.ge.f32.partialorder %v2507, 0.0
      %vm3864 = vcmp.ge.f32.partialorder %v2510, 0.0
      %vm3865 = vcmp.ge.f32.partialorder %v2515, 0.0
      %vm3866 = vcmp.ge.f32.partialorder %v2518, 0.0
      %vm3867 = vcmp.ge.f32.partialorder %v2523, 0.0
      %vm3868 = vcmp.ge.f32.partialorder %v2526, 0.0
      %vm3869 = vcmp.ge.f32.partialorder %v2531, 0.0
      %vm3870 = vcmp.ge.f32.partialorder %v2534, 0.0
      %vm3871 = vcmp.ge.f32.partialorder %v2539, 0.0
      %vm3872 = vcmp.ge.f32.partialorder %v2542, 0.0
      %vm3873 = vcmp.ge.f32.partialorder %v2547, 0.0
      %vm3874 = vcmp.ge.f32.partialorder %v2550, 0.0
      %vm3875 = vcmp.ge.f32.partialorder %v2555, 0.0
      %vm3876 = vcmp.ge.f32.partialorder %v2558, 0.0
      %vm3877 = vcmp.ge.f32.partialorder %v2563, 0.0
      %vm3878 = vcmp.ge.f32.partialorder %v2566, 0.0
      %vm3879 = vcmp.ge.f32.partialorder %v2571, 0.0
      %vm3880 = vcmp.ge.f32.partialorder %v2574, 0.0
      %vm3881 = vcmp.ge.f32.partialorder %v2579, 0.0
      %vm3882 = vcmp.ge.f32.partialorder %v2582, 0.0
      %vm3883 = vcmp.ge.f32.partialorder %v2587, 0.0
      %vm3884 = vcmp.ge.f32.partialorder %v2590, 0.0
      %vm3885 = vcmp.ge.f32.partialorder %v2595, 0.0
      %vm3886 = vcmp.ge.f32.partialorder %v2598, 0.0
      %vm3887 = vcmp.ge.f32.partialorder %v2603, 0.0
      %vm3888 = vcmp.ge.f32.partialorder %v2606, 0.0
      %vm3889 = vcmp.ge.f32.partialorder %v2611, 0.0
      %vm3890 = vcmp.ge.f32.partialorder %v2614, 0.0
      %vm3891 = vcmp.ge.f32.partialorder %v2619, 0.0
      %vm3892 = vcmp.ge.f32.partialorder %v2622, 0.0
      %vm3893 = vcmp.ge.f32.partialorder %v2627, 0.0
      %vm3894 = vcmp.ge.f32.partialorder %v2630, 0.0
      %vm3895 = vcmp.ge.f32.partialorder %v2635, 0.0
      %vm3896 = vcmp.ge.f32.partialorder %v2638, 0.0
      %vm3897 = vcmp.ge.f32.partialorder %v2643, 0.0
      %vm3898 = vcmp.ge.f32.partialorder %v2646, 0.0
      %vm3899 = vcmp.ge.f32.partialorder %v2651, 0.0
      %vm3900 = vcmp.ge.f32.partialorder %v2654, 0.0
      %vm3901 = vcmp.ge.f32.partialorder %v2659, 0.0
      %vm3902 = vcmp.ge.f32.partialorder %v2662, 0.0
      %vm3903 = vcmp.ge.f32.partialorder %v2667, 0.0
      %vm3904 = vcmp.ge.f32.partialorder %v2670, 0.0
      %vm3905 = vcmp.ge.f32.partialorder %v2675, 0.0
      %vm3906 = vcmp.ge.f32.partialorder %v2678, 0.0
      %vm3907 = vcmp.ge.f32.partialorder %v2683, 0.0
      %vm3908 = vcmp.ge.f32.partialorder %v2686, 0.0
      %vm3909 = vcmp.ge.f32.partialorder %v2691, 0.0
      %vm3910 = vcmp.ge.f32.partialorder %v2694, 0.0
      %vm3911 = vcmp.ge.f32.partialorder %v2699, 0.0
      %vm3912 = vcmp.ge.f32.partialorder %v2702, 0.0
      %vm3913 = vcmp.ge.f32.partialorder %v2707, 0.0
      %vm3914 = vcmp.ge.f32.partialorder %v2710, 0.0
      %vm3915 = vcmp.ge.f32.partialorder %v2715, 0.0
      %vm3916 = vcmp.ge.f32.partialorder %v2718, 0.0
      %vm3917 = vcmp.ge.f32.partialorder %v2723, 0.0
      %vm3918 = vcmp.ge.f32.partialorder %v2726, 0.0
      %vm3919 = vcmp.ge.f32.partialorder %v2731, 0.0
      %vm3920 = vcmp.ge.f32.partialorder %v2734, 0.0
      %vm3921 = vcmp.ge.f32.partialorder %v2739, 0.0
      %vm3922 = vcmp.ge.f32.partialorder %v2742, 0.0
      %vm3923 = vcmp.ge.f32.partialorder %v2747, 0.0
      %vm3924 = vcmp.ge.f32.partialorder %v2750, 0.0
      %vm3925 = vcmp.ge.f32.partialorder %v2755, 0.0
      %vm3926 = vcmp.ge.f32.partialorder %v2758, 0.0
      %vm3927 = vcmp.ge.f32.partialorder %v2763, 0.0
      %vm3928 = vcmp.ge.f32.partialorder %v2766, 0.0
      %vm3929 = vcmp.ge.f32.partialorder %v2771, 0.0
      %vm3930 = vcmp.ge.f32.partialorder %v2774, 0.0
      %vm3931 = vcmp.ge.f32.partialorder %v2779, 0.0
      %vm3932 = vcmp.ge.f32.partialorder %v2782, 0.0
      %vm3933 = vcmp.ge.f32.partialorder %v2787, 0.0
      %vm3934 = vcmp.ge.f32.partialorder %v2790, 0.0
      %vm3935 = vcmp.ge.f32.partialorder %v2795, 0.0
      %vm3936 = vcmp.ge.f32.partialorder %v2798, 0.0
      %vm3937 = vcmp.ge.f32.partialorder %v2803, 0.0
      %vm3938 = vcmp.ge.f32.partialorder %v2806, 0.0
      %vm3939 = vcmp.ge.f32.partialorder %v2811, 0.0
      %vm3940 = vcmp.ge.f32.partialorder %v2814, 0.0
      %vm3941 = vcmp.ge.f32.partialorder %v2819, 0.0
      %vm3942 = vcmp.ge.f32.partialorder %v2822, 0.0
      %vm3943 = vcmp.ge.f32.partialorder %v2827, 0.0
      %vm3944 = vcmp.ge.f32.partialorder %v2830, 0.0
      %vm3945 = vcmp.ge.f32.partialorder %v2835, 0.0
      %vm3946 = vcmp.ge.f32.partialorder %v2838, 0.0
      %vm3947 = vcmp.ge.f32.partialorder %v2843, 0.0
      %vm3948 = vcmp.ge.f32.partialorder %v2846, 0.0
      %vm3949 = vcmp.ge.f32.partialorder %v2851, 0.0
      %vm3950 = vcmp.ge.f32.partialorder %v2854, 0.0
      %vm3951 = vcmp.ge.f32.partialorder %v2859, 0.0
      %vm3952 = vcmp.ge.f32.partialorder %v2862, 0.0
      %vm3953 = vcmp.ge.f32.partialorder %v2867, 0.0
      %vm3954 = vcmp.ge.f32.partialorder %v2870, 0.0
      %vm3955 = vcmp.ge.f32.partialorder %v2875, 0.0
      %vm3956 = vcmp.ge.f32.partialorder %v2878, 0.0
      %vm3957 = vcmp.ge.f32.partialorder %v2883, 0.0
      %vm3958 = vcmp.ge.f32.partialorder %v2886, 0.0
      %vm3959 = vcmp.ge.f32.partialorder %v2891, 0.0
      %vm3960 = vcmp.ge.f32.partialorder %v2894, 0.0
      %vm3961 = vcmp.ge.f32.partialorder %v2899, 0.0
      %vm3962 = vcmp.ge.f32.partialorder %v2902, 0.0
      %vm3963 = vcmp.ge.f32.partialorder %v2907, 0.0
      %vm3964 = vcmp.ge.f32.partialorder %v2910, 0.0
      %vm3965 = vcmp.ge.f32.partialorder %v2915, 0.0
      %vm3966 = vcmp.ge.f32.partialorder %v2918, 0.0
      %vm3967 = vcmp.ge.f32.partialorder %v2923, 0.0
      %vm3968 = vcmp.ge.f32.partialorder %v2926, 0.0
      %vm3969 = vcmp.ge.f32.partialorder %v2931, 0.0
      %vm3970 = vcmp.ge.f32.partialorder %v2934, 0.0
      %vm3971 = vcmp.ge.f32.partialorder %v2939, 0.0
      %vm3972 = vcmp.ge.f32.partialorder %v2942, 0.0
      %vm3973 = vcmp.ge.f32.partialorder %v2947, 0.0
      %vm3974 = vcmp.ge.f32.partialorder %v2950, 0.0
      %vm3975 = vcmp.ge.f32.partialorder %v2955, 0.0
      %vm3976 = vcmp.ge.f32.partialorder %v2958, 0.0
      %vm3977 = vcmp.ge.f32.partialorder %v2963, 0.0
      %vm3978 = vcmp.ge.f32.partialorder %v2966, 0.0
      %vm3979 = vcmp.ge.f32.partialorder %v2971, 0.0
      %vm3980 = vcmp.ge.f32.partialorder %v2974, 0.0
      %vm3981 = vcmp.ge.f32.partialorder %v2979, 0.0
      %vm3982 = vcmp.ge.f32.partialorder %v2982, 0.0
      %vm3983 = vcmp.ge.f32.partialorder %v2987, 0.0
      %vm3984 = vcmp.ge.f32.partialorder %v2990, 0.0
      %vm3985 = vcmp.ge.f32.partialorder %v2995, 0.0
      %vm3986 = vcmp.ge.f32.partialorder %v2998, 0.0
      %vm3987 = vcmp.ge.f32.partialorder %v3003, 0.0
      %vm3988 = vcmp.ge.f32.partialorder %v3006, 0.0
      %vm3989 = vcmp.ge.f32.partialorder %v3011, 0.0
      %vm3990 = vcmp.ge.f32.partialorder %v3014, 0.0
      %vm3991 = vcmp.ge.f32.partialorder %v3019, 0.0
      %vm3992 = vcmp.ge.f32.partialorder %v3022, 0.0
      %vm3993 = vcmp.ge.f32.partialorder %v3027, 0.0
      %vm3994 = vcmp.ge.f32.partialorder %v3030, 0.0
      %vm3995 = vcmp.ge.f32.partialorder %v3035, 0.0
      %vm3996 = vcmp.ge.f32.partialorder %v3038, 0.0
      %vm3997 = vcmp.ge.f32.partialorder %v3043, 0.0
      %vm3998 = vcmp.ge.f32.partialorder %v3046, 0.0
      %vm3999 = vcmp.ge.f32.partialorder %v3051, 0.0
      %vm4000 = vcmp.ge.f32.partialorder %v3054, 0.0
      %vm4001 = vcmp.ge.f32.partialorder %v3059, 0.0
      %vm4002 = vcmp.ge.f32.partialorder %v3062, 0.0
      %vm4003 = vcmp.ge.f32.partialorder %v3067, 0.0
      %vm4004 = vcmp.ge.f32.partialorder %v3070, 0.0
      %vm4005 = vcmp.ge.f32.partialorder %v3075, 0.0
      %vm4006 = vcmp.ge.f32.partialorder %v3078, 0.0
      %vm4007 = vcmp.ge.f32.partialorder %v3083, 0.0
      %vm4008 = vcmp.ge.f32.partialorder %v3086, 0.0
      %vm4009 = vcmp.ge.f32.partialorder %v3091, 0.0
      %vm4010 = vcmp.ge.f32.partialorder %v3094, 0.0
      %vm4011 = vcmp.ge.f32.partialorder %v3099, 0.0
      %vm4012 = vcmp.ge.f32.partialorder %v3102, 0.0
      %vm4013 = vcmp.ge.f32.partialorder %v3107, 0.0
      %vm4014 = vcmp.ge.f32.partialorder %v3110, 0.0
      %vm4015 = vcmp.ge.f32.partialorder %v3115, 0.0
      %vm4016 = vcmp.ge.f32.partialorder %v3118, 0.0
      %vm4017 = vcmp.ge.f32.partialorder %v3123, 0.0
      %vm4018 = vcmp.ge.f32.partialorder %v3126, 0.0
      %vm4019 = vcmp.ge.f32.partialorder %v3131, 0.0
      %vm4020 = vcmp.ge.f32.partialorder %v3134, 0.0
      %vm4021 = vcmp.ge.f32.partialorder %v3139, 0.0
      %vm4022 = vcmp.ge.f32.partialorder %v3142, 0.0
      %vm4023 = vcmp.ge.f32.partialorder %v3147, 0.0
      %vm4024 = vcmp.ge.f32.partialorder %v3150, 0.0
      %vm4025 = vcmp.ge.f32.partialorder %v3155, 0.0
      %vm4026 = vcmp.ge.f32.partialorder %v3158, 0.0
      %vm4027 = vcmp.ge.f32.partialorder %v3163, 0.0
      %vm4028 = vcmp.ge.f32.partialorder %v3166, 0.0
      %vm4029 = vcmp.ge.f32.partialorder %v3171, 0.0
      %vm4030 = vcmp.ge.f32.partialorder %v3174, 0.0
      %vm4031 = vcmp.ge.f32.partialorder %v3179, 0.0
      %vm4032 = vcmp.ge.f32.partialorder %v3182, 0.0
      %vm4033 = vcmp.ge.f32.partialorder %v3187, 0.0
      %vm4034 = vcmp.ge.f32.partialorder %v3190, 0.0
      %vm4035 = vcmp.ge.f32.partialorder %v3195, 0.0
      %vm4036 = vcmp.ge.f32.partialorder %v3198, 0.0
      %vm4037 = vcmp.ge.f32.partialorder %v3203, 0.0
      %vm4038 = vcmp.ge.f32.partialorder %v3206, 0.0
      %vm4039 = vcmp.ge.f32.partialorder %v3211, 0.0
      %vm4040 = vcmp.ge.f32.partialorder %v3214, 0.0
      %vm4041 = vcmp.ge.f32.partialorder %v3219, 0.0
      %vm4042 = vcmp.ge.f32.partialorder %v3222, 0.0
      %vm4043 = vcmp.ge.f32.partialorder %v3227, 0.0
      %vm4044 = vcmp.ge.f32.partialorder %v3230, 0.0
      %vm4045 = vcmp.ge.f32.partialorder %v3235, 0.0
      %vm4046 = vcmp.ge.f32.partialorder %v3238, 0.0
      %vm4047 = vcmp.ge.f32.partialorder %v3243, 0.0
      %vm4048 = vcmp.ge.f32.partialorder %v3246, 0.0
      %vm4049 = vcmp.ge.f32.partialorder %v3251, 0.0
      %vm4050 = vcmp.ge.f32.partialorder %v3254, 0.0
      %vm4051 = vcmp.ge.f32.partialorder %v3259, 0.0
      %vm4052 = vcmp.ge.f32.partialorder %v3262, 0.0
      %vm4053 = vcmp.ge.f32.partialorder %v3267, 0.0
      %vm4054 = vcmp.ge.f32.partialorder %v3270, 0.0
      %vm4055 = vcmp.ge.f32.partialorder %v3275, 0.0
      %vm4056 = vcmp.ge.f32.partialorder %v3278, 0.0
      %vm4057 = vcmp.ge.f32.partialorder %v3283, 0.0
      %vm4058 = vcmp.ge.f32.partialorder %v3286, 0.0
      %vm4059 = vcmp.ge.f32.partialorder %v3291, 0.0
      %vm4060 = vcmp.ge.f32.partialorder %v3294, 0.0
      %vm4061 = vcmp.ge.f32.partialorder %v3299, 0.0
      %vm4062 = vcmp.ge.f32.partialorder %v3302, 0.0
      %vm4063 = vcmp.ge.f32.partialorder %v3307, 0.0
      %vm4064 = vcmp.ge.f32.partialorder %v3310, 0.0
      %vm4065 = vcmp.ge.f32.partialorder %v3315, 0.0
      %vm4066 = vcmp.ge.f32.partialorder %v3318, 0.0
      %vm4067 = vcmp.ge.f32.partialorder %v3323, 0.0
      %vm4068 = vcmp.ge.f32.partialorder %v3326, 0.0
      %vm4069 = vcmp.ge.f32.partialorder %v3331, 0.0
      %vm4070 = vcmp.ge.f32.partialorder %v3334, 0.0
      %vm4071 = vcmp.ge.f32.partialorder %v3339, 0.0
      %vm4072 = vcmp.ge.f32.partialorder %v3342, 0.0
      %vm4073 = vcmp.ge.f32.partialorder %v3347, 0.0
      %vm4074 = vcmp.ge.f32.partialorder %v3350, 0.0
      %vm4075 = vcmp.ge.f32.partialorder %v3355, 0.0
      %vm4076 = vcmp.ge.f32.partialorder %v3358, 0.0
      %vm4077 = vcmp.ge.f32.partialorder %v3363, 0.0
      %vm4078 = vcmp.ge.f32.partialorder %v3366, 0.0
      %vm4079 = vcmp.ge.f32.partialorder %v3371, 0.0
      %vm4080 = vcmp.ge.f32.partialorder %v3374, 0.0
      %vm4081 = vcmp.ge.f32.partialorder %v3379, 0.0
      %vm4082 = vcmp.ge.f32.partialorder %v3382, 0.0
      %vm4083 = vcmp.ge.f32.partialorder %v3387, 0.0
      %vm4084 = vcmp.ge.f32.partialorder %v3390, 0.0
      %vm4085 = vcmp.ge.f32.partialorder %v3395, 0.0
      %vm4086 = vcmp.ge.f32.partialorder %v3398, 0.0
      %vm4087 = vcmp.ge.f32.partialorder %v3403, 0.0
      %vm4088 = vcmp.ge.f32.partialorder %v3406, 0.0
      %vm4089 = vcmp.ge.f32.partialorder %v3411, 0.0
      %vm4090 = vcmp.ge.f32.partialorder %v3414, 0.0
      %vm4091 = vcmp.ge.f32.partialorder %v3419, 0.0
      %vm4092 = vcmp.ge.f32.partialorder %v3422, 0.0
      %vm4093 = vcmp.ge.f32.partialorder %v3427, 0.0
      %vm4094 = vcmp.ge.f32.partialorder %v3430, 0.0
      %vm4095 = vcmp.ge.f32.partialorder %v3435, 0.0
      %vm4096 = vcmp.ge.f32.partialorder %v3438, 0.0
      %vm4097 = vcmp.ge.f32.partialorder %v3443, 0.0
      %vm4098 = vcmp.ge.f32.partialorder %v3446, 0.0
      %vm4099 = vcmp.ge.f32.partialorder %v3451, 0.0
      %vm4100 = vcmp.ge.f32.partialorder %v3454, 0.0
      %vm4101 = vcmp.ge.f32.partialorder %v3459, 0.0
      %vm4102 = vcmp.ge.f32.partialorder %v3462, 0.0
      %vm4103 = vcmp.ge.f32.partialorder %v3467, 0.0
      %vm4104 = vcmp.ge.f32.partialorder %v3470, 0.0
      %vm4105 = vcmp.ge.f32.partialorder %v3475, 0.0
      %vm4106 = vcmp.ge.f32.partialorder %v3478, 0.0
      %vm4107 = vcmp.ge.f32.partialorder %v3483, 0.0
      %vm4108 = vcmp.ge.f32.partialorder %v3486, 0.0
      %vm4109 = vcmp.ge.f32.partialorder %v3491, 0.0
      %vm4110 = vcmp.ge.f32.partialorder %v3494, 0.0
      %vm4111 = vcmp.ge.f32.partialorder %v3499, 0.0
      %vm4112 = vcmp.ge.f32.partialorder %v3502, 0.0
      %vm4113 = vcmp.ge.f32.partialorder %v3507, 0.0
      %vm4114 = vcmp.ge.f32.partialorder %v3510, 0.0
      %vm4115 = vcmp.ge.f32.partialorder %v3515, 0.0
      %vm4116 = vcmp.ge.f32.partialorder %v3518, 0.0
      %vm4117 = vcmp.ge.f32.partialorder %v3523, 0.0
      %vm4118 = vcmp.ge.f32.partialorder %v3526, 0.0
      %vm4119 = vcmp.ge.f32.partialorder %v3531, 0.0
      %vm4120 = vcmp.ge.f32.partialorder %v3534, 0.0
      %vm4121 = vcmp.ge.f32.partialorder %v3539, 0.0
      %vm4122 = vcmp.ge.f32.partialorder %v3542, 0.0
      %vm4123 = vcmp.ge.f32.partialorder %v3547, 0.0
      %vm4124 = vcmp.ge.f32.partialorder %v3550, 0.0
      %vm4125 = vcmp.ge.f32.partialorder %v3555, 0.0
      %vm4126 = vcmp.ge.f32.partialorder %v3558, 0.0
      %vm4127 = vcmp.ge.f32.partialorder %v3563, 0.0
      %vm4128 = vcmp.ge.f32.partialorder %v3566, 0.0
      %vm4129 = vcmp.ge.f32.partialorder %v3571, 0.0
      %vm4130 = vcmp.ge.f32.partialorder %v3574, 0.0
      %vm4131 = vcmp.ge.f32.partialorder %v3579, 0.0
      %vm4132 = vcmp.ge.f32.partialorder %v3582, 0.0
      %vm4133 = vcmp.ge.f32.partialorder %v3587, 0.0
      %vm4134 = vcmp.ge.f32.partialorder %v3590, 0.0
      %vm4135 = vcmp.ge.f32.partialorder %v3595, 0.0
      %vm4136 = vcmp.ge.f32.partialorder %v3598, 0.0
      %vm4137 = vcmp.ge.f32.partialorder %v3603, 0.0
      %vm4138 = vcmp.ge.f32.partialorder %v3606, 0.0
      %vm4139 = vcmp.ge.f32.partialorder %v3611, 0.0
      %vm4140 = vcmp.ge.f32.partialorder %v3614, 0.0
      %vm4141 = vcmp.ge.f32.partialorder %v3619, 0.0
      %vm4142 = vcmp.ge.f32.partialorder %v3622, 0.0
      %vm4143 = vcmp.ge.f32.partialorder %v3627, 0.0
      %vm4144 = vcmp.ge.f32.partialorder %v3630, 0.0
      %vm4145 = vcmp.ge.f32.partialorder %v3635, 0.0
      %vm4146 = vcmp.ge.f32.partialorder %v3638, 0.0
      %vm4147 = vcmp.ge.f32.partialorder %v3643, 0.0
      %vm4148 = vcmp.ge.f32.partialorder %v3646, 0.0
      %vm4149 = vcmp.ge.f32.partialorder %v3651, 0.0
      %vm4150 = vcmp.ge.f32.partialorder %v3654, 0.0
      %vm4151 = vcmp.ge.f32.partialorder %v3659, 0.0
      %vm4152 = vcmp.ge.f32.partialorder %v3662, 0.0
      %vm4153 = vcmp.ge.f32.partialorder %v3667, 0.0
      %vm4154 = vcmp.ge.f32.partialorder %v3670, 0.0
      %vm4155 = vcmp.ge.f32.partialorder %v3675, 0.0
      %vm4156 = vcmp.ge.f32.partialorder %v3678, 0.0
      %vm4157 = vcmp.ge.f32.partialorder %v3683, 0.0
      %vm4158 = vcmp.ge.f32.partialorder %v3686, 0.0
      %vm4159 = vcmp.ge.f32.partialorder %v3691, 0.0
      %vm4160 = vcmp.ge.f32.partialorder %v3694, 0.0
      %vm4161 = vcmp.ge.f32.partialorder %v3699, 0.0
      %vm4162 = vcmp.ge.f32.partialorder %v3702, 0.0
      %vm4163 = vcmp.ge.f32.partialorder %v3707, 0.0
      %vm4164 = vcmp.ge.f32.partialorder %v3710, 0.0
      %vm4165 = vcmp.ge.f32.partialorder %v3715, 0.0
      %vm4166 = vcmp.ge.f32.partialorder %v3718, 0.0
      %vm4167 = vcmp.ge.f32.partialorder %v3723, 0.0
      %vm4168 = vcmp.ge.f32.partialorder %v3726, 0.0
      %vm4169 = vcmp.ge.f32.partialorder %v3731, 0.0
      %vm4170 = vcmp.ge.f32.partialorder %v3734, 0.0
      %vm4171 = vcmp.ge.f32.partialorder %v3739, 0.0
      %vm4172 = vcmp.ge.f32.partialorder %v3742, 0.0
      %vm4173 = vcmp.ge.f32.partialorder %v3747, 0.0
      %vm4174 = vcmp.ge.f32.partialorder %v3750, 0.0
      %vm4175 = vcmp.ge.f32.partialorder %v3755, 0.0
      %vm4176 = vcmp.ge.f32.partialorder %v3758, 0.0
      %vm4177 = vcmp.ge.f32.partialorder %v3763, 0.0
      %vm4178 = vcmp.ge.f32.partialorder %v3766, 0.0
      %vm4179 = vcmp.ge.f32.partialorder %v3771, 0.0
      %vm4180 = vcmp.ge.f32.partialorder %v3774, 0.0
      %vm4181 = vcmp.ge.f32.partialorder %v3779, 0.0
      %vm4182 = vcmp.ge.f32.partialorder %v3782, 0.0
      %vm4183 = vcmp.ge.f32.partialorder %v3787, 0.0
      %vm4184 = vcmp.ge.f32.partialorder %v3790, 0.0
      %v4185 = vld [vmem:[%s3] sm:$0x1]
      %v4187 = vlaneseq
      %v4188 = vshrl.u32 %v4187, 7
      %v4189 = vsub.s32 0, %v4188
      %v4190 = vrot.slane %v4185, %v4189
      %v4192 = vmul.f32 %v4190, %v2227
      %v4193 = vmul.f32 %v4190, %v2230
      %v4194 = vmul.f32 %v4190, %v2235
      %v4195 = vmul.f32 %v4190, %v2238
      %v4196 = vmul.f32 %v4190, %v2243
      %v4197 = vmul.f32 %v4190, %v2246
      %v4198 = vmul.f32 %v4190, %v2251
      %v4199 = vmul.f32 %v4190, %v2254
      %v4200 = vmul.f32 %v4190, %v2259
      %v4201 = vmul.f32 %v4190, %v2262
      %v4202 = vmul.f32 %v4190, %v2267
      %v4203 = vmul.f32 %v4190, %v2270
      %v4204 = vmul.f32 %v4190, %v2275
      %v4205 = vmul.f32 %v4190, %v2278
      %v4206 = vmul.f32 %v4190, %v2283
      %v4207 = vmul.f32 %v4190, %v2286
      %v4208 = vmul.f32 %v4190, %v2291
      %v4209 = vmul.f32 %v4190, %v2294
      %v4210 = vmul.f32 %v4190, %v2299
      %v4211 = vmul.f32 %v4190, %v2302
      %v4212 = vmul.f32 %v4190, %v2307
      %v4213 = vmul.f32 %v4190, %v2310
      %v4214 = vmul.f32 %v4190, %v2315
      %v4215 = vmul.f32 %v4190, %v2318
      %v4216 = vmul.f32 %v4190, %v2323
      %v4217 = vmul.f32 %v4190, %v2326
      %v4218 = vmul.f32 %v4190, %v2331
      %v4219 = vmul.f32 %v4190, %v2334
      %v4220 = vmul.f32 %v4190, %v2339
      %v4221 = vmul.f32 %v4190, %v2342
      %v4222 = vmul.f32 %v4190, %v2347
      %v4223 = vmul.f32 %v4190, %v2350
      %v4224 = vmul.f32 %v4190, %v2355
      %v4225 = vmul.f32 %v4190, %v2358
      %v4226 = vmul.f32 %v4190, %v2363
      %v4227 = vmul.f32 %v4190, %v2366
      %v4228 = vmul.f32 %v4190, %v2371
      %v4229 = vmul.f32 %v4190, %v2374
      %v4230 = vmul.f32 %v4190, %v2379
      %v4231 = vmul.f32 %v4190, %v2382
      %v4232 = vmul.f32 %v4190, %v2387
      %v4233 = vmul.f32 %v4190, %v2390
      %v4234 = vmul.f32 %v4190, %v2395
      %v4235 = vmul.f32 %v4190, %v2398
      %v4236 = vmul.f32 %v4190, %v2403
      %v4237 = vmul.f32 %v4190, %v2406
      %v4238 = vmul.f32 %v4190, %v2411
      %v4239 = vmul.f32 %v4190, %v2414
      %v4240 = vmul.f32 %v4190, %v2419
      %v4241 = vmul.f32 %v4190, %v2422
      %v4242 = vmul.f32 %v4190, %v2427
      %v4243 = vmul.f32 %v4190, %v2430
      %v4244 = vmul.f32 %v4190, %v2435
      %v4245 = vmul.f32 %v4190, %v2438
      %v4246 = vmul.f32 %v4190, %v2443
      %v4247 = vmul.f32 %v4190, %v2446
      %v4248 = vmul.f32 %v4190, %v2451
      %v4249 = vmul.f32 %v4190, %v2454
      %v4250 = vmul.f32 %v4190, %v2459
      %v4251 = vmul.f32 %v4190, %v2462
      %v4252 = vmul.f32 %v4190, %v2467
      %v4253 = vmul.f32 %v4190, %v2470
      %v4254 = vmul.f32 %v4190, %v2475
      %v4255 = vmul.f32 %v4190, %v2478
      %v4256 = vmul.f32 %v4190, %v2483
      %v4257 = vmul.f32 %v4190, %v2486
      %v4258 = vmul.f32 %v4190, %v2491
      %v4259 = vmul.f32 %v4190, %v2494
      %v4260 = vmul.f32 %v4190, %v2499
      %v4261 = vmul.f32 %v4190, %v2502
      %v4262 = vmul.f32 %v4190, %v2507
      %v4263 = vmul.f32 %v4190, %v2510
      %v4264 = vmul.f32 %v4190, %v2515
      %v4265 = vmul.f32 %v4190, %v2518
      %v4266 = vmul.f32 %v4190, %v2523
      %v4267 = vmul.f32 %v4190, %v2526
      %v4268 = vmul.f32 %v4190, %v2531
      %v4269 = vmul.f32 %v4190, %v2534
      %v4270 = vmul.f32 %v4190, %v2539
      %v4271 = vmul.f32 %v4190, %v2542
      %v4272 = vmul.f32 %v4190, %v2547
      %v4273 = vmul.f32 %v4190, %v2550
      %v4274 = vmul.f32 %v4190, %v2555
      %v4275 = vmul.f32 %v4190, %v2558
      %v4276 = vmul.f32 %v4190, %v2563
      %v4277 = vmul.f32 %v4190, %v2566
      %v4278 = vmul.f32 %v4190, %v2571
      %v4279 = vmul.f32 %v4190, %v2574
      %v4280 = vmul.f32 %v4190, %v2579
      %v4281 = vmul.f32 %v4190, %v2582
      %v4282 = vmul.f32 %v4190, %v2587
      %v4283 = vmul.f32 %v4190, %v2590
      %v4284 = vmul.f32 %v4190, %v2595
      %v4285 = vmul.f32 %v4190, %v2598
      %v4286 = vmul.f32 %v4190, %v2603
      %v4287 = vmul.f32 %v4190, %v2606
      %v4288 = vmul.f32 %v4190, %v2611
      %v4289 = vmul.f32 %v4190, %v2614
      %v4290 = vmul.f32 %v4190, %v2619
      %v4291 = vmul.f32 %v4190, %v2622
      %v4292 = vmul.f32 %v4190, %v2627
      %v4293 = vmul.f32 %v4190, %v2630
      %v4294 = vmul.f32 %v4190, %v2635
      %v4295 = vmul.f32 %v4190, %v2638
      %v4296 = vmul.f32 %v4190, %v2643
      %v4297 = vmul.f32 %v4190, %v2646
      %v4298 = vmul.f32 %v4190, %v2651
      %v4299 = vmul.f32 %v4190, %v2654
      %v4300 = vmul.f32 %v4190, %v2659
      %v4301 = vmul.f32 %v4190, %v2662
      %v4302 = vmul.f32 %v4190, %v2667
      %v4303 = vmul.f32 %v4190, %v2670
      %v4304 = vmul.f32 %v4190, %v2675
      %v4305 = vmul.f32 %v4190, %v2678
      %v4306 = vmul.f32 %v4190, %v2683
      %v4307 = vmul.f32 %v4190, %v2686
      %v4308 = vmul.f32 %v4190, %v2691
      %v4309 = vmul.f32 %v4190, %v2694
      %v4310 = vmul.f32 %v4190, %v2699
      %v4311 = vmul.f32 %v4190, %v2702
      %v4312 = vmul.f32 %v4190, %v2707
      %v4313 = vmul.f32 %v4190, %v2710
      %v4314 = vmul.f32 %v4190, %v2715
      %v4315 = vmul.f32 %v4190, %v2718
      %v4316 = vmul.f32 %v4190, %v2723
      %v4317 = vmul.f32 %v4190, %v2726
      %v4318 = vmul.f32 %v4190, %v2731
      %v4319 = vmul.f32 %v4190, %v2734
      %v4320 = vmul.f32 %v4190, %v2739
      %v4321 = vmul.f32 %v4190, %v2742
      %v4322 = vmul.f32 %v4190, %v2747
      %v4323 = vmul.f32 %v4190, %v2750
      %v4324 = vmul.f32 %v4190, %v2755
      %v4325 = vmul.f32 %v4190, %v2758
      %v4326 = vmul.f32 %v4190, %v2763
      %v4327 = vmul.f32 %v4190, %v2766
      %v4328 = vmul.f32 %v4190, %v2771
      %v4329 = vmul.f32 %v4190, %v2774
      %v4330 = vmul.f32 %v4190, %v2779
      %v4331 = vmul.f32 %v4190, %v2782
      %v4332 = vmul.f32 %v4190, %v2787
      %v4333 = vmul.f32 %v4190, %v2790
      %v4334 = vmul.f32 %v4190, %v2795
      %v4335 = vmul.f32 %v4190, %v2798
      %v4336 = vmul.f32 %v4190, %v2803
      %v4337 = vmul.f32 %v4190, %v2806
      %v4338 = vmul.f32 %v4190, %v2811
      %v4339 = vmul.f32 %v4190, %v2814
      %v4340 = vmul.f32 %v4190, %v2819
      %v4341 = vmul.f32 %v4190, %v2822
      %v4342 = vmul.f32 %v4190, %v2827
      %v4343 = vmul.f32 %v4190, %v2830
      %v4344 = vmul.f32 %v4190, %v2835
      %v4345 = vmul.f32 %v4190, %v2838
      %v4346 = vmul.f32 %v4190, %v2843
      %v4347 = vmul.f32 %v4190, %v2846
      %v4348 = vmul.f32 %v4190, %v2851
      %v4349 = vmul.f32 %v4190, %v2854
      %v4350 = vmul.f32 %v4190, %v2859
      %v4351 = vmul.f32 %v4190, %v2862
      %v4352 = vmul.f32 %v4190, %v2867
      %v4353 = vmul.f32 %v4190, %v2870
      %v4354 = vmul.f32 %v4190, %v2875
      %v4355 = vmul.f32 %v4190, %v2878
      %v4356 = vmul.f32 %v4190, %v2883
      %v4357 = vmul.f32 %v4190, %v2886
      %v4358 = vmul.f32 %v4190, %v2891
      %v4359 = vmul.f32 %v4190, %v2894
      %v4360 = vmul.f32 %v4190, %v2899
      %v4361 = vmul.f32 %v4190, %v2902
      %v4362 = vmul.f32 %v4190, %v2907
      %v4363 = vmul.f32 %v4190, %v2910
      %v4364 = vmul.f32 %v4190, %v2915
      %v4365 = vmul.f32 %v4190, %v2918
      %v4366 = vmul.f32 %v4190, %v2923
      %v4367 = vmul.f32 %v4190, %v2926
      %v4368 = vmul.f32 %v4190, %v2931
      %v4369 = vmul.f32 %v4190, %v2934
      %v4370 = vmul.f32 %v4190, %v2939
      %v4371 = vmul.f32 %v4190, %v2942
      %v4372 = vmul.f32 %v4190, %v2947
      %v4373 = vmul.f32 %v4190, %v2950
      %v4374 = vmul.f32 %v4190, %v2955
      %v4375 = vmul.f32 %v4190, %v2958
      %v4376 = vmul.f32 %v4190, %v2963
      %v4377 = vmul.f32 %v4190, %v2966
      %v4378 = vmul.f32 %v4190, %v2971
      %v4379 = vmul.f32 %v4190, %v2974
      %v4380 = vmul.f32 %v4190, %v2979
      %v4381 = vmul.f32 %v4190, %v2982
      %v4382 = vmul.f32 %v4190, %v2987
      %v4383 = vmul.f32 %v4190, %v2990
      %v4384 = vmul.f32 %v4190, %v2995
      %v4385 = vmul.f32 %v4190, %v2998
      %v4386 = vmul.f32 %v4190, %v3003
      %v4387 = vmul.f32 %v4190, %v3006
      %v4388 = vmul.f32 %v4190, %v3011
      %v4389 = vmul.f32 %v4190, %v3014
      %v4390 = vmul.f32 %v4190, %v3019
      %v4391 = vmul.f32 %v4190, %v3022
      %v4392 = vmul.f32 %v4190, %v3027
      %v4393 = vmul.f32 %v4190, %v3030
      %v4394 = vmul.f32 %v4190, %v3035
      %v4395 = vmul.f32 %v4190, %v3038
      %v4396 = vmul.f32 %v4190, %v3043
      %v4397 = vmul.f32 %v4190, %v3046
      %v4398 = vmul.f32 %v4190, %v3051
      %v4399 = vmul.f32 %v4190, %v3054
      %v4400 = vmul.f32 %v4190, %v3059
      %v4401 = vmul.f32 %v4190, %v3062
      %v4402 = vmul.f32 %v4190, %v3067
      %v4403 = vmul.f32 %v4190, %v3070
      %v4404 = vmul.f32 %v4190, %v3075
      %v4405 = vmul.f32 %v4190, %v3078
      %v4406 = vmul.f32 %v4190, %v3083
      %v4407 = vmul.f32 %v4190, %v3086
      %v4408 = vmul.f32 %v4190, %v3091
      %v4409 = vmul.f32 %v4190, %v3094
      %v4410 = vmul.f32 %v4190, %v3099
      %v4411 = vmul.f32 %v4190, %v3102
      %v4412 = vmul.f32 %v4190, %v3107
      %v4413 = vmul.f32 %v4190, %v3110
      %v4414 = vmul.f32 %v4190, %v3115
      %v4415 = vmul.f32 %v4190, %v3118
      %v4416 = vmul.f32 %v4190, %v3123
      %v4417 = vmul.f32 %v4190, %v3126
      %v4418 = vmul.f32 %v4190, %v3131
      %v4419 = vmul.f32 %v4190, %v3134
      %v4420 = vmul.f32 %v4190, %v3139
      %v4421 = vmul.f32 %v4190, %v3142
      %v4422 = vmul.f32 %v4190, %v3147
      %v4423 = vmul.f32 %v4190, %v3150
      %v4424 = vmul.f32 %v4190, %v3155
      %v4425 = vmul.f32 %v4190, %v3158
      %v4426 = vmul.f32 %v4190, %v3163
      %v4427 = vmul.f32 %v4190, %v3166
      %v4428 = vmul.f32 %v4190, %v3171
      %v4429 = vmul.f32 %v4190, %v3174
      %v4430 = vmul.f32 %v4190, %v3179
      %v4431 = vmul.f32 %v4190, %v3182
      %v4432 = vmul.f32 %v4190, %v3187
      %v4433 = vmul.f32 %v4190, %v3190
      %v4434 = vmul.f32 %v4190, %v3195
      %v4435 = vmul.f32 %v4190, %v3198
      %v4436 = vmul.f32 %v4190, %v3203
      %v4437 = vmul.f32 %v4190, %v3206
      %v4438 = vmul.f32 %v4190, %v3211
      %v4439 = vmul.f32 %v4190, %v3214
      %v4440 = vmul.f32 %v4190, %v3219
      %v4441 = vmul.f32 %v4190, %v3222
      %v4442 = vmul.f32 %v4190, %v3227
      %v4443 = vmul.f32 %v4190, %v3230
      %v4444 = vmul.f32 %v4190, %v3235
      %v4445 = vmul.f32 %v4190, %v3238
      %v4446 = vmul.f32 %v4190, %v3243
      %v4447 = vmul.f32 %v4190, %v3246
      %v4448 = vmul.f32 %v4190, %v3251
      %v4449 = vmul.f32 %v4190, %v3254
      %v4450 = vmul.f32 %v4190, %v3259
      %v4451 = vmul.f32 %v4190, %v3262
      %v4452 = vmul.f32 %v4190, %v3267
      %v4453 = vmul.f32 %v4190, %v3270
      %v4454 = vmul.f32 %v4190, %v3275
      %v4455 = vmul.f32 %v4190, %v3278
      %v4456 = vmul.f32 %v4190, %v3283
      %v4457 = vmul.f32 %v4190, %v3286
      %v4458 = vmul.f32 %v4190, %v3291
      %v4459 = vmul.f32 %v4190, %v3294
      %v4460 = vmul.f32 %v4190, %v3299
      %v4461 = vmul.f32 %v4190, %v3302
      %v4462 = vmul.f32 %v4190, %v3307
      %v4463 = vmul.f32 %v4190, %v3310
      %v4464 = vmul.f32 %v4190, %v3315
      %v4465 = vmul.f32 %v4190, %v3318
      %v4466 = vmul.f32 %v4190, %v3323
      %v4467 = vmul.f32 %v4190, %v3326
      %v4468 = vmul.f32 %v4190, %v3331
      %v4469 = vmul.f32 %v4190, %v3334
      %v4470 = vmul.f32 %v4190, %v3339
      %v4471 = vmul.f32 %v4190, %v3342
      %v4472 = vmul.f32 %v4190, %v3347
      %v4473 = vmul.f32 %v4190, %v3350
      %v4474 = vmul.f32 %v4190, %v3355
      %v4475 = vmul.f32 %v4190, %v3358
      %v4476 = vmul.f32 %v4190, %v3363
      %v4477 = vmul.f32 %v4190, %v3366
      %v4478 = vmul.f32 %v4190, %v3371
      %v4479 = vmul.f32 %v4190, %v3374
      %v4480 = vmul.f32 %v4190, %v3379
      %v4481 = vmul.f32 %v4190, %v3382
      %v4482 = vmul.f32 %v4190, %v3387
      %v4483 = vmul.f32 %v4190, %v3390
      %v4484 = vmul.f32 %v4190, %v3395
      %v4485 = vmul.f32 %v4190, %v3398
      %v4486 = vmul.f32 %v4190, %v3403
      %v4487 = vmul.f32 %v4190, %v3406
      %v4488 = vmul.f32 %v4190, %v3411
      %v4489 = vmul.f32 %v4190, %v3414
      %v4490 = vmul.f32 %v4190, %v3419
      %v4491 = vmul.f32 %v4190, %v3422
      %v4492 = vmul.f32 %v4190, %v3427
      %v4493 = vmul.f32 %v4190, %v3430
      %v4494 = vmul.f32 %v4190, %v3435
      %v4495 = vmul.f32 %v4190, %v3438
      %v4496 = vmul.f32 %v4190, %v3443
      %v4497 = vmul.f32 %v4190, %v3446
      %v4498 = vmul.f32 %v4190, %v3451
      %v4499 = vmul.f32 %v4190, %v3454
      %v4500 = vmul.f32 %v4190, %v3459
      %v4501 = vmul.f32 %v4190, %v3462
      %v4502 = vmul.f32 %v4190, %v3467
      %v4503 = vmul.f32 %v4190, %v3470
      %v4504 = vmul.f32 %v4190, %v3475
      %v4505 = vmul.f32 %v4190, %v3478
      %v4506 = vmul.f32 %v4190, %v3483
      %v4507 = vmul.f32 %v4190, %v3486
      %v4508 = vmul.f32 %v4190, %v3491
      %v4509 = vmul.f32 %v4190, %v3494
      %v4510 = vmul.f32 %v4190, %v3499
      %v4511 = vmul.f32 %v4190, %v3502
      %v4512 = vmul.f32 %v4190, %v3507
      %v4513 = vmul.f32 %v4190, %v3510
      %v4514 = vmul.f32 %v4190, %v3515
      %v4515 = vmul.f32 %v4190, %v3518
      %v4516 = vmul.f32 %v4190, %v3523
      %v4517 = vmul.f32 %v4190, %v3526
      %v4518 = vmul.f32 %v4190, %v3531
      %v4519 = vmul.f32 %v4190, %v3534
      %v4520 = vmul.f32 %v4190, %v3539
      %v4521 = vmul.f32 %v4190, %v3542
      %v4522 = vmul.f32 %v4190, %v3547
      %v4523 = vmul.f32 %v4190, %v3550
      %v4524 = vmul.f32 %v4190, %v3555
      %v4525 = vmul.f32 %v4190, %v3558
      %v4526 = vmul.f32 %v4190, %v3563
      %v4527 = vmul.f32 %v4190, %v3566
      %v4528 = vmul.f32 %v4190, %v3571
      %v4529 = vmul.f32 %v4190, %v3574
      %v4530 = vmul.f32 %v4190, %v3579
      %v4531 = vmul.f32 %v4190, %v3582
      %v4532 = vmul.f32 %v4190, %v3587
      %v4533 = vmul.f32 %v4190, %v3590
      %v4534 = vmul.f32 %v4190, %v3595
      %v4535 = vmul.f32 %v4190, %v3598
      %v4536 = vmul.f32 %v4190, %v3603
      %v4537 = vmul.f32 %v4190, %v3606
      %v4538 = vmul.f32 %v4190, %v3611
      %v4539 = vmul.f32 %v4190, %v3614
      %v4540 = vmul.f32 %v4190, %v3619
      %v4541 = vmul.f32 %v4190, %v3622
      %v4542 = vmul.f32 %v4190, %v3627
      %v4543 = vmul.f32 %v4190, %v3630
      %v4544 = vmul.f32 %v4190, %v3635
      %v4545 = vmul.f32 %v4190, %v3638
      %v4546 = vmul.f32 %v4190, %v3643
      %v4547 = vmul.f32 %v4190, %v3646
      %v4548 = vmul.f32 %v4190, %v3651
      %v4549 = vmul.f32 %v4190, %v3654
      %v4550 = vmul.f32 %v4190, %v3659
      %v4551 = vmul.f32 %v4190, %v3662
      %v4552 = vmul.f32 %v4190, %v3667
      %v4553 = vmul.f32 %v4190, %v3670
      %v4554 = vmul.f32 %v4190, %v3675
      %v4555 = vmul.f32 %v4190, %v3678
      %v4556 = vmul.f32 %v4190, %v3683
      %v4557 = vmul.f32 %v4190, %v3686
      %v4558 = vmul.f32 %v4190, %v3691
      %v4559 = vmul.f32 %v4190, %v3694
      %v4560 = vmul.f32 %v4190, %v3699
      %v4561 = vmul.f32 %v4190, %v3702
      %v4562 = vmul.f32 %v4190, %v3707
      %v4563 = vmul.f32 %v4190, %v3710
      %v4564 = vmul.f32 %v4190, %v3715
      %v4565 = vmul.f32 %v4190, %v3718
      %v4566 = vmul.f32 %v4190, %v3723
      %v4567 = vmul.f32 %v4190, %v3726
      %v4568 = vmul.f32 %v4190, %v3731
      %v4569 = vmul.f32 %v4190, %v3734
      %v4570 = vmul.f32 %v4190, %v3739
      %v4571 = vmul.f32 %v4190, %v3742
      %v4572 = vmul.f32 %v4190, %v3747
      %v4573 = vmul.f32 %v4190, %v3750
      %v4574 = vmul.f32 %v4190, %v3755
      %v4575 = vmul.f32 %v4190, %v3758
      %v4576 = vmul.f32 %v4190, %v3763
      %v4577 = vmul.f32 %v4190, %v3766
      %v4578 = vmul.f32 %v4190, %v3771
      %v4579 = vmul.f32 %v4190, %v3774
      %v4580 = vmul.f32 %v4190, %v3779
      %v4581 = vmul.f32 %v4190, %v3782
      %v4582 = vmul.f32 %v4190, %v3787
      %v4583 = vmul.f32 %v4190, %v3790
      %v4584 = vsel %vm3793, %v2227, %v4192
      %v4585 = vsel %vm3794, %v2230, %v4193
      %v4586 = vsel %vm3795, %v2235, %v4194
      %v4587 = vsel %vm3796, %v2238, %v4195
      %v4588 = vsel %vm3797, %v2243, %v4196
      %v4589 = vsel %vm3798, %v2246, %v4197
      %v4590 = vsel %vm3799, %v2251, %v4198
      %v4591 = vsel %vm3800, %v2254, %v4199
      %v4592 = vsel %vm3801, %v2259, %v4200
      %v4593 = vsel %vm3802, %v2262, %v4201
      %v4594 = vsel %vm3803, %v2267, %v4202
      %v4595 = vsel %vm3804, %v2270, %v4203
      %v4596 = vsel %vm3805, %v2275, %v4204
      %v4597 = vsel %vm3806, %v2278, %v4205
      %v4598 = vsel %vm3807, %v2283, %v4206
      %v4599 = vsel %vm3808, %v2286, %v4207
      %v4600 = vsel %vm3809, %v2291, %v4208
      %v4601 = vsel %vm3810, %v2294, %v4209
      %v4602 = vsel %vm3811, %v2299, %v4210
      %v4603 = vsel %vm3812, %v2302, %v4211
      %v4604 = vsel %vm3813, %v2307, %v4212
      %v4605 = vsel %vm3814, %v2310, %v4213
      %v4606 = vsel %vm3815, %v2315, %v4214
      %v4607 = vsel %vm3816, %v2318, %v4215
      %v4608 = vsel %vm3817, %v2323, %v4216
      %v4609 = vsel %vm3818, %v2326, %v4217
      %v4610 = vsel %vm3819, %v2331, %v4218
      %v4611 = vsel %vm3820, %v2334, %v4219
      %v4612 = vsel %vm3821, %v2339, %v4220
      %v4613 = vsel %vm3822, %v2342, %v4221
      %v4614 = vsel %vm3823, %v2347, %v4222
      %v4615 = vsel %vm3824, %v2350, %v4223
      %v4616 = vsel %vm3825, %v2355, %v4224
      %v4617 = vsel %vm3826, %v2358, %v4225
      %v4618 = vsel %vm3827, %v2363, %v4226
      %v4619 = vsel %vm3828, %v2366, %v4227
      %v4620 = vsel %vm3829, %v2371, %v4228
      %v4621 = vsel %vm3830, %v2374, %v4229
      %v4622 = vsel %vm3831, %v2379, %v4230
      %v4623 = vsel %vm3832, %v2382, %v4231
      %v4624 = vsel %vm3833, %v2387, %v4232
      %v4625 = vsel %vm3834, %v2390, %v4233
      %v4626 = vsel %vm3835, %v2395, %v4234
      %v4627 = vsel %vm3836, %v2398, %v4235
      %v4628 = vsel %vm3837, %v2403, %v4236
      %v4629 = vsel %vm3838, %v2406, %v4237
      %v4630 = vsel %vm3839, %v2411, %v4238
      %v4631 = vsel %vm3840, %v2414, %v4239
      %v4632 = vsel %vm3841, %v2419, %v4240
      %v4633 = vsel %vm3842, %v2422, %v4241
      %v4634 = vsel %vm3843, %v2427, %v4242
      %v4635 = vsel %vm3844, %v2430, %v4243
      %v4636 = vsel %vm3845, %v2435, %v4244
      %v4637 = vsel %vm3846, %v2438, %v4245
      %v4638 = vsel %vm3847, %v2443, %v4246
      %v4639 = vsel %vm3848, %v2446, %v4247
      %v4640 = vsel %vm3849, %v2451, %v4248
      %v4641 = vsel %vm3850, %v2454, %v4249
      %v4642 = vsel %vm3851, %v2459, %v4250
      %v4643 = vsel %vm3852, %v2462, %v4251
      %v4644 = vsel %vm3853, %v2467, %v4252
      %v4645 = vsel %vm3854, %v2470, %v4253
      %v4646 = vsel %vm3855, %v2475, %v4254
      %v4647 = vsel %vm3856, %v2478, %v4255
      %v4648 = vsel %vm3857, %v2483, %v4256
      %v4649 = vsel %vm3858, %v2486, %v4257
      %v4650 = vsel %vm3859, %v2491, %v4258
      %v4651 = vsel %vm3860, %v2494, %v4259
      %v4652 = vsel %vm3861, %v2499, %v4260
      %v4653 = vsel %vm3862, %v2502, %v4261
      %v4654 = vsel %vm3863, %v2507, %v4262
      %v4655 = vsel %vm3864, %v2510, %v4263
      %v4656 = vsel %vm3865, %v2515, %v4264
      %v4657 = vsel %vm3866, %v2518, %v4265
      %v4658 = vsel %vm3867, %v2523, %v4266
      %v4659 = vsel %vm3868, %v2526, %v4267
      %v4660 = vsel %vm3869, %v2531, %v4268
      %v4661 = vsel %vm3870, %v2534, %v4269
      %v4662 = vsel %vm3871, %v2539, %v4270
      %v4663 = vsel %vm3872, %v2542, %v4271
      %v4664 = vsel %vm3873, %v2547, %v4272
      %v4665 = vsel %vm3874, %v2550, %v4273
      %v4666 = vsel %vm3875, %v2555, %v4274
      %v4667 = vsel %vm3876, %v2558, %v4275
      %v4668 = vsel %vm3877, %v2563, %v4276
      %v4669 = vsel %vm3878, %v2566, %v4277
      %v4670 = vsel %vm3879, %v2571, %v4278
      %v4671 = vsel %vm3880, %v2574, %v4279
      %v4672 = vsel %vm3881, %v2579, %v4280
      %v4673 = vsel %vm3882, %v2582, %v4281
      %v4674 = vsel %vm3883, %v2587, %v4282
      %v4675 = vsel %vm3884, %v2590, %v4283
      %v4676 = vsel %vm3885, %v2595, %v4284
      %v4677 = vsel %vm3886, %v2598, %v4285
      %v4678 = vsel %vm3887, %v2603, %v4286
      %v4679 = vsel %vm3888, %v2606, %v4287
      %v4680 = vsel %vm3889, %v2611, %v4288
      %v4681 = vsel %vm3890, %v2614, %v4289
      %v4682 = vsel %vm3891, %v2619, %v4290
      %v4683 = vsel %vm3892, %v2622, %v4291
      %v4684 = vsel %vm3893, %v2627, %v4292
      %v4685 = vsel %vm3894, %v2630, %v4293
      %v4686 = vsel %vm3895, %v2635, %v4294
      %v4687 = vsel %vm3896, %v2638, %v4295
      %v4688 = vsel %vm3897, %v2643, %v4296
      %v4689 = vsel %vm3898, %v2646, %v4297
      %v4690 = vsel %vm3899, %v2651, %v4298
      %v4691 = vsel %vm3900, %v2654, %v4299
      %v4692 = vsel %vm3901, %v2659, %v4300
      %v4693 = vsel %vm3902, %v2662, %v4301
      %v4694 = vsel %vm3903, %v2667, %v4302
      %v4695 = vsel %vm3904, %v2670, %v4303
      %v4696 = vsel %vm3905, %v2675, %v4304
      %v4697 = vsel %vm3906, %v2678, %v4305
      %v4698 = vsel %vm3907, %v2683, %v4306
      %v4699 = vsel %vm3908, %v2686, %v4307
      %v4700 = vsel %vm3909, %v2691, %v4308
      %v4701 = vsel %vm3910, %v2694, %v4309
      %v4702 = vsel %vm3911, %v2699, %v4310
      %v4703 = vsel %vm3912, %v2702, %v4311
      %v4704 = vsel %vm3913, %v2707, %v4312
      %v4705 = vsel %vm3914, %v2710, %v4313
      %v4706 = vsel %vm3915, %v2715, %v4314
      %v4707 = vsel %vm3916, %v2718, %v4315
      %v4708 = vsel %vm3917, %v2723, %v4316
      %v4709 = vsel %vm3918, %v2726, %v4317
      %v4710 = vsel %vm3919, %v2731, %v4318
      %v4711 = vsel %vm3920, %v2734, %v4319
      %v4712 = vsel %vm3921, %v2739, %v4320
      %v4713 = vsel %vm3922, %v2742, %v4321
      %v4714 = vsel %vm3923, %v2747, %v4322
      %v4715 = vsel %vm3924, %v2750, %v4323
      %v4716 = vsel %vm3925, %v2755, %v4324
      %v4717 = vsel %vm3926, %v2758, %v4325
      %v4718 = vsel %vm3927, %v2763, %v4326
      %v4719 = vsel %vm3928, %v2766, %v4327
      %v4720 = vsel %vm3929, %v2771, %v4328
      %v4721 = vsel %vm3930, %v2774, %v4329
      %v4722 = vsel %vm3931, %v2779, %v4330
      %v4723 = vsel %vm3932, %v2782, %v4331
      %v4724 = vsel %vm3933, %v2787, %v4332
      %v4725 = vsel %vm3934, %v2790, %v4333
      %v4726 = vsel %vm3935, %v2795, %v4334
      %v4727 = vsel %vm3936, %v2798, %v4335
      %v4728 = vsel %vm3937, %v2803, %v4336
      %v4729 = vsel %vm3938, %v2806, %v4337
      %v4730 = vsel %vm3939, %v2811, %v4338
      %v4731 = vsel %vm3940, %v2814, %v4339
      %v4732 = vsel %vm3941, %v2819, %v4340
      %v4733 = vsel %vm3942, %v2822, %v4341
      %v4734 = vsel %vm3943, %v2827, %v4342
      %v4735 = vsel %vm3944, %v2830, %v4343
      %v4736 = vsel %vm3945, %v2835, %v4344
      %v4737 = vsel %vm3946, %v2838, %v4345
      %v4738 = vsel %vm3947, %v2843, %v4346
      %v4739 = vsel %vm3948, %v2846, %v4347
      %v4740 = vsel %vm3949, %v2851, %v4348
      %v4741 = vsel %vm3950, %v2854, %v4349
      %v4742 = vsel %vm3951, %v2859, %v4350
      %v4743 = vsel %vm3952, %v2862, %v4351
      %v4744 = vsel %vm3953, %v2867, %v4352
      %v4745 = vsel %vm3954, %v2870, %v4353
      %v4746 = vsel %vm3955, %v2875, %v4354
      %v4747 = vsel %vm3956, %v2878, %v4355
      %v4748 = vsel %vm3957, %v2883, %v4356
      %v4749 = vsel %vm3958, %v2886, %v4357
      %v4750 = vsel %vm3959, %v2891, %v4358
      %v4751 = vsel %vm3960, %v2894, %v4359
      %v4752 = vsel %vm3961, %v2899, %v4360
      %v4753 = vsel %vm3962, %v2902, %v4361
      %v4754 = vsel %vm3963, %v2907, %v4362
      %v4755 = vsel %vm3964, %v2910, %v4363
      %v4756 = vsel %vm3965, %v2915, %v4364
      %v4757 = vsel %vm3966, %v2918, %v4365
      %v4758 = vsel %vm3967, %v2923, %v4366
      %v4759 = vsel %vm3968, %v2926, %v4367
      %v4760 = vsel %vm3969, %v2931, %v4368
      %v4761 = vsel %vm3970, %v2934, %v4369
      %v4762 = vsel %vm3971, %v2939, %v4370
      %v4763 = vsel %vm3972, %v2942, %v4371
      %v4764 = vsel %vm3973, %v2947, %v4372
      %v4765 = vsel %vm3974, %v2950, %v4373
      %v4766 = vsel %vm3975, %v2955, %v4374
      %v4767 = vsel %vm3976, %v2958, %v4375
      %v4768 = vsel %vm3977, %v2963, %v4376
      %v4769 = vsel %vm3978, %v2966, %v4377
      %v4770 = vsel %vm3979, %v2971, %v4378
      %v4771 = vsel %vm3980, %v2974, %v4379
      %v4772 = vsel %vm3981, %v2979, %v4380
      %v4773 = vsel %vm3982, %v2982, %v4381
      %v4774 = vsel %vm3983, %v2987, %v4382
      %v4775 = vsel %vm3984, %v2990, %v4383
      %v4776 = vsel %vm3985, %v2995, %v4384
      %v4777 = vsel %vm3986, %v2998, %v4385
      %v4778 = vsel %vm3987, %v3003, %v4386
      %v4779 = vsel %vm3988, %v3006, %v4387
      %v4780 = vsel %vm3989, %v3011, %v4388
      %v4781 = vsel %vm3990, %v3014, %v4389
      %v4782 = vsel %vm3991, %v3019, %v4390
      %v4783 = vsel %vm3992, %v3022, %v4391
      %v4784 = vsel %vm3993, %v3027, %v4392
      %v4785 = vsel %vm3994, %v3030, %v4393
      %v4786 = vsel %vm3995, %v3035, %v4394
      %v4787 = vsel %vm3996, %v3038, %v4395
      %v4788 = vsel %vm3997, %v3043, %v4396
      %v4789 = vsel %vm3998, %v3046, %v4397
      %v4790 = vsel %vm3999, %v3051, %v4398
      %v4791 = vsel %vm4000, %v3054, %v4399
      %v4792 = vsel %vm4001, %v3059, %v4400
      %v4793 = vsel %vm4002, %v3062, %v4401
      %v4794 = vsel %vm4003, %v3067, %v4402
      %v4795 = vsel %vm4004, %v3070, %v4403
      %v4796 = vsel %vm4005, %v3075, %v4404
      %v4797 = vsel %vm4006, %v3078, %v4405
      %v4798 = vsel %vm4007, %v3083, %v4406
      %v4799 = vsel %vm4008, %v3086, %v4407
      %v4800 = vsel %vm4009, %v3091, %v4408
      %v4801 = vsel %vm4010, %v3094, %v4409
      %v4802 = vsel %vm4011, %v3099, %v4410
      %v4803 = vsel %vm4012, %v3102, %v4411
      %v4804 = vsel %vm4013, %v3107, %v4412
      %v4805 = vsel %vm4014, %v3110, %v4413
      %v4806 = vsel %vm4015, %v3115, %v4414
      %v4807 = vsel %vm4016, %v3118, %v4415
      %v4808 = vsel %vm4017, %v3123, %v4416
      %v4809 = vsel %vm4018, %v3126, %v4417
      %v4810 = vsel %vm4019, %v3131, %v4418
      %v4811 = vsel %vm4020, %v3134, %v4419
      %v4812 = vsel %vm4021, %v3139, %v4420
      %v4813 = vsel %vm4022, %v3142, %v4421
      %v4814 = vsel %vm4023, %v3147, %v4422
      %v4815 = vsel %vm4024, %v3150, %v4423
      %v4816 = vsel %vm4025, %v3155, %v4424
      %v4817 = vsel %vm4026, %v3158, %v4425
      %v4818 = vsel %vm4027, %v3163, %v4426
      %v4819 = vsel %vm4028, %v3166, %v4427
      %v4820 = vsel %vm4029, %v3171, %v4428
      %v4821 = vsel %vm4030, %v3174, %v4429
      %v4822 = vsel %vm4031, %v3179, %v4430
      %v4823 = vsel %vm4032, %v3182, %v4431
      %v4824 = vsel %vm4033, %v3187, %v4432
      %v4825 = vsel %vm4034, %v3190, %v4433
      %v4826 = vsel %vm4035, %v3195, %v4434
      %v4827 = vsel %vm4036, %v3198, %v4435
      %v4828 = vsel %vm4037, %v3203, %v4436
      %v4829 = vsel %vm4038, %v3206, %v4437
      %v4830 = vsel %vm4039, %v3211, %v4438
      %v4831 = vsel %vm4040, %v3214, %v4439
      %v4832 = vsel %vm4041, %v3219, %v4440
      %v4833 = vsel %vm4042, %v3222, %v4441
      %v4834 = vsel %vm4043, %v3227, %v4442
      %v4835 = vsel %vm4044, %v3230, %v4443
      %v4836 = vsel %vm4045, %v3235, %v4444
      %v4837 = vsel %vm4046, %v3238, %v4445
      %v4838 = vsel %vm4047, %v3243, %v4446
      %v4839 = vsel %vm4048, %v3246, %v4447
      %v4840 = vsel %vm4049, %v3251, %v4448
      %v4841 = vsel %vm4050, %v3254, %v4449
      %v4842 = vsel %vm4051, %v3259, %v4450
      %v4843 = vsel %vm4052, %v3262, %v4451
      %v4844 = vsel %vm4053, %v3267, %v4452
      %v4845 = vsel %vm4054, %v3270, %v4453
      %v4846 = vsel %vm4055, %v3275, %v4454
      %v4847 = vsel %vm4056, %v3278, %v4455
      %v4848 = vsel %vm4057, %v3283, %v4456
      %v4849 = vsel %vm4058, %v3286, %v4457
      %v4850 = vsel %vm4059, %v3291, %v4458
      %v4851 = vsel %vm4060, %v3294, %v4459
      %v4852 = vsel %vm4061, %v3299, %v4460
      %v4853 = vsel %vm4062, %v3302, %v4461
      %v4854 = vsel %vm4063, %v3307, %v4462
      %v4855 = vsel %vm4064, %v3310, %v4463
      %v4856 = vsel %vm4065, %v3315, %v4464
      %v4857 = vsel %vm4066, %v3318, %v4465
      %v4858 = vsel %vm4067, %v3323, %v4466
      %v4859 = vsel %vm4068, %v3326, %v4467
      %v4860 = vsel %vm4069, %v3331, %v4468
      %v4861 = vsel %vm4070, %v3334, %v4469
      %v4862 = vsel %vm4071, %v3339, %v4470
      %v4863 = vsel %vm4072, %v3342, %v4471
      %v4864 = vsel %vm4073, %v3347, %v4472
      %v4865 = vsel %vm4074, %v3350, %v4473
      %v4866 = vsel %vm4075, %v3355, %v4474
      %v4867 = vsel %vm4076, %v3358, %v4475
      %v4868 = vsel %vm4077, %v3363, %v4476
      %v4869 = vsel %vm4078, %v3366, %v4477
      %v4870 = vsel %vm4079, %v3371, %v4478
      %v4871 = vsel %vm4080, %v3374, %v4479
      %v4872 = vsel %vm4081, %v3379, %v4480
      %v4873 = vsel %vm4082, %v3382, %v4481
      %v4874 = vsel %vm4083, %v3387, %v4482
      %v4875 = vsel %vm4084, %v3390, %v4483
      %v4876 = vsel %vm4085, %v3395, %v4484
      %v4877 = vsel %vm4086, %v3398, %v4485
      %v4878 = vsel %vm4087, %v3403, %v4486
      %v4879 = vsel %vm4088, %v3406, %v4487
      %v4880 = vsel %vm4089, %v3411, %v4488
      %v4881 = vsel %vm4090, %v3414, %v4489
      %v4882 = vsel %vm4091, %v3419, %v4490
      %v4883 = vsel %vm4092, %v3422, %v4491
      %v4884 = vsel %vm4093, %v3427, %v4492
      %v4885 = vsel %vm4094, %v3430, %v4493
      %v4886 = vsel %vm4095, %v3435, %v4494
      %v4887 = vsel %vm4096, %v3438, %v4495
      %v4888 = vsel %vm4097, %v3443, %v4496
      %v4889 = vsel %vm4098, %v3446, %v4497
      %v4890 = vsel %vm4099, %v3451, %v4498
      %v4891 = vsel %vm4100, %v3454, %v4499
      %v4892 = vsel %vm4101, %v3459, %v4500
      %v4893 = vsel %vm4102, %v3462, %v4501
      %v4894 = vsel %vm4103, %v3467, %v4502
      %v4895 = vsel %vm4104, %v3470, %v4503
      %v4896 = vsel %vm4105, %v3475, %v4504
      %v4897 = vsel %vm4106, %v3478, %v4505
      %v4898 = vsel %vm4107, %v3483, %v4506
      %v4899 = vsel %vm4108, %v3486, %v4507
      %v4900 = vsel %vm4109, %v3491, %v4508
      %v4901 = vsel %vm4110, %v3494, %v4509
      %v4902 = vsel %vm4111, %v3499, %v4510
      %v4903 = vsel %vm4112, %v3502, %v4511
      %v4904 = vsel %vm4113, %v3507, %v4512
      %v4905 = vsel %vm4114, %v3510, %v4513
      %v4906 = vsel %vm4115, %v3515, %v4514
      %v4907 = vsel %vm4116, %v3518, %v4515
      %v4908 = vsel %vm4117, %v3523, %v4516
      %v4909 = vsel %vm4118, %v3526, %v4517
      %v4910 = vsel %vm4119, %v3531, %v4518
      %v4911 = vsel %vm4120, %v3534, %v4519
      %v4912 = vsel %vm4121, %v3539, %v4520
      %v4913 = vsel %vm4122, %v3542, %v4521
      %v4914 = vsel %vm4123, %v3547, %v4522
      %v4915 = vsel %vm4124, %v3550, %v4523
      %v4916 = vsel %vm4125, %v3555, %v4524
      %v4917 = vsel %vm4126, %v3558, %v4525
      %v4918 = vsel %vm4127, %v3563, %v4526
      %v4919 = vsel %vm4128, %v3566, %v4527
      %v4920 = vsel %vm4129, %v3571, %v4528
      %v4921 = vsel %vm4130, %v3574, %v4529
      %v4922 = vsel %vm4131, %v3579, %v4530
      %v4923 = vsel %vm4132, %v3582, %v4531
      %v4924 = vsel %vm4133, %v3587, %v4532
      %v4925 = vsel %vm4134, %v3590, %v4533
      %v4926 = vsel %vm4135, %v3595, %v4534
      %v4927 = vsel %vm4136, %v3598, %v4535
      %v4928 = vsel %vm4137, %v3603, %v4536
      %v4929 = vsel %vm4138, %v3606, %v4537
      %v4930 = vsel %vm4139, %v3611, %v4538
      %v4931 = vsel %vm4140, %v3614, %v4539
      %v4932 = vsel %vm4141, %v3619, %v4540
      %v4933 = vsel %vm4142, %v3622, %v4541
      %v4934 = vsel %vm4143, %v3627, %v4542
      %v4935 = vsel %vm4144, %v3630, %v4543
      %v4936 = vsel %vm4145, %v3635, %v4544
      %v4937 = vsel %vm4146, %v3638, %v4545
      %v4938 = vsel %vm4147, %v3643, %v4546
      %v4939 = vsel %vm4148, %v3646, %v4547
      %v4940 = vsel %vm4149, %v3651, %v4548
      %v4941 = vsel %vm4150, %v3654, %v4549
      %v4942 = vsel %vm4151, %v3659, %v4550
      %v4943 = vsel %vm4152, %v3662, %v4551
      %v4944 = vsel %vm4153, %v3667, %v4552
      %v4945 = vsel %vm4154, %v3670, %v4553
      %v4946 = vsel %vm4155, %v3675, %v4554
      %v4947 = vsel %vm4156, %v3678, %v4555
      %v4948 = vsel %vm4157, %v3683, %v4556
      %v4949 = vsel %vm4158, %v3686, %v4557
      %v4950 = vsel %vm4159, %v3691, %v4558
      %v4951 = vsel %vm4160, %v3694, %v4559
      %v4952 = vsel %vm4161, %v3699, %v4560
      %v4953 = vsel %vm4162, %v3702, %v4561
      %v4954 = vsel %vm4163, %v3707, %v4562
      %v4955 = vsel %vm4164, %v3710, %v4563
      %v4956 = vsel %vm4165, %v3715, %v4564
      %v4957 = vsel %vm4166, %v3718, %v4565
      %v4958 = vsel %vm4167, %v3723, %v4566
      %v4959 = vsel %vm4168, %v3726, %v4567
      %v4960 = vsel %vm4169, %v3731, %v4568
      %v4961 = vsel %vm4170, %v3734, %v4569
      %v4962 = vsel %vm4171, %v3739, %v4570
      %v4963 = vsel %vm4172, %v3742, %v4571
      %v4964 = vsel %vm4173, %v3747, %v4572
      %v4965 = vsel %vm4174, %v3750, %v4573
      %v4966 = vsel %vm4175, %v3755, %v4574
      %v4967 = vsel %vm4176, %v3758, %v4575
      %v4968 = vsel %vm4177, %v3763, %v4576
      %v4969 = vsel %vm4178, %v3766, %v4577
      %v4970 = vsel %vm4179, %v3771, %v4578
      %v4971 = vsel %vm4180, %v3774, %v4579
      %v4972 = vsel %vm4181, %v3779, %v4580
      %v4973 = vsel %vm4182, %v3782, %v4581
      %v4974 = vsel %vm4183, %v3787, %v4582
      %v4975 = vsel %vm4184, %v3790, %v4583
      %v4976 = vpack.c.bf16 %v4585, %v4584
      %v4977 = vpack.c.bf16 %v4587, %v4586
      %v4978 = vpack.c.bf16 %v4589, %v4588
      %v4979 = vpack.c.bf16 %v4591, %v4590
      %v4980 = vpack.c.bf16 %v4593, %v4592
      %v4981 = vpack.c.bf16 %v4595, %v4594
      %v4982 = vpack.c.bf16 %v4597, %v4596
      %v4983 = vpack.c.bf16 %v4599, %v4598
      %v4984 = vpack.c.bf16 %v4601, %v4600
      %v4985 = vpack.c.bf16 %v4603, %v4602
      %v4986 = vpack.c.bf16 %v4605, %v4604
      %v4987 = vpack.c.bf16 %v4607, %v4606
      %v4988 = vpack.c.bf16 %v4609, %v4608
      %v4989 = vpack.c.bf16 %v4611, %v4610
      %v4990 = vpack.c.bf16 %v4613, %v4612
      %v4991 = vpack.c.bf16 %v4615, %v4614
      %v4992 = vpack.c.bf16 %v4617, %v4616
      %v4993 = vpack.c.bf16 %v4619, %v4618
      %v4994 = vpack.c.bf16 %v4621, %v4620
      %v4995 = vpack.c.bf16 %v4623, %v4622
      %v4996 = vpack.c.bf16 %v4625, %v4624
      %v4997 = vpack.c.bf16 %v4627, %v4626
      %v4998 = vpack.c.bf16 %v4629, %v4628
      %v4999 = vpack.c.bf16 %v4631, %v4630
      %v5000 = vpack.c.bf16 %v4633, %v4632
      %v5001 = vpack.c.bf16 %v4635, %v4634
      %v5002 = vpack.c.bf16 %v4637, %v4636
      %v5003 = vpack.c.bf16 %v4639, %v4638
      %v5004 = vpack.c.bf16 %v4641, %v4640
      %v5005 = vpack.c.bf16 %v4643, %v4642
      %v5006 = vpack.c.bf16 %v4645, %v4644
      %v5007 = vpack.c.bf16 %v4647, %v4646
      %v5008 = vpack.c.bf16 %v4649, %v4648
      %v5009 = vpack.c.bf16 %v4651, %v4650
      %v5010 = vpack.c.bf16 %v4653, %v4652
      %v5011 = vpack.c.bf16 %v4655, %v4654
      %v5012 = vpack.c.bf16 %v4657, %v4656
      %v5013 = vpack.c.bf16 %v4659, %v4658
      %v5014 = vpack.c.bf16 %v4661, %v4660
      %v5015 = vpack.c.bf16 %v4663, %v4662
      %v5016 = vpack.c.bf16 %v4665, %v4664
      %v5017 = vpack.c.bf16 %v4667, %v4666
      %v5018 = vpack.c.bf16 %v4669, %v4668
      %v5019 = vpack.c.bf16 %v4671, %v4670
      %v5020 = vpack.c.bf16 %v4673, %v4672
      %v5021 = vpack.c.bf16 %v4675, %v4674
      %v5022 = vpack.c.bf16 %v4677, %v4676
      %v5023 = vpack.c.bf16 %v4679, %v4678
      %v5024 = vpack.c.bf16 %v4681, %v4680
      %v5025 = vpack.c.bf16 %v4683, %v4682
      %v5026 = vpack.c.bf16 %v4685, %v4684
      %v5027 = vpack.c.bf16 %v4687, %v4686
      %v5028 = vpack.c.bf16 %v4689, %v4688
      %v5029 = vpack.c.bf16 %v4691, %v4690
      %v5030 = vpack.c.bf16 %v4693, %v4692
      %v5031 = vpack.c.bf16 %v4695, %v4694
      %v5032 = vpack.c.bf16 %v4697, %v4696
      %v5033 = vpack.c.bf16 %v4699, %v4698
      %v5034 = vpack.c.bf16 %v4701, %v4700
      %v5035 = vpack.c.bf16 %v4703, %v4702
      %v5036 = vpack.c.bf16 %v4705, %v4704
      %v5037 = vpack.c.bf16 %v4707, %v4706
      %v5038 = vpack.c.bf16 %v4709, %v4708
      %v5039 = vpack.c.bf16 %v4711, %v4710
      %v5040 = vpack.c.bf16 %v4713, %v4712
      %v5041 = vpack.c.bf16 %v4715, %v4714
      %v5042 = vpack.c.bf16 %v4717, %v4716
      %v5043 = vpack.c.bf16 %v4719, %v4718
      %v5044 = vpack.c.bf16 %v4721, %v4720
      %v5045 = vpack.c.bf16 %v4723, %v4722
      %v5046 = vpack.c.bf16 %v4725, %v4724
      %v5047 = vpack.c.bf16 %v4727, %v4726
      %v5048 = vpack.c.bf16 %v4729, %v4728
      %v5049 = vpack.c.bf16 %v4731, %v4730
      %v5050 = vpack.c.bf16 %v4733, %v4732
      %v5051 = vpack.c.bf16 %v4735, %v4734
      %v5052 = vpack.c.bf16 %v4737, %v4736
      %v5053 = vpack.c.bf16 %v4739, %v4738
      %v5054 = vpack.c.bf16 %v4741, %v4740
      %v5055 = vpack.c.bf16 %v4743, %v4742
      %v5056 = vpack.c.bf16 %v4745, %v4744
      %v5057 = vpack.c.bf16 %v4747, %v4746
      %v5058 = vpack.c.bf16 %v4749, %v4748
      %v5059 = vpack.c.bf16 %v4751, %v4750
      %v5060 = vpack.c.bf16 %v4753, %v4752
      %v5061 = vpack.c.bf16 %v4755, %v4754
      %v5062 = vpack.c.bf16 %v4757, %v4756
      %v5063 = vpack.c.bf16 %v4759, %v4758
      %v5064 = vpack.c.bf16 %v4761, %v4760
      %v5065 = vpack.c.bf16 %v4763, %v4762
      %v5066 = vpack.c.bf16 %v4765, %v4764
      %v5067 = vpack.c.bf16 %v4767, %v4766
      %v5068 = vpack.c.bf16 %v4769, %v4768
      %v5069 = vpack.c.bf16 %v4771, %v4770
      %v5070 = vpack.c.bf16 %v4773, %v4772
      %v5071 = vpack.c.bf16 %v4775, %v4774
      %v5072 = vpack.c.bf16 %v4777, %v4776
      %v5073 = vpack.c.bf16 %v4779, %v4778
      %v5074 = vpack.c.bf16 %v4781, %v4780
      %v5075 = vpack.c.bf16 %v4783, %v4782
      %v5076 = vpack.c.bf16 %v4785, %v4784
      %v5077 = vpack.c.bf16 %v4787, %v4786
      %v5078 = vpack.c.bf16 %v4789, %v4788
      %v5079 = vpack.c.bf16 %v4791, %v4790
      %v5080 = vpack.c.bf16 %v4793, %v4792
      %v5081 = vpack.c.bf16 %v4795, %v4794
      %v5082 = vpack.c.bf16 %v4797, %v4796
      %v5083 = vpack.c.bf16 %v4799, %v4798
      %v5084 = vpack.c.bf16 %v4801, %v4800
      %v5085 = vpack.c.bf16 %v4803, %v4802
      %v5086 = vpack.c.bf16 %v4805, %v4804
      %v5087 = vpack.c.bf16 %v4807, %v4806
      %v5088 = vpack.c.bf16 %v4809, %v4808
      %v5089 = vpack.c.bf16 %v4811, %v4810
      %v5090 = vpack.c.bf16 %v4813, %v4812
      %v5091 = vpack.c.bf16 %v4815, %v4814
      %v5092 = vpack.c.bf16 %v4817, %v4816
      %v5093 = vpack.c.bf16 %v4819, %v4818
      %v5094 = vpack.c.bf16 %v4821, %v4820
      %v5095 = vpack.c.bf16 %v4823, %v4822
      %v5096 = vpack.c.bf16 %v4825, %v4824
      %v5097 = vpack.c.bf16 %v4827, %v4826
      %v5098 = vpack.c.bf16 %v4829, %v4828
      %v5099 = vpack.c.bf16 %v4831, %v4830
      %v5100 = vpack.c.bf16 %v4833, %v4832
      %v5101 = vpack.c.bf16 %v4835, %v4834
      %v5102 = vpack.c.bf16 %v4837, %v4836
      %v5103 = vpack.c.bf16 %v4839, %v4838
      %v5104 = vpack.c.bf16 %v4841, %v4840
      %v5105 = vpack.c.bf16 %v4843, %v4842
      %v5106 = vpack.c.bf16 %v4845, %v4844
      %v5107 = vpack.c.bf16 %v4847, %v4846
      %v5108 = vpack.c.bf16 %v4849, %v4848
      %v5109 = vpack.c.bf16 %v4851, %v4850
      %v5110 = vpack.c.bf16 %v4853, %v4852
      %v5111 = vpack.c.bf16 %v4855, %v4854
      %v5112 = vpack.c.bf16 %v4857, %v4856
      %v5113 = vpack.c.bf16 %v4859, %v4858
      %v5114 = vpack.c.bf16 %v4861, %v4860
      %v5115 = vpack.c.bf16 %v4863, %v4862
      %v5116 = vpack.c.bf16 %v4865, %v4864
      %v5117 = vpack.c.bf16 %v4867, %v4866
      %v5118 = vpack.c.bf16 %v4869, %v4868
      %v5119 = vpack.c.bf16 %v4871, %v4870
      %v5120 = vpack.c.bf16 %v4873, %v4872
      %v5121 = vpack.c.bf16 %v4875, %v4874
      %v5122 = vpack.c.bf16 %v4877, %v4876
      %v5123 = vpack.c.bf16 %v4879, %v4878
      %v5124 = vpack.c.bf16 %v4881, %v4880
      %v5125 = vpack.c.bf16 %v4883, %v4882
      %v5126 = vpack.c.bf16 %v4885, %v4884
      %v5127 = vpack.c.bf16 %v4887, %v4886
      %v5128 = vpack.c.bf16 %v4889, %v4888
      %v5129 = vpack.c.bf16 %v4891, %v4890
      %v5130 = vpack.c.bf16 %v4893, %v4892
      %v5131 = vpack.c.bf16 %v4895, %v4894
      %v5132 = vpack.c.bf16 %v4897, %v4896
      %v5133 = vpack.c.bf16 %v4899, %v4898
      %v5134 = vpack.c.bf16 %v4901, %v4900
      %v5135 = vpack.c.bf16 %v4903, %v4902
      %v5136 = vpack.c.bf16 %v4905, %v4904
      %v5137 = vpack.c.bf16 %v4907, %v4906
      %v5138 = vpack.c.bf16 %v4909, %v4908
      %v5139 = vpack.c.bf16 %v4911, %v4910
      %v5140 = vpack.c.bf16 %v4913, %v4912
      %v5141 = vpack.c.bf16 %v4915, %v4914
      %v5142 = vpack.c.bf16 %v4917, %v4916
      %v5143 = vpack.c.bf16 %v4919, %v4918
      %v5144 = vpack.c.bf16 %v4921, %v4920
      %v5145 = vpack.c.bf16 %v4923, %v4922
      %v5146 = vpack.c.bf16 %v4925, %v4924
      %v5147 = vpack.c.bf16 %v4927, %v4926
      %v5148 = vpack.c.bf16 %v4929, %v4928
      %v5149 = vpack.c.bf16 %v4931, %v4930
      %v5150 = vpack.c.bf16 %v4933, %v4932
      %v5151 = vpack.c.bf16 %v4935, %v4934
      %v5152 = vpack.c.bf16 %v4937, %v4936
      %v5153 = vpack.c.bf16 %v4939, %v4938
      %v5154 = vpack.c.bf16 %v4941, %v4940
      %v5155 = vpack.c.bf16 %v4943, %v4942
      %v5156 = vpack.c.bf16 %v4945, %v4944
      %v5157 = vpack.c.bf16 %v4947, %v4946
      %v5158 = vpack.c.bf16 %v4949, %v4948
      %v5159 = vpack.c.bf16 %v4951, %v4950
      %v5160 = vpack.c.bf16 %v4953, %v4952
      %v5161 = vpack.c.bf16 %v4955, %v4954
      %v5162 = vpack.c.bf16 %v4957, %v4956
      %v5163 = vpack.c.bf16 %v4959, %v4958
      %v5164 = vpack.c.bf16 %v4961, %v4960
      %v5165 = vpack.c.bf16 %v4963, %v4962
      %v5166 = vpack.c.bf16 %v4965, %v4964
      %v5167 = vpack.c.bf16 %v4967, %v4966
      %v5168 = vpack.c.bf16 %v4969, %v4968
      %v5169 = vpack.c.bf16 %v4971, %v4970
      %v5170 = vpack.c.bf16 %v4973, %v4972
      %v5171 = vpack.c.bf16 %v4975, %v4974
      %v5368 = vunpack.c.l.b16 %v4976
      %v5369 = vunpack.c.h.b16 %v4976
      %v5370 = vunpack.c.l.b16 %v4977
      %v5371 = vunpack.c.h.b16 %v4977
      %v5372 = vunpack.c.l.b16 %v4978
      %v5373 = vunpack.c.h.b16 %v4978
      %v5374 = vunpack.c.l.b16 %v4979
      %v5375 = vunpack.c.h.b16 %v4979
      %v5376 = vunpack.c.l.b16 %v4980
      %v5377 = vunpack.c.h.b16 %v4980
      %v5378 = vunpack.c.l.b16 %v4981
      %v5379 = vunpack.c.h.b16 %v4981
      %v5380 = vunpack.c.l.b16 %v4982
      %v5381 = vunpack.c.h.b16 %v4982
      %v5382 = vunpack.c.l.b16 %v4983
      %v5383 = vunpack.c.h.b16 %v4983
      %v5384 = vunpack.c.l.b16 %v4984
      %v5385 = vunpack.c.h.b16 %v4984
      %v5386 = vunpack.c.l.b16 %v4985
      %v5387 = vunpack.c.h.b16 %v4985
      %v5388 = vunpack.c.l.b16 %v4986
      %v5389 = vunpack.c.h.b16 %v4986
      %v5390 = vunpack.c.l.b16 %v4987
      %v5391 = vunpack.c.h.b16 %v4987
      %v5392 = vunpack.c.l.b16 %v4988
      %v5393 = vunpack.c.h.b16 %v4988
      %v5394 = vunpack.c.l.b16 %v4989
      %v5395 = vunpack.c.h.b16 %v4989
      %v5396 = vunpack.c.l.b16 %v4990
      %v5397 = vunpack.c.h.b16 %v4990
      %v5398 = vunpack.c.l.b16 %v4991
      %v5399 = vunpack.c.h.b16 %v4991
      %v5400 = vunpack.c.l.b16 %v4992
      %v5401 = vunpack.c.h.b16 %v4992
      %v5402 = vunpack.c.l.b16 %v4993
      %v5403 = vunpack.c.h.b16 %v4993
      %v5404 = vunpack.c.l.b16 %v4994
      %v5405 = vunpack.c.h.b16 %v4994
      %v5406 = vunpack.c.l.b16 %v4995
      %v5407 = vunpack.c.h.b16 %v4995
      %v5408 = vunpack.c.l.b16 %v4996
      %v5409 = vunpack.c.h.b16 %v4996
      %v5410 = vunpack.c.l.b16 %v4997
      %v5411 = vunpack.c.h.b16 %v4997
      %v5412 = vunpack.c.l.b16 %v4998
      %v5413 = vunpack.c.h.b16 %v4998
      %v5414 = vunpack.c.l.b16 %v4999
      %v5415 = vunpack.c.h.b16 %v4999
      %v5416 = vunpack.c.l.b16 %v5000
      %v5417 = vunpack.c.h.b16 %v5000
      %v5418 = vunpack.c.l.b16 %v5001
      %v5419 = vunpack.c.h.b16 %v5001
      %v5420 = vunpack.c.l.b16 %v5002
      %v5421 = vunpack.c.h.b16 %v5002
      %v5422 = vunpack.c.l.b16 %v5003
      %v5423 = vunpack.c.h.b16 %v5003
      %v5424 = vunpack.c.l.b16 %v5004
      %v5425 = vunpack.c.h.b16 %v5004
      %v5426 = vunpack.c.l.b16 %v5005
      %v5427 = vunpack.c.h.b16 %v5005
      %v5428 = vunpack.c.l.b16 %v5006
      %v5429 = vunpack.c.h.b16 %v5006
      %v5430 = vunpack.c.l.b16 %v5007
      %v5431 = vunpack.c.h.b16 %v5007
      %v5432 = vunpack.c.l.b16 %v5008
      %v5433 = vunpack.c.h.b16 %v5008
      %v5434 = vunpack.c.l.b16 %v5009
      %v5435 = vunpack.c.h.b16 %v5009
      %v5436 = vunpack.c.l.b16 %v5010
      %v5437 = vunpack.c.h.b16 %v5010
      %v5438 = vunpack.c.l.b16 %v5011
      %v5439 = vunpack.c.h.b16 %v5011
      %v5440 = vunpack.c.l.b16 %v5012
      %v5441 = vunpack.c.h.b16 %v5012
      %v5442 = vunpack.c.l.b16 %v5013
      %v5443 = vunpack.c.h.b16 %v5013
      %v5444 = vunpack.c.l.b16 %v5014
      %v5445 = vunpack.c.h.b16 %v5014
      %v5446 = vunpack.c.l.b16 %v5015
      %v5447 = vunpack.c.h.b16 %v5015
      %v5448 = vunpack.c.l.b16 %v5016
      %v5449 = vunpack.c.h.b16 %v5016
      %v5450 = vunpack.c.l.b16 %v5017
      %v5451 = vunpack.c.h.b16 %v5017
      %v5452 = vunpack.c.l.b16 %v5018
      %v5453 = vunpack.c.h.b16 %v5018
      %v5454 = vunpack.c.l.b16 %v5019
      %v5455 = vunpack.c.h.b16 %v5019
      %v5456 = vunpack.c.l.b16 %v5020
      %v5457 = vunpack.c.h.b16 %v5020
      %v5458 = vunpack.c.l.b16 %v5021
      %v5459 = vunpack.c.h.b16 %v5021
      %v5460 = vunpack.c.l.b16 %v5022
      %v5461 = vunpack.c.h.b16 %v5022
      %v5462 = vunpack.c.l.b16 %v5023
      %v5463 = vunpack.c.h.b16 %v5023
      %v5464 = vunpack.c.l.b16 %v5024
      %v5465 = vunpack.c.h.b16 %v5024
      %v5466 = vunpack.c.l.b16 %v5025
      %v5467 = vunpack.c.h.b16 %v5025
      %v5468 = vunpack.c.l.b16 %v5026
      %v5469 = vunpack.c.h.b16 %v5026
      %v5470 = vunpack.c.l.b16 %v5027
      %v5471 = vunpack.c.h.b16 %v5027
      %v5472 = vunpack.c.l.b16 %v5028
      %v5473 = vunpack.c.h.b16 %v5028
      %v5474 = vunpack.c.l.b16 %v5029
      %v5475 = vunpack.c.h.b16 %v5029
      %v5476 = vunpack.c.l.b16 %v5030
      %v5477 = vunpack.c.h.b16 %v5030
      %v5478 = vunpack.c.l.b16 %v5031
      %v5479 = vunpack.c.h.b16 %v5031
      %v5480 = vunpack.c.l.b16 %v5032
      %v5481 = vunpack.c.h.b16 %v5032
      %v5482 = vunpack.c.l.b16 %v5033
      %v5483 = vunpack.c.h.b16 %v5033
      %v5484 = vunpack.c.l.b16 %v5034
      %v5485 = vunpack.c.h.b16 %v5034
      %v5486 = vunpack.c.l.b16 %v5035
      %v5487 = vunpack.c.h.b16 %v5035
      %v5488 = vunpack.c.l.b16 %v5036
      %v5489 = vunpack.c.h.b16 %v5036
      %v5490 = vunpack.c.l.b16 %v5037
      %v5491 = vunpack.c.h.b16 %v5037
      %v5492 = vunpack.c.l.b16 %v5038
      %v5493 = vunpack.c.h.b16 %v5038
      %v5494 = vunpack.c.l.b16 %v5039
      %v5495 = vunpack.c.h.b16 %v5039
      %v5496 = vunpack.c.l.b16 %v5040
      %v5497 = vunpack.c.h.b16 %v5040
      %v5498 = vunpack.c.l.b16 %v5041
      %v5499 = vunpack.c.h.b16 %v5041
      %v5500 = vunpack.c.l.b16 %v5042
      %v5501 = vunpack.c.h.b16 %v5042
      %v5502 = vunpack.c.l.b16 %v5043
      %v5503 = vunpack.c.h.b16 %v5043
      %v5504 = vunpack.c.l.b16 %v5044
      %v5505 = vunpack.c.h.b16 %v5044
      %v5506 = vunpack.c.l.b16 %v5045
      %v5507 = vunpack.c.h.b16 %v5045
      %v5508 = vunpack.c.l.b16 %v5046
      %v5509 = vunpack.c.h.b16 %v5046
      %v5510 = vunpack.c.l.b16 %v5047
      %v5511 = vunpack.c.h.b16 %v5047
      %v5512 = vunpack.c.l.b16 %v5048
      %v5513 = vunpack.c.h.b16 %v5048
      %v5514 = vunpack.c.l.b16 %v5049
      %v5515 = vunpack.c.h.b16 %v5049
      %v5516 = vunpack.c.l.b16 %v5050
      %v5517 = vunpack.c.h.b16 %v5050
      %v5518 = vunpack.c.l.b16 %v5051
      %v5519 = vunpack.c.h.b16 %v5051
      %v5520 = vunpack.c.l.b16 %v5052
      %v5521 = vunpack.c.h.b16 %v5052
      %v5522 = vunpack.c.l.b16 %v5053
      %v5523 = vunpack.c.h.b16 %v5053
      %v5524 = vunpack.c.l.b16 %v5054
      %v5525 = vunpack.c.h.b16 %v5054
      %v5526 = vunpack.c.l.b16 %v5055
      %v5527 = vunpack.c.h.b16 %v5055
      %v5528 = vunpack.c.l.b16 %v5056
      %v5529 = vunpack.c.h.b16 %v5056
      %v5530 = vunpack.c.l.b16 %v5057
      %v5531 = vunpack.c.h.b16 %v5057
      %v5532 = vunpack.c.l.b16 %v5058
      %v5533 = vunpack.c.h.b16 %v5058
      %v5534 = vunpack.c.l.b16 %v5059
      %v5535 = vunpack.c.h.b16 %v5059
      %v5536 = vunpack.c.l.b16 %v5060
      %v5537 = vunpack.c.h.b16 %v5060
      %v5538 = vunpack.c.l.b16 %v5061
      %v5539 = vunpack.c.h.b16 %v5061
      %v5540 = vunpack.c.l.b16 %v5062
      %v5541 = vunpack.c.h.b16 %v5062
      %v5542 = vunpack.c.l.b16 %v5063
      %v5543 = vunpack.c.h.b16 %v5063
      %v5544 = vunpack.c.l.b16 %v5064
      %v5545 = vunpack.c.h.b16 %v5064
      %v5546 = vunpack.c.l.b16 %v5065
      %v5547 = vunpack.c.h.b16 %v5065
      %v5548 = vunpack.c.l.b16 %v5066
      %v5549 = vunpack.c.h.b16 %v5066
      %v5550 = vunpack.c.l.b16 %v5067
      %v5551 = vunpack.c.h.b16 %v5067
      %v5552 = vunpack.c.l.b16 %v5068
      %v5553 = vunpack.c.h.b16 %v5068
      %v5554 = vunpack.c.l.b16 %v5069
      %v5555 = vunpack.c.h.b16 %v5069
      %v5556 = vunpack.c.l.b16 %v5070
      %v5557 = vunpack.c.h.b16 %v5070
      %v5558 = vunpack.c.l.b16 %v5071
      %v5559 = vunpack.c.h.b16 %v5071
      %v5560 = vunpack.c.l.b16 %v5072
      %v5561 = vunpack.c.h.b16 %v5072
      %v5562 = vunpack.c.l.b16 %v5073
      %v5563 = vunpack.c.h.b16 %v5073
      %v5564 = vunpack.c.l.b16 %v5074
      %v5565 = vunpack.c.h.b16 %v5074
      %v5566 = vunpack.c.l.b16 %v5075
      %v5567 = vunpack.c.h.b16 %v5075
      %v5568 = vunpack.c.l.b16 %v5076
      %v5569 = vunpack.c.h.b16 %v5076
      %v5570 = vunpack.c.l.b16 %v5077
      %v5571 = vunpack.c.h.b16 %v5077
      %v5572 = vunpack.c.l.b16 %v5078
      %v5573 = vunpack.c.h.b16 %v5078
      %v5574 = vunpack.c.l.b16 %v5079
      %v5575 = vunpack.c.h.b16 %v5079
      %v5576 = vunpack.c.l.b16 %v5080
      %v5577 = vunpack.c.h.b16 %v5080
      %v5578 = vunpack.c.l.b16 %v5081
      %v5579 = vunpack.c.h.b16 %v5081
      %v5580 = vunpack.c.l.b16 %v5082
      %v5581 = vunpack.c.h.b16 %v5082
      %v5582 = vunpack.c.l.b16 %v5083
      %v5583 = vunpack.c.h.b16 %v5083
      %v5584 = vunpack.c.l.b16 %v5084
      %v5585 = vunpack.c.h.b16 %v5084
      %v5586 = vunpack.c.l.b16 %v5085
      %v5587 = vunpack.c.h.b16 %v5085
      %v5588 = vunpack.c.l.b16 %v5086
      %v5589 = vunpack.c.h.b16 %v5086
      %v5590 = vunpack.c.l.b16 %v5087
      %v5591 = vunpack.c.h.b16 %v5087
      %v5592 = vunpack.c.l.b16 %v5088
      %v5593 = vunpack.c.h.b16 %v5088
      %v5594 = vunpack.c.l.b16 %v5089
      %v5595 = vunpack.c.h.b16 %v5089
      %v5596 = vunpack.c.l.b16 %v5090
      %v5597 = vunpack.c.h.b16 %v5090
      %v5598 = vunpack.c.l.b16 %v5091
      %v5599 = vunpack.c.h.b16 %v5091
      %v5600 = vunpack.c.l.b16 %v5092
      %v5601 = vunpack.c.h.b16 %v5092
      %v5602 = vunpack.c.l.b16 %v5093
      %v5603 = vunpack.c.h.b16 %v5093
      %v5604 = vunpack.c.l.b16 %v5094
      %v5605 = vunpack.c.h.b16 %v5094
      %v5606 = vunpack.c.l.b16 %v5095
      %v5607 = vunpack.c.h.b16 %v5095
      %v5608 = vunpack.c.l.b16 %v5096
      %v5609 = vunpack.c.h.b16 %v5096
      %v5610 = vunpack.c.l.b16 %v5097
      %v5611 = vunpack.c.h.b16 %v5097
      %v5612 = vunpack.c.l.b16 %v5098
      %v5613 = vunpack.c.h.b16 %v5098
      %v5614 = vunpack.c.l.b16 %v5099
      %v5615 = vunpack.c.h.b16 %v5099
      %v5616 = vunpack.c.l.b16 %v5100
      %v5617 = vunpack.c.h.b16 %v5100
      %v5618 = vunpack.c.l.b16 %v5101
      %v5619 = vunpack.c.h.b16 %v5101
      %v5620 = vunpack.c.l.b16 %v5102
      %v5621 = vunpack.c.h.b16 %v5102
      %v5622 = vunpack.c.l.b16 %v5103
      %v5623 = vunpack.c.h.b16 %v5103
      %v5624 = vunpack.c.l.b16 %v5104
      %v5625 = vunpack.c.h.b16 %v5104
      %v5626 = vunpack.c.l.b16 %v5105
      %v5627 = vunpack.c.h.b16 %v5105
      %v5628 = vunpack.c.l.b16 %v5106
      %v5629 = vunpack.c.h.b16 %v5106
      %v5630 = vunpack.c.l.b16 %v5107
      %v5631 = vunpack.c.h.b16 %v5107
      %v5632 = vunpack.c.l.b16 %v5108
      %v5633 = vunpack.c.h.b16 %v5108
      %v5634 = vunpack.c.l.b16 %v5109
      %v5635 = vunpack.c.h.b16 %v5109
      %v5636 = vunpack.c.l.b16 %v5110
      %v5637 = vunpack.c.h.b16 %v5110
      %v5638 = vunpack.c.l.b16 %v5111
      %v5639 = vunpack.c.h.b16 %v5111
      %v5640 = vunpack.c.l.b16 %v5112
      %v5641 = vunpack.c.h.b16 %v5112
      %v5642 = vunpack.c.l.b16 %v5113
      %v5643 = vunpack.c.h.b16 %v5113
      %v5644 = vunpack.c.l.b16 %v5114
      %v5645 = vunpack.c.h.b16 %v5114
      %v5646 = vunpack.c.l.b16 %v5115
      %v5647 = vunpack.c.h.b16 %v5115
      %v5648 = vunpack.c.l.b16 %v5116
      %v5649 = vunpack.c.h.b16 %v5116
      %v5650 = vunpack.c.l.b16 %v5117
      %v5651 = vunpack.c.h.b16 %v5117
      %v5652 = vunpack.c.l.b16 %v5118
      %v5653 = vunpack.c.h.b16 %v5118
      %v5654 = vunpack.c.l.b16 %v5119
      %v5655 = vunpack.c.h.b16 %v5119
      %v5656 = vunpack.c.l.b16 %v5120
      %v5657 = vunpack.c.h.b16 %v5120
      %v5658 = vunpack.c.l.b16 %v5121
      %v5659 = vunpack.c.h.b16 %v5121
      %v5660 = vunpack.c.l.b16 %v5122
      %v5661 = vunpack.c.h.b16 %v5122
      %v5662 = vunpack.c.l.b16 %v5123
      %v5663 = vunpack.c.h.b16 %v5123
      %v5664 = vunpack.c.l.b16 %v5124
      %v5665 = vunpack.c.h.b16 %v5124
      %v5666 = vunpack.c.l.b16 %v5125
      %v5667 = vunpack.c.h.b16 %v5125
      %v5668 = vunpack.c.l.b16 %v5126
      %v5669 = vunpack.c.h.b16 %v5126
      %v5670 = vunpack.c.l.b16 %v5127
      %v5671 = vunpack.c.h.b16 %v5127
      %v5672 = vunpack.c.l.b16 %v5128
      %v5673 = vunpack.c.h.b16 %v5128
      %v5674 = vunpack.c.l.b16 %v5129
      %v5675 = vunpack.c.h.b16 %v5129
      %v5676 = vunpack.c.l.b16 %v5130
      %v5677 = vunpack.c.h.b16 %v5130
      %v5678 = vunpack.c.l.b16 %v5131
      %v5679 = vunpack.c.h.b16 %v5131
      %v5680 = vunpack.c.l.b16 %v5132
      %v5681 = vunpack.c.h.b16 %v5132
      %v5682 = vunpack.c.l.b16 %v5133
      %v5683 = vunpack.c.h.b16 %v5133
      %v5684 = vunpack.c.l.b16 %v5134
      %v5685 = vunpack.c.h.b16 %v5134
      %v5686 = vunpack.c.l.b16 %v5135
      %v5687 = vunpack.c.h.b16 %v5135
      %v5688 = vunpack.c.l.b16 %v5136
      %v5689 = vunpack.c.h.b16 %v5136
      %v5690 = vunpack.c.l.b16 %v5137
      %v5691 = vunpack.c.h.b16 %v5137
      %v5692 = vunpack.c.l.b16 %v5138
      %v5693 = vunpack.c.h.b16 %v5138
      %v5694 = vunpack.c.l.b16 %v5139
      %v5695 = vunpack.c.h.b16 %v5139
      %v5696 = vunpack.c.l.b16 %v5140
      %v5697 = vunpack.c.h.b16 %v5140
      %v5698 = vunpack.c.l.b16 %v5141
      %v5699 = vunpack.c.h.b16 %v5141
      %v5700 = vunpack.c.l.b16 %v5142
      %v5701 = vunpack.c.h.b16 %v5142
      %v5702 = vunpack.c.l.b16 %v5143
      %v5703 = vunpack.c.h.b16 %v5143
      %v5704 = vunpack.c.l.b16 %v5144
      %v5705 = vunpack.c.h.b16 %v5144
      %v5706 = vunpack.c.l.b16 %v5145
      %v5707 = vunpack.c.h.b16 %v5145
      %v5708 = vunpack.c.l.b16 %v5146
      %v5709 = vunpack.c.h.b16 %v5146
      %v5710 = vunpack.c.l.b16 %v5147
      %v5711 = vunpack.c.h.b16 %v5147
      %v5712 = vunpack.c.l.b16 %v5148
      %v5713 = vunpack.c.h.b16 %v5148
      %v5714 = vunpack.c.l.b16 %v5149
      %v5715 = vunpack.c.h.b16 %v5149
      %v5716 = vunpack.c.l.b16 %v5150
      %v5717 = vunpack.c.h.b16 %v5150
      %v5718 = vunpack.c.l.b16 %v5151
      %v5719 = vunpack.c.h.b16 %v5151
      %v5720 = vunpack.c.l.b16 %v5152
      %v5721 = vunpack.c.h.b16 %v5152
      %v5722 = vunpack.c.l.b16 %v5153
      %v5723 = vunpack.c.h.b16 %v5153
      %v5724 = vunpack.c.l.b16 %v5154
      %v5725 = vunpack.c.h.b16 %v5154
      %v5726 = vunpack.c.l.b16 %v5155
      %v5727 = vunpack.c.h.b16 %v5155
      %v5728 = vunpack.c.l.b16 %v5156
      %v5729 = vunpack.c.h.b16 %v5156
      %v5730 = vunpack.c.l.b16 %v5157
      %v5731 = vunpack.c.h.b16 %v5157
      %v5732 = vunpack.c.l.b16 %v5158
      %v5733 = vunpack.c.h.b16 %v5158
      %v5734 = vunpack.c.l.b16 %v5159
      %v5735 = vunpack.c.h.b16 %v5159
      %v5736 = vunpack.c.l.b16 %v5160
      %v5737 = vunpack.c.h.b16 %v5160
      %v5738 = vunpack.c.l.b16 %v5161
      %v5739 = vunpack.c.h.b16 %v5161
      %v5740 = vunpack.c.l.b16 %v5162
      %v5741 = vunpack.c.h.b16 %v5162
      %v5742 = vunpack.c.l.b16 %v5163
      %v5743 = vunpack.c.h.b16 %v5163
      %v5744 = vunpack.c.l.b16 %v5164
      %v5745 = vunpack.c.h.b16 %v5164
      %v5746 = vunpack.c.l.b16 %v5165
      %v5747 = vunpack.c.h.b16 %v5165
      %v5748 = vunpack.c.l.b16 %v5166
      %v5749 = vunpack.c.h.b16 %v5166
      %v5750 = vunpack.c.l.b16 %v5167
      %v5751 = vunpack.c.h.b16 %v5167
      %v5752 = vunpack.c.l.b16 %v5168
      %v5753 = vunpack.c.h.b16 %v5168
      %v5754 = vunpack.c.l.b16 %v5169
      %v5755 = vunpack.c.h.b16 %v5169
      %v5756 = vunpack.c.l.b16 %v5170
      %v5757 = vunpack.c.h.b16 %v5170
      %v5758 = vunpack.c.l.b16 %v5171
      %v5759 = vunpack.c.h.b16 %v5171
      %v5760 = vpack.c.b16 %v5368, %v5368
      %v5761 = vpack.c.b16 %v5369, %v5369
      %v5762 = vpack.c.b16 %v5370, %v5370
      %v5763 = vpack.c.b16 %v5371, %v5371
      %v5764 = vpack.c.b16 %v5372, %v5372
      %v5765 = vpack.c.b16 %v5373, %v5373
      %v5766 = vpack.c.b16 %v5374, %v5374
      %v5767 = vpack.c.b16 %v5375, %v5375
      %v5768 = vpack.c.b16 %v5376, %v5376
      %v5769 = vpack.c.b16 %v5377, %v5377
      %v5770 = vpack.c.b16 %v5378, %v5378
      %v5771 = vpack.c.b16 %v5379, %v5379
      %v5772 = vpack.c.b16 %v5380, %v5380
      %v5773 = vpack.c.b16 %v5381, %v5381
      %v5774 = vpack.c.b16 %v5382, %v5382
      %v5775 = vpack.c.b16 %v5383, %v5383
      %v5776 = vpack.c.b16 %v5384, %v5384
      %v5777 = vpack.c.b16 %v5385, %v5385
      %v5778 = vpack.c.b16 %v5386, %v5386
      %v5779 = vpack.c.b16 %v5387, %v5387
      %v5780 = vpack.c.b16 %v5388, %v5388
      %v5781 = vpack.c.b16 %v5389, %v5389
      %v5782 = vpack.c.b16 %v5390, %v5390
      %v5783 = vpack.c.b16 %v5391, %v5391
      %v5784 = vpack.c.b16 %v5392, %v5392
      %v5785 = vpack.c.b16 %v5393, %v5393
      %v5786 = vpack.c.b16 %v5394, %v5394
      %v5787 = vpack.c.b16 %v5395, %v5395
      %v5788 = vpack.c.b16 %v5396, %v5396
      %v5789 = vpack.c.b16 %v5397, %v5397
      %v5790 = vpack.c.b16 %v5398, %v5398
      %v5791 = vpack.c.b16 %v5399, %v5399
      %v5792 = vpack.c.b16 %v5400, %v5400
      %v5793 = vpack.c.b16 %v5401, %v5401
      %v5794 = vpack.c.b16 %v5402, %v5402
      %v5795 = vpack.c.b16 %v5403, %v5403
      %v5796 = vpack.c.b16 %v5404, %v5404
      %v5797 = vpack.c.b16 %v5405, %v5405
      %v5798 = vpack.c.b16 %v5406, %v5406
      %v5799 = vpack.c.b16 %v5407, %v5407
      %v5800 = vpack.c.b16 %v5408, %v5408
      %v5801 = vpack.c.b16 %v5409, %v5409
      %v5802 = vpack.c.b16 %v5410, %v5410
      %v5803 = vpack.c.b16 %v5411, %v5411
      %v5804 = vpack.c.b16 %v5412, %v5412
      %v5805 = vpack.c.b16 %v5413, %v5413
      %v5806 = vpack.c.b16 %v5414, %v5414
      %v5807 = vpack.c.b16 %v5415, %v5415
      %v5808 = vpack.c.b16 %v5416, %v5416
      %v5809 = vpack.c.b16 %v5417, %v5417
      %v5810 = vpack.c.b16 %v5418, %v5418
      %v5811 = vpack.c.b16 %v5419, %v5419
      %v5812 = vpack.c.b16 %v5420, %v5420
      %v5813 = vpack.c.b16 %v5421, %v5421
      %v5814 = vpack.c.b16 %v5422, %v5422
      %v5815 = vpack.c.b16 %v5423, %v5423
      %v5816 = vpack.c.b16 %v5424, %v5424
      %v5817 = vpack.c.b16 %v5425, %v5425
      %v5818 = vpack.c.b16 %v5426, %v5426
      %v5819 = vpack.c.b16 %v5427, %v5427
      %v5820 = vpack.c.b16 %v5428, %v5428
      %v5821 = vpack.c.b16 %v5429, %v5429
      %v5822 = vpack.c.b16 %v5430, %v5430
      %v5823 = vpack.c.b16 %v5431, %v5431
      %v5824 = vpack.c.b16 %v5432, %v5432
      %v5825 = vpack.c.b16 %v5433, %v5433
      %v5826 = vpack.c.b16 %v5434, %v5434
      %v5827 = vpack.c.b16 %v5435, %v5435
      %v5828 = vpack.c.b16 %v5436, %v5436
      %v5829 = vpack.c.b16 %v5437, %v5437
      %v5830 = vpack.c.b16 %v5438, %v5438
      %v5831 = vpack.c.b16 %v5439, %v5439
      %v5832 = vpack.c.b16 %v5440, %v5440
      %v5833 = vpack.c.b16 %v5441, %v5441
      %v5834 = vpack.c.b16 %v5442, %v5442
      %v5835 = vpack.c.b16 %v5443, %v5443
      %v5836 = vpack.c.b16 %v5444, %v5444
      %v5837 = vpack.c.b16 %v5445, %v5445
      %v5838 = vpack.c.b16 %v5446, %v5446
      %v5839 = vpack.c.b16 %v5447, %v5447
      %v5840 = vpack.c.b16 %v5448, %v5448
      %v5841 = vpack.c.b16 %v5449, %v5449
      %v5842 = vpack.c.b16 %v5450, %v5450
      %v5843 = vpack.c.b16 %v5451, %v5451
      %v5844 = vpack.c.b16 %v5452, %v5452
      %v5845 = vpack.c.b16 %v5453, %v5453
      %v5846 = vpack.c.b16 %v5454, %v5454
      %v5847 = vpack.c.b16 %v5455, %v5455
      %v5848 = vpack.c.b16 %v5456, %v5456
      %v5849 = vpack.c.b16 %v5457, %v5457
      %v5850 = vpack.c.b16 %v5458, %v5458
      %v5851 = vpack.c.b16 %v5459, %v5459
      %v5852 = vpack.c.b16 %v5460, %v5460
      %v5853 = vpack.c.b16 %v5461, %v5461
      %v5854 = vpack.c.b16 %v5462, %v5462
      %v5855 = vpack.c.b16 %v5463, %v5463
      %v5856 = vpack.c.b16 %v5464, %v5464
      %v5857 = vpack.c.b16 %v5465, %v5465
      %v5858 = vpack.c.b16 %v5466, %v5466
      %v5859 = vpack.c.b16 %v5467, %v5467
      %v5860 = vpack.c.b16 %v5468, %v5468
      %v5861 = vpack.c.b16 %v5469, %v5469
      %v5862 = vpack.c.b16 %v5470, %v5470
      %v5863 = vpack.c.b16 %v5471, %v5471
      %v5864 = vpack.c.b16 %v5472, %v5472
      %v5865 = vpack.c.b16 %v5473, %v5473
      %v5866 = vpack.c.b16 %v5474, %v5474
      %v5867 = vpack.c.b16 %v5475, %v5475
      %v5868 = vpack.c.b16 %v5476, %v5476
      %v5869 = vpack.c.b16 %v5477, %v5477
      %v5870 = vpack.c.b16 %v5478, %v5478
      %v5871 = vpack.c.b16 %v5479, %v5479
      %v5872 = vpack.c.b16 %v5480, %v5480
      %v5873 = vpack.c.b16 %v5481, %v5481
      %v5874 = vpack.c.b16 %v5482, %v5482
      %v5875 = vpack.c.b16 %v5483, %v5483
      %v5876 = vpack.c.b16 %v5484, %v5484
      %v5877 = vpack.c.b16 %v5485, %v5485
      %v5878 = vpack.c.b16 %v5486, %v5486
      %v5879 = vpack.c.b16 %v5487, %v5487
      %v5880 = vpack.c.b16 %v5488, %v5488
      %v5881 = vpack.c.b16 %v5489, %v5489
      %v5882 = vpack.c.b16 %v5490, %v5490
      %v5883 = vpack.c.b16 %v5491, %v5491
      %v5884 = vpack.c.b16 %v5492, %v5492
      %v5885 = vpack.c.b16 %v5493, %v5493
      %v5886 = vpack.c.b16 %v5494, %v5494
      %v5887 = vpack.c.b16 %v5495, %v5495
      %v5888 = vpack.c.b16 %v5496, %v5496
      %v5889 = vpack.c.b16 %v5497, %v5497
      %v5890 = vpack.c.b16 %v5498, %v5498
      %v5891 = vpack.c.b16 %v5499, %v5499
      %v5892 = vpack.c.b16 %v5500, %v5500
      %v5893 = vpack.c.b16 %v5501, %v5501
      %v5894 = vpack.c.b16 %v5502, %v5502
      %v5895 = vpack.c.b16 %v5503, %v5503
      %v5896 = vpack.c.b16 %v5504, %v5504
      %v5897 = vpack.c.b16 %v5505, %v5505
      %v5898 = vpack.c.b16 %v5506, %v5506
      %v5899 = vpack.c.b16 %v5507, %v5507
      %v5900 = vpack.c.b16 %v5508, %v5508
      %v5901 = vpack.c.b16 %v5509, %v5509
      %v5902 = vpack.c.b16 %v5510, %v5510
      %v5903 = vpack.c.b16 %v5511, %v5511
      %v5904 = vpack.c.b16 %v5512, %v5512
      %v5905 = vpack.c.b16 %v5513, %v5513
      %v5906 = vpack.c.b16 %v5514, %v5514
      %v5907 = vpack.c.b16 %v5515, %v5515
      %v5908 = vpack.c.b16 %v5516, %v5516
      %v5909 = vpack.c.b16 %v5517, %v5517
      %v5910 = vpack.c.b16 %v5518, %v5518
      %v5911 = vpack.c.b16 %v5519, %v5519
      %v5912 = vpack.c.b16 %v5520, %v5520
      %v5913 = vpack.c.b16 %v5521, %v5521
      %v5914 = vpack.c.b16 %v5522, %v5522
      %v5915 = vpack.c.b16 %v5523, %v5523
      %v5916 = vpack.c.b16 %v5524, %v5524
      %v5917 = vpack.c.b16 %v5525, %v5525
      %v5918 = vpack.c.b16 %v5526, %v5526
      %v5919 = vpack.c.b16 %v5527, %v5527
      %v5920 = vpack.c.b16 %v5528, %v5528
      %v5921 = vpack.c.b16 %v5529, %v5529
      %v5922 = vpack.c.b16 %v5530, %v5530
      %v5923 = vpack.c.b16 %v5531, %v5531
      %v5924 = vpack.c.b16 %v5532, %v5532
      %v5925 = vpack.c.b16 %v5533, %v5533
      %v5926 = vpack.c.b16 %v5534, %v5534
      %v5927 = vpack.c.b16 %v5535, %v5535
      %v5928 = vpack.c.b16 %v5536, %v5536
      %v5929 = vpack.c.b16 %v5537, %v5537
      %v5930 = vpack.c.b16 %v5538, %v5538
      %v5931 = vpack.c.b16 %v5539, %v5539
      %v5932 = vpack.c.b16 %v5540, %v5540
      %v5933 = vpack.c.b16 %v5541, %v5541
      %v5934 = vpack.c.b16 %v5542, %v5542
      %v5935 = vpack.c.b16 %v5543, %v5543
      %v5936 = vpack.c.b16 %v5544, %v5544
      %v5937 = vpack.c.b16 %v5545, %v5545
      %v5938 = vpack.c.b16 %v5546, %v5546
      %v5939 = vpack.c.b16 %v5547, %v5547
      %v5940 = vpack.c.b16 %v5548, %v5548
      %v5941 = vpack.c.b16 %v5549, %v5549
      %v5942 = vpack.c.b16 %v5550, %v5550
      %v5943 = vpack.c.b16 %v5551, %v5551
      %v5944 = vpack.c.b16 %v5552, %v5552
      %v5945 = vpack.c.b16 %v5553, %v5553
      %v5946 = vpack.c.b16 %v5554, %v5554
      %v5947 = vpack.c.b16 %v5555, %v5555
      %v5948 = vpack.c.b16 %v5556, %v5556
      %v5949 = vpack.c.b16 %v5557, %v5557
      %v5950 = vpack.c.b16 %v5558, %v5558
      %v5951 = vpack.c.b16 %v5559, %v5559
      %v5952 = vpack.c.b16 %v5560, %v5560
      %v5953 = vpack.c.b16 %v5561, %v5561
      %v5954 = vpack.c.b16 %v5562, %v5562
      %v5955 = vpack.c.b16 %v5563, %v5563
      %v5956 = vpack.c.b16 %v5564, %v5564
      %v5957 = vpack.c.b16 %v5565, %v5565
      %v5958 = vpack.c.b16 %v5566, %v5566
      %v5959 = vpack.c.b16 %v5567, %v5567
      %v5960 = vpack.c.b16 %v5568, %v5568
      %v5961 = vpack.c.b16 %v5569, %v5569
      %v5962 = vpack.c.b16 %v5570, %v5570
      %v5963 = vpack.c.b16 %v5571, %v5571
      %v5964 = vpack.c.b16 %v5572, %v5572
      %v5965 = vpack.c.b16 %v5573, %v5573
      %v5966 = vpack.c.b16 %v5574, %v5574
      %v5967 = vpack.c.b16 %v5575, %v5575
      %v5968 = vpack.c.b16 %v5576, %v5576
      %v5969 = vpack.c.b16 %v5577, %v5577
      %v5970 = vpack.c.b16 %v5578, %v5578
      %v5971 = vpack.c.b16 %v5579, %v5579
      %v5972 = vpack.c.b16 %v5580, %v5580
      %v5973 = vpack.c.b16 %v5581, %v5581
      %v5974 = vpack.c.b16 %v5582, %v5582
      %v5975 = vpack.c.b16 %v5583, %v5583
      %v5976 = vpack.c.b16 %v5584, %v5584
      %v5977 = vpack.c.b16 %v5585, %v5585
      %v5978 = vpack.c.b16 %v5586, %v5586
      %v5979 = vpack.c.b16 %v5587, %v5587
      %v5980 = vpack.c.b16 %v5588, %v5588
      %v5981 = vpack.c.b16 %v5589, %v5589
      %v5982 = vpack.c.b16 %v5590, %v5590
      %v5983 = vpack.c.b16 %v5591, %v5591
      %v5984 = vpack.c.b16 %v5592, %v5592
      %v5985 = vpack.c.b16 %v5593, %v5593
      %v5986 = vpack.c.b16 %v5594, %v5594
      %v5987 = vpack.c.b16 %v5595, %v5595
      %v5988 = vpack.c.b16 %v5596, %v5596
      %v5989 = vpack.c.b16 %v5597, %v5597
      %v5990 = vpack.c.b16 %v5598, %v5598
      %v5991 = vpack.c.b16 %v5599, %v5599
      %v5992 = vpack.c.b16 %v5600, %v5600
      %v5993 = vpack.c.b16 %v5601, %v5601
      %v5994 = vpack.c.b16 %v5602, %v5602
      %v5995 = vpack.c.b16 %v5603, %v5603
      %v5996 = vpack.c.b16 %v5604, %v5604
      %v5997 = vpack.c.b16 %v5605, %v5605
      %v5998 = vpack.c.b16 %v5606, %v5606
      %v5999 = vpack.c.b16 %v5607, %v5607
      %v6000 = vpack.c.b16 %v5608, %v5608
      %v6001 = vpack.c.b16 %v5609, %v5609
      %v6002 = vpack.c.b16 %v5610, %v5610
      %v6003 = vpack.c.b16 %v5611, %v5611
      %v6004 = vpack.c.b16 %v5612, %v5612
      %v6005 = vpack.c.b16 %v5613, %v5613
      %v6006 = vpack.c.b16 %v5614, %v5614
      %v6007 = vpack.c.b16 %v5615, %v5615
      %v6008 = vpack.c.b16 %v5616, %v5616
      %v6009 = vpack.c.b16 %v5617, %v5617
      %v6010 = vpack.c.b16 %v5618, %v5618
      %v6011 = vpack.c.b16 %v5619, %v5619
      %v6012 = vpack.c.b16 %v5620, %v5620
      %v6013 = vpack.c.b16 %v5621, %v5621
      %v6014 = vpack.c.b16 %v5622, %v5622
      %v6015 = vpack.c.b16 %v5623, %v5623
      %v6016 = vpack.c.b16 %v5624, %v5624
      %v6017 = vpack.c.b16 %v5625, %v5625
      %v6018 = vpack.c.b16 %v5626, %v5626
      %v6019 = vpack.c.b16 %v5627, %v5627
      %v6020 = vpack.c.b16 %v5628, %v5628
      %v6021 = vpack.c.b16 %v5629, %v5629
      %v6022 = vpack.c.b16 %v5630, %v5630
      %v6023 = vpack.c.b16 %v5631, %v5631
      %v6024 = vpack.c.b16 %v5632, %v5632
      %v6025 = vpack.c.b16 %v5633, %v5633
      %v6026 = vpack.c.b16 %v5634, %v5634
      %v6027 = vpack.c.b16 %v5635, %v5635
      %v6028 = vpack.c.b16 %v5636, %v5636
      %v6029 = vpack.c.b16 %v5637, %v5637
      %v6030 = vpack.c.b16 %v5638, %v5638
      %v6031 = vpack.c.b16 %v5639, %v5639
      %v6032 = vpack.c.b16 %v5640, %v5640
      %v6033 = vpack.c.b16 %v5641, %v5641
      %v6034 = vpack.c.b16 %v5642, %v5642
      %v6035 = vpack.c.b16 %v5643, %v5643
      %v6036 = vpack.c.b16 %v5644, %v5644
      %v6037 = vpack.c.b16 %v5645, %v5645
      %v6038 = vpack.c.b16 %v5646, %v5646
      %v6039 = vpack.c.b16 %v5647, %v5647
      %v6040 = vpack.c.b16 %v5648, %v5648
      %v6041 = vpack.c.b16 %v5649, %v5649
      %v6042 = vpack.c.b16 %v5650, %v5650
      %v6043 = vpack.c.b16 %v5651, %v5651
      %v6044 = vpack.c.b16 %v5652, %v5652
      %v6045 = vpack.c.b16 %v5653, %v5653
      %v6046 = vpack.c.b16 %v5654, %v5654
      %v6047 = vpack.c.b16 %v5655, %v5655
      %v6048 = vpack.c.b16 %v5656, %v5656
      %v6049 = vpack.c.b16 %v5657, %v5657
      %v6050 = vpack.c.b16 %v5658, %v5658
      %v6051 = vpack.c.b16 %v5659, %v5659
      %v6052 = vpack.c.b16 %v5660, %v5660
      %v6053 = vpack.c.b16 %v5661, %v5661
      %v6054 = vpack.c.b16 %v5662, %v5662
      %v6055 = vpack.c.b16 %v5663, %v5663
      %v6056 = vpack.c.b16 %v5664, %v5664
      %v6057 = vpack.c.b16 %v5665, %v5665
      %v6058 = vpack.c.b16 %v5666, %v5666
      %v6059 = vpack.c.b16 %v5667, %v5667
      %v6060 = vpack.c.b16 %v5668, %v5668
      %v6061 = vpack.c.b16 %v5669, %v5669
      %v6062 = vpack.c.b16 %v5670, %v5670
      %v6063 = vpack.c.b16 %v5671, %v5671
      %v6064 = vpack.c.b16 %v5672, %v5672
      %v6065 = vpack.c.b16 %v5673, %v5673
      %v6066 = vpack.c.b16 %v5674, %v5674
      %v6067 = vpack.c.b16 %v5675, %v5675
      %v6068 = vpack.c.b16 %v5676, %v5676
      %v6069 = vpack.c.b16 %v5677, %v5677
      %v6070 = vpack.c.b16 %v5678, %v5678
      %v6071 = vpack.c.b16 %v5679, %v5679
      %v6072 = vpack.c.b16 %v5680, %v5680
      %v6073 = vpack.c.b16 %v5681, %v5681
      %v6074 = vpack.c.b16 %v5682, %v5682
      %v6075 = vpack.c.b16 %v5683, %v5683
      %v6076 = vpack.c.b16 %v5684, %v5684
      %v6077 = vpack.c.b16 %v5685, %v5685
      %v6078 = vpack.c.b16 %v5686, %v5686
      %v6079 = vpack.c.b16 %v5687, %v5687
      %v6080 = vpack.c.b16 %v5688, %v5688
      %v6081 = vpack.c.b16 %v5689, %v5689
      %v6082 = vpack.c.b16 %v5690, %v5690
      %v6083 = vpack.c.b16 %v5691, %v5691
      %v6084 = vpack.c.b16 %v5692, %v5692
      %v6085 = vpack.c.b16 %v5693, %v5693
      %v6086 = vpack.c.b16 %v5694, %v5694
      %v6087 = vpack.c.b16 %v5695, %v5695
      %v6088 = vpack.c.b16 %v5696, %v5696
      %v6089 = vpack.c.b16 %v5697, %v5697
      %v6090 = vpack.c.b16 %v5698, %v5698
      %v6091 = vpack.c.b16 %v5699, %v5699
      %v6092 = vpack.c.b16 %v5700, %v5700
      %v6093 = vpack.c.b16 %v5701, %v5701
      %v6094 = vpack.c.b16 %v5702, %v5702
      %v6095 = vpack.c.b16 %v5703, %v5703
      %v6096 = vpack.c.b16 %v5704, %v5704
      %v6097 = vpack.c.b16 %v5705, %v5705
      %v6098 = vpack.c.b16 %v5706, %v5706
      %v6099 = vpack.c.b16 %v5707, %v5707
      %v6100 = vpack.c.b16 %v5708, %v5708
      %v6101 = vpack.c.b16 %v5709, %v5709
      %v6102 = vpack.c.b16 %v5710, %v5710
      %v6103 = vpack.c.b16 %v5711, %v5711
      %v6104 = vpack.c.b16 %v5712, %v5712
      %v6105 = vpack.c.b16 %v5713, %v5713
      %v6106 = vpack.c.b16 %v5714, %v5714
      %v6107 = vpack.c.b16 %v5715, %v5715
      %v6108 = vpack.c.b16 %v5716, %v5716
      %v6109 = vpack.c.b16 %v5717, %v5717
      %v6110 = vpack.c.b16 %v5718, %v5718
      %v6111 = vpack.c.b16 %v5719, %v5719
      %v6112 = vpack.c.b16 %v5720, %v5720
      %v6113 = vpack.c.b16 %v5721, %v5721
      %v6114 = vpack.c.b16 %v5722, %v5722
      %v6115 = vpack.c.b16 %v5723, %v5723
      %v6116 = vpack.c.b16 %v5724, %v5724
      %v6117 = vpack.c.b16 %v5725, %v5725
      %v6118 = vpack.c.b16 %v5726, %v5726
      %v6119 = vpack.c.b16 %v5727, %v5727
      %v6120 = vpack.c.b16 %v5728, %v5728
      %v6121 = vpack.c.b16 %v5729, %v5729
      %v6122 = vpack.c.b16 %v5730, %v5730
      %v6123 = vpack.c.b16 %v5731, %v5731
      %v6124 = vpack.c.b16 %v5732, %v5732
      %v6125 = vpack.c.b16 %v5733, %v5733
      %v6126 = vpack.c.b16 %v5734, %v5734
      %v6127 = vpack.c.b16 %v5735, %v5735
      %v6128 = vpack.c.b16 %v5736, %v5736
      %v6129 = vpack.c.b16 %v5737, %v5737
      %v6130 = vpack.c.b16 %v5738, %v5738
      %v6131 = vpack.c.b16 %v5739, %v5739
      %v6132 = vpack.c.b16 %v5740, %v5740
      %v6133 = vpack.c.b16 %v5741, %v5741
      %v6134 = vpack.c.b16 %v5742, %v5742
      %v6135 = vpack.c.b16 %v5743, %v5743
      %v6136 = vpack.c.b16 %v5744, %v5744
      %v6137 = vpack.c.b16 %v5745, %v5745
      %v6138 = vpack.c.b16 %v5746, %v5746
      %v6139 = vpack.c.b16 %v5747, %v5747
      %v6140 = vpack.c.b16 %v5748, %v5748
      %v6141 = vpack.c.b16 %v5749, %v5749
      %v6142 = vpack.c.b16 %v5750, %v5750
      %v6143 = vpack.c.b16 %v5751, %v5751
      %v6144 = vpack.c.b16 %v5752, %v5752
      %v6145 = vpack.c.b16 %v5753, %v5753
      %v6146 = vpack.c.b16 %v5754, %v5754
      %v6147 = vpack.c.b16 %v5755, %v5755
      %v6148 = vpack.c.b16 %v5756, %v5756
      %v6149 = vpack.c.b16 %v5757, %v5757
      %v6150 = vpack.c.b16 %v5758, %v5758
      %v6151 = vpack.c.b16 %v5759, %v5759
      %vm6544 = vcmask 191488
      %6545 = vst.msk [vmem:[%s199] sm:$0xf] %vm6544, %v5760
      %6546 = vst.msk [vmem:[%s199 + $0x4] sm:$0xf] %vm6544, %v5761
      %6547 = vst.msk [vmem:[%s199 + $0x8] sm:$0xf] %vm6544, %v5762
      %6548 = vst.msk [vmem:[%s199 + $0xc] sm:$0xf] %vm6544, %v5763
      %6549 = vst.msk [vmem:[%s199 + $0x10] sm:$0xf] %vm6544, %v5764
      %6550 = vst.msk [vmem:[%s199 + $0x14] sm:$0xf] %vm6544, %v5765
      %6551 = vst.msk [vmem:[%s199 + $0x18] sm:$0xf] %vm6544, %v5766
      %6552 = vst.msk [vmem:[%s199 + $0x1c] sm:$0xf] %vm6544, %v5767
      %6553 = vst.msk [vmem:[%s199 + $0x20] sm:$0xf] %vm6544, %v5768
      %6554 = vst.msk [vmem:[%s199 + $0x24] sm:$0xf] %vm6544, %v5769
      %6555 = vst.msk [vmem:[%s199 + $0x28] sm:$0xf] %vm6544, %v5770
      %6556 = vst.msk [vmem:[%s199 + $0x2c] sm:$0xf] %vm6544, %v5771
      %6557 = vst.msk [vmem:[%s199 + $0x30] sm:$0xf] %vm6544, %v5772
      %6558 = vst.msk [vmem:[%s199 + $0x34] sm:$0xf] %vm6544, %v5773
      %6559 = vst.msk [vmem:[%s199 + $0x38] sm:$0xf] %vm6544, %v5774
      %6560 = vst.msk [vmem:[%s199 + $0x3c] sm:$0xf] %vm6544, %v5775
      %6561 = vst.msk [vmem:[%s199 + $0x40] sm:$0xf] %vm6544, %v5776
      %6562 = vst.msk [vmem:[%s199 + $0x44] sm:$0xf] %vm6544, %v5777
      %6563 = vst.msk [vmem:[%s199 + $0x48] sm:$0xf] %vm6544, %v5778
      %6564 = vst.msk [vmem:[%s199 + $0x4c] sm:$0xf] %vm6544, %v5779
      %6565 = vst.msk [vmem:[%s199 + $0x50] sm:$0xf] %vm6544, %v5780
      %6566 = vst.msk [vmem:[%s199 + $0x54] sm:$0xf] %vm6544, %v5781
      %6567 = vst.msk [vmem:[%s199 + $0x58] sm:$0xf] %vm6544, %v5782
      %6568 = vst.msk [vmem:[%s199 + $0x5c] sm:$0xf] %vm6544, %v5783
      %6569 = vst.msk [vmem:[%s199 + $0x60] sm:$0xf] %vm6544, %v5784
      %6570 = vst.msk [vmem:[%s199 + $0x64] sm:$0xf] %vm6544, %v5785
      %6571 = vst.msk [vmem:[%s199 + $0x68] sm:$0xf] %vm6544, %v5786
      %6572 = vst.msk [vmem:[%s199 + $0x6c] sm:$0xf] %vm6544, %v5787
      %6573 = vst.msk [vmem:[%s199 + $0x70] sm:$0xf] %vm6544, %v5788
      %6574 = vst.msk [vmem:[%s199 + $0x74] sm:$0xf] %vm6544, %v5789
      %6575 = vst.msk [vmem:[%s199 + $0x78] sm:$0xf] %vm6544, %v5790
      %6576 = vst.msk [vmem:[%s199 + $0x7c] sm:$0xf] %vm6544, %v5791
      %6577 = vst.msk [vmem:[%s199 + $0x80] sm:$0xf] %vm6544, %v5792
      %6578 = vst.msk [vmem:[%s199 + $0x84] sm:$0xf] %vm6544, %v5793
      %6579 = vst.msk [vmem:[%s199 + $0x88] sm:$0xf] %vm6544, %v5794
      %6580 = vst.msk [vmem:[%s199 + $0x8c] sm:$0xf] %vm6544, %v5795
      %6581 = vst.msk [vmem:[%s199 + $0x90] sm:$0xf] %vm6544, %v5796
      %6582 = vst.msk [vmem:[%s199 + $0x94] sm:$0xf] %vm6544, %v5797
      %6583 = vst.msk [vmem:[%s199 + $0x98] sm:$0xf] %vm6544, %v5798
      %6584 = vst.msk [vmem:[%s199 + $0x9c] sm:$0xf] %vm6544, %v5799
      %6585 = vst.msk [vmem:[%s199 + $0xa0] sm:$0xf] %vm6544, %v5800
      %6586 = vst.msk [vmem:[%s199 + $0xa4] sm:$0xf] %vm6544, %v5801
      %6587 = vst.msk [vmem:[%s199 + $0xa8] sm:$0xf] %vm6544, %v5802
      %6588 = vst.msk [vmem:[%s199 + $0xac] sm:$0xf] %vm6544, %v5803
      %6589 = vst.msk [vmem:[%s199 + $0xb0] sm:$0xf] %vm6544, %v5804
      %6590 = vst.msk [vmem:[%s199 + $0xb4] sm:$0xf] %vm6544, %v5805
      %6591 = vst.msk [vmem:[%s199 + $0xb8] sm:$0xf] %vm6544, %v5806
      %6592 = vst.msk [vmem:[%s199 + $0xbc] sm:$0xf] %vm6544, %v5807
      %6593 = vst.msk [vmem:[%s199 + $0xc0] sm:$0xf] %vm6544, %v5808
      %6594 = vst.msk [vmem:[%s199 + $0xc4] sm:$0xf] %vm6544, %v5809
      %6595 = vst.msk [vmem:[%s199 + $0xc8] sm:$0xf] %vm6544, %v5810
      %6596 = vst.msk [vmem:[%s199 + $0xcc] sm:$0xf] %vm6544, %v5811
      %6597 = vst.msk [vmem:[%s199 + $0xd0] sm:$0xf] %vm6544, %v5812
      %6598 = vst.msk [vmem:[%s199 + $0xd4] sm:$0xf] %vm6544, %v5813
      %6599 = vst.msk [vmem:[%s199 + $0xd8] sm:$0xf] %vm6544, %v5814
      %6600 = vst.msk [vmem:[%s199 + $0xdc] sm:$0xf] %vm6544, %v5815
      %6601 = vst.msk [vmem:[%s199 + $0xe0] sm:$0xf] %vm6544, %v5816
      %6602 = vst.msk [vmem:[%s199 + $0xe4] sm:$0xf] %vm6544, %v5817
      %6603 = vst.msk [vmem:[%s199 + $0xe8] sm:$0xf] %vm6544, %v5818
      %6604 = vst.msk [vmem:[%s199 + $0xec] sm:$0xf] %vm6544, %v5819
      %6605 = vst.msk [vmem:[%s199 + $0xf0] sm:$0xf] %vm6544, %v5820
      %6606 = vst.msk [vmem:[%s199 + $0xf4] sm:$0xf] %vm6544, %v5821
      %6607 = vst.msk [vmem:[%s199 + $0xf8] sm:$0xf] %vm6544, %v5822
      %6608 = vst.msk [vmem:[%s199 + $0xfc] sm:$0xf] %vm6544, %v5823
      %6609 = vst.msk [vmem:[%s199 + $0x100] sm:$0xf] %vm6544, %v5824
      %6610 = vst.msk [vmem:[%s199 + $0x104] sm:$0xf] %vm6544, %v5825
      %6611 = vst.msk [vmem:[%s199 + $0x108] sm:$0xf] %vm6544, %v5826
      %6612 = vst.msk [vmem:[%s199 + $0x10c] sm:$0xf] %vm6544, %v5827
      %6613 = vst.msk [vmem:[%s199 + $0x110] sm:$0xf] %vm6544, %v5828
      %6614 = vst.msk [vmem:[%s199 + $0x114] sm:$0xf] %vm6544, %v5829
      %6615 = vst.msk [vmem:[%s199 + $0x118] sm:$0xf] %vm6544, %v5830
      %6616 = vst.msk [vmem:[%s199 + $0x11c] sm:$0xf] %vm6544, %v5831
      %6617 = vst.msk [vmem:[%s199 + $0x120] sm:$0xf] %vm6544, %v5832
      %6618 = vst.msk [vmem:[%s199 + $0x124] sm:$0xf] %vm6544, %v5833
      %6619 = vst.msk [vmem:[%s199 + $0x128] sm:$0xf] %vm6544, %v5834
      %6620 = vst.msk [vmem:[%s199 + $0x12c] sm:$0xf] %vm6544, %v5835
      %6621 = vst.msk [vmem:[%s199 + $0x130] sm:$0xf] %vm6544, %v5836
      %6622 = vst.msk [vmem:[%s199 + $0x134] sm:$0xf] %vm6544, %v5837
      %6623 = vst.msk [vmem:[%s199 + $0x138] sm:$0xf] %vm6544, %v5838
      %6624 = vst.msk [vmem:[%s199 + $0x13c] sm:$0xf] %vm6544, %v5839
      %6625 = vst.msk [vmem:[%s199 + $0x140] sm:$0xf] %vm6544, %v5840
      %6626 = vst.msk [vmem:[%s199 + $0x144] sm:$0xf] %vm6544, %v5841
      %6627 = vst.msk [vmem:[%s199 + $0x148] sm:$0xf] %vm6544, %v5842
      %6628 = vst.msk [vmem:[%s199 + $0x14c] sm:$0xf] %vm6544, %v5843
      %6629 = vst.msk [vmem:[%s199 + $0x150] sm:$0xf] %vm6544, %v5844
      %6630 = vst.msk [vmem:[%s199 + $0x154] sm:$0xf] %vm6544, %v5845
      %6631 = vst.msk [vmem:[%s199 + $0x158] sm:$0xf] %vm6544, %v5846
      %6632 = vst.msk [vmem:[%s199 + $0x15c] sm:$0xf] %vm6544, %v5847
      %6633 = vst.msk [vmem:[%s199 + $0x160] sm:$0xf] %vm6544, %v5848
      %6634 = vst.msk [vmem:[%s199 + $0x164] sm:$0xf] %vm6544, %v5849
      %6635 = vst.msk [vmem:[%s199 + $0x168] sm:$0xf] %vm6544, %v5850
      %6636 = vst.msk [vmem:[%s199 + $0x16c] sm:$0xf] %vm6544, %v5851
      %6637 = vst.msk [vmem:[%s199 + $0x170] sm:$0xf] %vm6544, %v5852
      %6638 = vst.msk [vmem:[%s199 + $0x174] sm:$0xf] %vm6544, %v5853
      %6639 = vst.msk [vmem:[%s199 + $0x178] sm:$0xf] %vm6544, %v5854
      %6640 = vst.msk [vmem:[%s199 + $0x17c] sm:$0xf] %vm6544, %v5855
      %6641 = vst.msk [vmem:[%s199 + $0x180] sm:$0xf] %vm6544, %v5856
      %6642 = vst.msk [vmem:[%s199 + $0x184] sm:$0xf] %vm6544, %v5857
      %6643 = vst.msk [vmem:[%s199 + $0x188] sm:$0xf] %vm6544, %v5858
      %6644 = vst.msk [vmem:[%s199 + $0x18c] sm:$0xf] %vm6544, %v5859
      %6645 = vst.msk [vmem:[%s199 + $0x190] sm:$0xf] %vm6544, %v5860
      %6646 = vst.msk [vmem:[%s199 + $0x194] sm:$0xf] %vm6544, %v5861
      %6647 = vst.msk [vmem:[%s199 + $0x198] sm:$0xf] %vm6544, %v5862
      %6648 = vst.msk [vmem:[%s199 + $0x19c] sm:$0xf] %vm6544, %v5863
      %6649 = vst.msk [vmem:[%s199 + $0x1a0] sm:$0xf] %vm6544, %v5864
      %6650 = vst.msk [vmem:[%s199 + $0x1a4] sm:$0xf] %vm6544, %v5865
      %6651 = vst.msk [vmem:[%s199 + $0x1a8] sm:$0xf] %vm6544, %v5866
      %6652 = vst.msk [vmem:[%s199 + $0x1ac] sm:$0xf] %vm6544, %v5867
      %6653 = vst.msk [vmem:[%s199 + $0x1b0] sm:$0xf] %vm6544, %v5868
      %6654 = vst.msk [vmem:[%s199 + $0x1b4] sm:$0xf] %vm6544, %v5869
      %6655 = vst.msk [vmem:[%s199 + $0x1b8] sm:$0xf] %vm6544, %v5870
      %6656 = vst.msk [vmem:[%s199 + $0x1bc] sm:$0xf] %vm6544, %v5871
      %6657 = vst.msk [vmem:[%s199 + $0x1c0] sm:$0xf] %vm6544, %v5872
      %6658 = vst.msk [vmem:[%s199 + $0x1c4] sm:$0xf] %vm6544, %v5873
      %6659 = vst.msk [vmem:[%s199 + $0x1c8] sm:$0xf] %vm6544, %v5874
      %6660 = vst.msk [vmem:[%s199 + $0x1cc] sm:$0xf] %vm6544, %v5875
      %6661 = vst.msk [vmem:[%s199 + $0x1d0] sm:$0xf] %vm6544, %v5876
      %6662 = vst.msk [vmem:[%s199 + $0x1d4] sm:$0xf] %vm6544, %v5877
      %6663 = vst.msk [vmem:[%s199 + $0x1d8] sm:$0xf] %vm6544, %v5878
      %6664 = vst.msk [vmem:[%s199 + $0x1dc] sm:$0xf] %vm6544, %v5879
      %6665 = vst.msk [vmem:[%s199 + $0x1e0] sm:$0xf] %vm6544, %v5880
      %6666 = vst.msk [vmem:[%s199 + $0x1e4] sm:$0xf] %vm6544, %v5881
      %6667 = vst.msk [vmem:[%s199 + $0x1e8] sm:$0xf] %vm6544, %v5882
      %6668 = vst.msk [vmem:[%s199 + $0x1ec] sm:$0xf] %vm6544, %v5883
      %6669 = vst.msk [vmem:[%s199 + $0x1f0] sm:$0xf] %vm6544, %v5884
      %6670 = vst.msk [vmem:[%s199 + $0x1f4] sm:$0xf] %vm6544, %v5885
      %6671 = vst.msk [vmem:[%s199 + $0x1f8] sm:$0xf] %vm6544, %v5886
      %6672 = vst.msk [vmem:[%s199 + $0x1fc] sm:$0xf] %vm6544, %v5887
      %6673 = vst.msk [vmem:[%s199 + $0x200] sm:$0xf] %vm6544, %v5888
      %6674 = vst.msk [vmem:[%s199 + $0x204] sm:$0xf] %vm6544, %v5889
      %6675 = vst.msk [vmem:[%s199 + $0x208] sm:$0xf] %vm6544, %v5890
      %6676 = vst.msk [vmem:[%s199 + $0x20c] sm:$0xf] %vm6544, %v5891
      %6677 = vst.msk [vmem:[%s199 + $0x210] sm:$0xf] %vm6544, %v5892
      %6678 = vst.msk [vmem:[%s199 + $0x214] sm:$0xf] %vm6544, %v5893
      %6679 = vst.msk [vmem:[%s199 + $0x218] sm:$0xf] %vm6544, %v5894
      %6680 = vst.msk [vmem:[%s199 + $0x21c] sm:$0xf] %vm6544, %v5895
      %6681 = vst.msk [vmem:[%s199 + $0x220] sm:$0xf] %vm6544, %v5896
      %6682 = vst.msk [vmem:[%s199 + $0x224] sm:$0xf] %vm6544, %v5897
      %6683 = vst.msk [vmem:[%s199 + $0x228] sm:$0xf] %vm6544, %v5898
      %6684 = vst.msk [vmem:[%s199 + $0x22c] sm:$0xf] %vm6544, %v5899
      %6685 = vst.msk [vmem:[%s199 + $0x230] sm:$0xf] %vm6544, %v5900
      %6686 = vst.msk [vmem:[%s199 + $0x234] sm:$0xf] %vm6544, %v5901
      %6687 = vst.msk [vmem:[%s199 + $0x238] sm:$0xf] %vm6544, %v5902
      %6688 = vst.msk [vmem:[%s199 + $0x23c] sm:$0xf] %vm6544, %v5903
      %6689 = vst.msk [vmem:[%s199 + $0x240] sm:$0xf] %vm6544, %v5904
      %6690 = vst.msk [vmem:[%s199 + $0x244] sm:$0xf] %vm6544, %v5905
      %6691 = vst.msk [vmem:[%s199 + $0x248] sm:$0xf] %vm6544, %v5906
      %6692 = vst.msk [vmem:[%s199 + $0x24c] sm:$0xf] %vm6544, %v5907
      %6693 = vst.msk [vmem:[%s199 + $0x250] sm:$0xf] %vm6544, %v5908
      %6694 = vst.msk [vmem:[%s199 + $0x254] sm:$0xf] %vm6544, %v5909
      %6695 = vst.msk [vmem:[%s199 + $0x258] sm:$0xf] %vm6544, %v5910
      %6696 = vst.msk [vmem:[%s199 + $0x25c] sm:$0xf] %vm6544, %v5911
      %6697 = vst.msk [vmem:[%s199 + $0x260] sm:$0xf] %vm6544, %v5912
      %6698 = vst.msk [vmem:[%s199 + $0x264] sm:$0xf] %vm6544, %v5913
      %6699 = vst.msk [vmem:[%s199 + $0x268] sm:$0xf] %vm6544, %v5914
      %6700 = vst.msk [vmem:[%s199 + $0x26c] sm:$0xf] %vm6544, %v5915
      %6701 = vst.msk [vmem:[%s199 + $0x270] sm:$0xf] %vm6544, %v5916
      %6702 = vst.msk [vmem:[%s199 + $0x274] sm:$0xf] %vm6544, %v5917
      %6703 = vst.msk [vmem:[%s199 + $0x278] sm:$0xf] %vm6544, %v5918
      %6704 = vst.msk [vmem:[%s199 + $0x27c] sm:$0xf] %vm6544, %v5919
      %6705 = vst.msk [vmem:[%s199 + $0x280] sm:$0xf] %vm6544, %v5920
      %6706 = vst.msk [vmem:[%s199 + $0x284] sm:$0xf] %vm6544, %v5921
      %6707 = vst.msk [vmem:[%s199 + $0x288] sm:$0xf] %vm6544, %v5922
      %6708 = vst.msk [vmem:[%s199 + $0x28c] sm:$0xf] %vm6544, %v5923
      %6709 = vst.msk [vmem:[%s199 + $0x290] sm:$0xf] %vm6544, %v5924
      %6710 = vst.msk [vmem:[%s199 + $0x294] sm:$0xf] %vm6544, %v5925
      %6711 = vst.msk [vmem:[%s199 + $0x298] sm:$0xf] %vm6544, %v5926
      %6712 = vst.msk [vmem:[%s199 + $0x29c] sm:$0xf] %vm6544, %v5927
      %6713 = vst.msk [vmem:[%s199 + $0x2a0] sm:$0xf] %vm6544, %v5928
      %6714 = vst.msk [vmem:[%s199 + $0x2a4] sm:$0xf] %vm6544, %v5929
      %6715 = vst.msk [vmem:[%s199 + $0x2a8] sm:$0xf] %vm6544, %v5930
      %6716 = vst.msk [vmem:[%s199 + $0x2ac] sm:$0xf] %vm6544, %v5931
      %6717 = vst.msk [vmem:[%s199 + $0x2b0] sm:$0xf] %vm6544, %v5932
      %6718 = vst.msk [vmem:[%s199 + $0x2b4] sm:$0xf] %vm6544, %v5933
      %6719 = vst.msk [vmem:[%s199 + $0x2b8] sm:$0xf] %vm6544, %v5934
      %6720 = vst.msk [vmem:[%s199 + $0x2bc] sm:$0xf] %vm6544, %v5935
      %6721 = vst.msk [vmem:[%s199 + $0x2c0] sm:$0xf] %vm6544, %v5936
      %6722 = vst.msk [vmem:[%s199 + $0x2c4] sm:$0xf] %vm6544, %v5937
      %6723 = vst.msk [vmem:[%s199 + $0x2c8] sm:$0xf] %vm6544, %v5938
      %6724 = vst.msk [vmem:[%s199 + $0x2cc] sm:$0xf] %vm6544, %v5939
      %6725 = vst.msk [vmem:[%s199 + $0x2d0] sm:$0xf] %vm6544, %v5940
      %6726 = vst.msk [vmem:[%s199 + $0x2d4] sm:$0xf] %vm6544, %v5941
      %6727 = vst.msk [vmem:[%s199 + $0x2d8] sm:$0xf] %vm6544, %v5942
      %6728 = vst.msk [vmem:[%s199 + $0x2dc] sm:$0xf] %vm6544, %v5943
      %6729 = vst.msk [vmem:[%s199 + $0x2e0] sm:$0xf] %vm6544, %v5944
      %6730 = vst.msk [vmem:[%s199 + $0x2e4] sm:$0xf] %vm6544, %v5945
      %6731 = vst.msk [vmem:[%s199 + $0x2e8] sm:$0xf] %vm6544, %v5946
      %6732 = vst.msk [vmem:[%s199 + $0x2ec] sm:$0xf] %vm6544, %v5947
      %6733 = vst.msk [vmem:[%s199 + $0x2f0] sm:$0xf] %vm6544, %v5948
      %6734 = vst.msk [vmem:[%s199 + $0x2f4] sm:$0xf] %vm6544, %v5949
      %6735 = vst.msk [vmem:[%s199 + $0x2f8] sm:$0xf] %vm6544, %v5950
      %6736 = vst.msk [vmem:[%s199 + $0x2fc] sm:$0xf] %vm6544, %v5951
      %6737 = vst.msk [vmem:[%s199 + $0x300] sm:$0xf] %vm6544, %v5952
      %6738 = vst.msk [vmem:[%s199 + $0x304] sm:$0xf] %vm6544, %v5953
      %6739 = vst.msk [vmem:[%s199 + $0x308] sm:$0xf] %vm6544, %v5954
      %6740 = vst.msk [vmem:[%s199 + $0x30c] sm:$0xf] %vm6544, %v5955
      %6741 = vst.msk [vmem:[%s199 + $0x310] sm:$0xf] %vm6544, %v5956
      %6742 = vst.msk [vmem:[%s199 + $0x314] sm:$0xf] %vm6544, %v5957
      %6743 = vst.msk [vmem:[%s199 + $0x318] sm:$0xf] %vm6544, %v5958
      %6744 = vst.msk [vmem:[%s199 + $0x31c] sm:$0xf] %vm6544, %v5959
      %6745 = vst.msk [vmem:[%s199 + $0x320] sm:$0xf] %vm6544, %v5960
      %6746 = vst.msk [vmem:[%s199 + $0x324] sm:$0xf] %vm6544, %v5961
      %6747 = vst.msk [vmem:[%s199 + $0x328] sm:$0xf] %vm6544, %v5962
      %6748 = vst.msk [vmem:[%s199 + $0x32c] sm:$0xf] %vm6544, %v5963
      %6749 = vst.msk [vmem:[%s199 + $0x330] sm:$0xf] %vm6544, %v5964
      %6750 = vst.msk [vmem:[%s199 + $0x334] sm:$0xf] %vm6544, %v5965
      %6751 = vst.msk [vmem:[%s199 + $0x338] sm:$0xf] %vm6544, %v5966
      %6752 = vst.msk [vmem:[%s199 + $0x33c] sm:$0xf] %vm6544, %v5967
      %6753 = vst.msk [vmem:[%s199 + $0x340] sm:$0xf] %vm6544, %v5968
      %6754 = vst.msk [vmem:[%s199 + $0x344] sm:$0xf] %vm6544, %v5969
      %6755 = vst.msk [vmem:[%s199 + $0x348] sm:$0xf] %vm6544, %v5970
      %6756 = vst.msk [vmem:[%s199 + $0x34c] sm:$0xf] %vm6544, %v5971
      %6757 = vst.msk [vmem:[%s199 + $0x350] sm:$0xf] %vm6544, %v5972
      %6758 = vst.msk [vmem:[%s199 + $0x354] sm:$0xf] %vm6544, %v5973
      %6759 = vst.msk [vmem:[%s199 + $0x358] sm:$0xf] %vm6544, %v5974
      %6760 = vst.msk [vmem:[%s199 + $0x35c] sm:$0xf] %vm6544, %v5975
      %6761 = vst.msk [vmem:[%s199 + $0x360] sm:$0xf] %vm6544, %v5976
      %6762 = vst.msk [vmem:[%s199 + $0x364] sm:$0xf] %vm6544, %v5977
      %6763 = vst.msk [vmem:[%s199 + $0x368] sm:$0xf] %vm6544, %v5978
      %6764 = vst.msk [vmem:[%s199 + $0x36c] sm:$0xf] %vm6544, %v5979
      %6765 = vst.msk [vmem:[%s199 + $0x370] sm:$0xf] %vm6544, %v5980
      %6766 = vst.msk [vmem:[%s199 + $0x374] sm:$0xf] %vm6544, %v5981
      %6767 = vst.msk [vmem:[%s199 + $0x378] sm:$0xf] %vm6544, %v5982
      %6768 = vst.msk [vmem:[%s199 + $0x37c] sm:$0xf] %vm6544, %v5983
      %6769 = vst.msk [vmem:[%s199 + $0x380] sm:$0xf] %vm6544, %v5984
      %6770 = vst.msk [vmem:[%s199 + $0x384] sm:$0xf] %vm6544, %v5985
      %6771 = vst.msk [vmem:[%s199 + $0x388] sm:$0xf] %vm6544, %v5986
      %6772 = vst.msk [vmem:[%s199 + $0x38c] sm:$0xf] %vm6544, %v5987
      %6773 = vst.msk [vmem:[%s199 + $0x390] sm:$0xf] %vm6544, %v5988
      %6774 = vst.msk [vmem:[%s199 + $0x394] sm:$0xf] %vm6544, %v5989
      %6775 = vst.msk [vmem:[%s199 + $0x398] sm:$0xf] %vm6544, %v5990
      %6776 = vst.msk [vmem:[%s199 + $0x39c] sm:$0xf] %vm6544, %v5991
      %6777 = vst.msk [vmem:[%s199 + $0x3a0] sm:$0xf] %vm6544, %v5992
      %6778 = vst.msk [vmem:[%s199 + $0x3a4] sm:$0xf] %vm6544, %v5993
      %6779 = vst.msk [vmem:[%s199 + $0x3a8] sm:$0xf] %vm6544, %v5994
      %6780 = vst.msk [vmem:[%s199 + $0x3ac] sm:$0xf] %vm6544, %v5995
      %6781 = vst.msk [vmem:[%s199 + $0x3b0] sm:$0xf] %vm6544, %v5996
      %6782 = vst.msk [vmem:[%s199 + $0x3b4] sm:$0xf] %vm6544, %v5997
      %6783 = vst.msk [vmem:[%s199 + $0x3b8] sm:$0xf] %vm6544, %v5998
      %6784 = vst.msk [vmem:[%s199 + $0x3bc] sm:$0xf] %vm6544, %v5999
      %6785 = vst.msk [vmem:[%s199 + $0x3c0] sm:$0xf] %vm6544, %v6000
      %6786 = vst.msk [vmem:[%s199 + $0x3c4] sm:$0xf] %vm6544, %v6001
      %6787 = vst.msk [vmem:[%s199 + $0x3c8] sm:$0xf] %vm6544, %v6002
      %6788 = vst.msk [vmem:[%s199 + $0x3cc] sm:$0xf] %vm6544, %v6003
      %6789 = vst.msk [vmem:[%s199 + $0x3d0] sm:$0xf] %vm6544, %v6004
      %6790 = vst.msk [vmem:[%s199 + $0x3d4] sm:$0xf] %vm6544, %v6005
      %6791 = vst.msk [vmem:[%s199 + $0x3d8] sm:$0xf] %vm6544, %v6006
      %6792 = vst.msk [vmem:[%s199 + $0x3dc] sm:$0xf] %vm6544, %v6007
      %6793 = vst.msk [vmem:[%s199 + $0x3e0] sm:$0xf] %vm6544, %v6008
      %6794 = vst.msk [vmem:[%s199 + $0x3e4] sm:$0xf] %vm6544, %v6009
      %6795 = vst.msk [vmem:[%s199 + $0x3e8] sm:$0xf] %vm6544, %v6010
      %6796 = vst.msk [vmem:[%s199 + $0x3ec] sm:$0xf] %vm6544, %v6011
      %6797 = vst.msk [vmem:[%s199 + $0x3f0] sm:$0xf] %vm6544, %v6012
      %6798 = vst.msk [vmem:[%s199 + $0x3f4] sm:$0xf] %vm6544, %v6013
      %6799 = vst.msk [vmem:[%s199 + $0x3f8] sm:$0xf] %vm6544, %v6014
      %6800 = vst.msk [vmem:[%s199 + $0x3fc] sm:$0xf] %vm6544, %v6015
      %6801 = vst.msk [vmem:[%s199 + $0x400] sm:$0xf] %vm6544, %v6016
      %6802 = vst.msk [vmem:[%s199 + $0x404] sm:$0xf] %vm6544, %v6017
      %6803 = vst.msk [vmem:[%s199 + $0x408] sm:$0xf] %vm6544, %v6018
      %6804 = vst.msk [vmem:[%s199 + $0x40c] sm:$0xf] %vm6544, %v6019
      %6805 = vst.msk [vmem:[%s199 + $0x410] sm:$0xf] %vm6544, %v6020
      %6806 = vst.msk [vmem:[%s199 + $0x414] sm:$0xf] %vm6544, %v6021
      %6807 = vst.msk [vmem:[%s199 + $0x418] sm:$0xf] %vm6544, %v6022
      %6808 = vst.msk [vmem:[%s199 + $0x41c] sm:$0xf] %vm6544, %v6023
      %6809 = vst.msk [vmem:[%s199 + $0x420] sm:$0xf] %vm6544, %v6024
      %6810 = vst.msk [vmem:[%s199 + $0x424] sm:$0xf] %vm6544, %v6025
      %6811 = vst.msk [vmem:[%s199 + $0x428] sm:$0xf] %vm6544, %v6026
      %6812 = vst.msk [vmem:[%s199 + $0x42c] sm:$0xf] %vm6544, %v6027
      %6813 = vst.msk [vmem:[%s199 + $0x430] sm:$0xf] %vm6544, %v6028
      %6814 = vst.msk [vmem:[%s199 + $0x434] sm:$0xf] %vm6544, %v6029
      %6815 = vst.msk [vmem:[%s199 + $0x438] sm:$0xf] %vm6544, %v6030
      %6816 = vst.msk [vmem:[%s199 + $0x43c] sm:$0xf] %vm6544, %v6031
      %6817 = vst.msk [vmem:[%s199 + $0x440] sm:$0xf] %vm6544, %v6032
      %6818 = vst.msk [vmem:[%s199 + $0x444] sm:$0xf] %vm6544, %v6033
      %6819 = vst.msk [vmem:[%s199 + $0x448] sm:$0xf] %vm6544, %v6034
      %6820 = vst.msk [vmem:[%s199 + $0x44c] sm:$0xf] %vm6544, %v6035
      %6821 = vst.msk [vmem:[%s199 + $0x450] sm:$0xf] %vm6544, %v6036
      %6822 = vst.msk [vmem:[%s199 + $0x454] sm:$0xf] %vm6544, %v6037
      %6823 = vst.msk [vmem:[%s199 + $0x458] sm:$0xf] %vm6544, %v6038
      %6824 = vst.msk [vmem:[%s199 + $0x45c] sm:$0xf] %vm6544, %v6039
      %6825 = vst.msk [vmem:[%s199 + $0x460] sm:$0xf] %vm6544, %v6040
      %6826 = vst.msk [vmem:[%s199 + $0x464] sm:$0xf] %vm6544, %v6041
      %6827 = vst.msk [vmem:[%s199 + $0x468] sm:$0xf] %vm6544, %v6042
      %6828 = vst.msk [vmem:[%s199 + $0x46c] sm:$0xf] %vm6544, %v6043
      %6829 = vst.msk [vmem:[%s199 + $0x470] sm:$0xf] %vm6544, %v6044
      %6830 = vst.msk [vmem:[%s199 + $0x474] sm:$0xf] %vm6544, %v6045
      %6831 = vst.msk [vmem:[%s199 + $0x478] sm:$0xf] %vm6544, %v6046
      %6832 = vst.msk [vmem:[%s199 + $0x47c] sm:$0xf] %vm6544, %v6047
      %6833 = vst.msk [vmem:[%s199 + $0x480] sm:$0xf] %vm6544, %v6048
      %6834 = vst.msk [vmem:[%s199 + $0x484] sm:$0xf] %vm6544, %v6049
      %6835 = vst.msk [vmem:[%s199 + $0x488] sm:$0xf] %vm6544, %v6050
      %6836 = vst.msk [vmem:[%s199 + $0x48c] sm:$0xf] %vm6544, %v6051
      %6837 = vst.msk [vmem:[%s199 + $0x490] sm:$0xf] %vm6544, %v6052
      %6838 = vst.msk [vmem:[%s199 + $0x494] sm:$0xf] %vm6544, %v6053
      %6839 = vst.msk [vmem:[%s199 + $0x498] sm:$0xf] %vm6544, %v6054
      %6840 = vst.msk [vmem:[%s199 + $0x49c] sm:$0xf] %vm6544, %v6055
      %6841 = vst.msk [vmem:[%s199 + $0x4a0] sm:$0xf] %vm6544, %v6056
      %6842 = vst.msk [vmem:[%s199 + $0x4a4] sm:$0xf] %vm6544, %v6057
      %6843 = vst.msk [vmem:[%s199 + $0x4a8] sm:$0xf] %vm6544, %v6058
      %6844 = vst.msk [vmem:[%s199 + $0x4ac] sm:$0xf] %vm6544, %v6059
      %6845 = vst.msk [vmem:[%s199 + $0x4b0] sm:$0xf] %vm6544, %v6060
      %6846 = vst.msk [vmem:[%s199 + $0x4b4] sm:$0xf] %vm6544, %v6061
      %6847 = vst.msk [vmem:[%s199 + $0x4b8] sm:$0xf] %vm6544, %v6062
      %6848 = vst.msk [vmem:[%s199 + $0x4bc] sm:$0xf] %vm6544, %v6063
      %6849 = vst.msk [vmem:[%s199 + $0x4c0] sm:$0xf] %vm6544, %v6064
      %6850 = vst.msk [vmem:[%s199 + $0x4c4] sm:$0xf] %vm6544, %v6065
      %6851 = vst.msk [vmem:[%s199 + $0x4c8] sm:$0xf] %vm6544, %v6066
      %6852 = vst.msk [vmem:[%s199 + $0x4cc] sm:$0xf] %vm6544, %v6067
      %6853 = vst.msk [vmem:[%s199 + $0x4d0] sm:$0xf] %vm6544, %v6068
      %6854 = vst.msk [vmem:[%s199 + $0x4d4] sm:$0xf] %vm6544, %v6069
      %6855 = vst.msk [vmem:[%s199 + $0x4d8] sm:$0xf] %vm6544, %v6070
      %6856 = vst.msk [vmem:[%s199 + $0x4dc] sm:$0xf] %vm6544, %v6071
      %6857 = vst.msk [vmem:[%s199 + $0x4e0] sm:$0xf] %vm6544, %v6072
      %6858 = vst.msk [vmem:[%s199 + $0x4e4] sm:$0xf] %vm6544, %v6073
      %6859 = vst.msk [vmem:[%s199 + $0x4e8] sm:$0xf] %vm6544, %v6074
      %6860 = vst.msk [vmem:[%s199 + $0x4ec] sm:$0xf] %vm6544, %v6075
      %6861 = vst.msk [vmem:[%s199 + $0x4f0] sm:$0xf] %vm6544, %v6076
      %6862 = vst.msk [vmem:[%s199 + $0x4f4] sm:$0xf] %vm6544, %v6077
      %6863 = vst.msk [vmem:[%s199 + $0x4f8] sm:$0xf] %vm6544, %v6078
      %6864 = vst.msk [vmem:[%s199 + $0x4fc] sm:$0xf] %vm6544, %v6079
      %6865 = vst.msk [vmem:[%s199 + $0x500] sm:$0xf] %vm6544, %v6080
      %6866 = vst.msk [vmem:[%s199 + $0x504] sm:$0xf] %vm6544, %v6081
      %6867 = vst.msk [vmem:[%s199 + $0x508] sm:$0xf] %vm6544, %v6082
      %6868 = vst.msk [vmem:[%s199 + $0x50c] sm:$0xf] %vm6544, %v6083
      %6869 = vst.msk [vmem:[%s199 + $0x510] sm:$0xf] %vm6544, %v6084
      %6870 = vst.msk [vmem:[%s199 + $0x514] sm:$0xf] %vm6544, %v6085
      %6871 = vst.msk [vmem:[%s199 + $0x518] sm:$0xf] %vm6544, %v6086
      %6872 = vst.msk [vmem:[%s199 + $0x51c] sm:$0xf] %vm6544, %v6087
      %6873 = vst.msk [vmem:[%s199 + $0x520] sm:$0xf] %vm6544, %v6088
      %6874 = vst.msk [vmem:[%s199 + $0x524] sm:$0xf] %vm6544, %v6089
      %6875 = vst.msk [vmem:[%s199 + $0x528] sm:$0xf] %vm6544, %v6090
      %6876 = vst.msk [vmem:[%s199 + $0x52c] sm:$0xf] %vm6544, %v6091
      %6877 = vst.msk [vmem:[%s199 + $0x530] sm:$0xf] %vm6544, %v6092
      %6878 = vst.msk [vmem:[%s199 + $0x534] sm:$0xf] %vm6544, %v6093
      %6879 = vst.msk [vmem:[%s199 + $0x538] sm:$0xf] %vm6544, %v6094
      %6880 = vst.msk [vmem:[%s199 + $0x53c] sm:$0xf] %vm6544, %v6095
      %6881 = vst.msk [vmem:[%s199 + $0x540] sm:$0xf] %vm6544, %v6096
      %6882 = vst.msk [vmem:[%s199 + $0x544] sm:$0xf] %vm6544, %v6097
      %6883 = vst.msk [vmem:[%s199 + $0x548] sm:$0xf] %vm6544, %v6098
      %6884 = vst.msk [vmem:[%s199 + $0x54c] sm:$0xf] %vm6544, %v6099
      %6885 = vst.msk [vmem:[%s199 + $0x550] sm:$0xf] %vm6544, %v6100
      %6886 = vst.msk [vmem:[%s199 + $0x554] sm:$0xf] %vm6544, %v6101
      %6887 = vst.msk [vmem:[%s199 + $0x558] sm:$0xf] %vm6544, %v6102
      %6888 = vst.msk [vmem:[%s199 + $0x55c] sm:$0xf] %vm6544, %v6103
      %6889 = vst.msk [vmem:[%s199 + $0x560] sm:$0xf] %vm6544, %v6104
      %6890 = vst.msk [vmem:[%s199 + $0x564] sm:$0xf] %vm6544, %v6105
      %6891 = vst.msk [vmem:[%s199 + $0x568] sm:$0xf] %vm6544, %v6106
      %6892 = vst.msk [vmem:[%s199 + $0x56c] sm:$0xf] %vm6544, %v6107
      %6893 = vst.msk [vmem:[%s199 + $0x570] sm:$0xf] %vm6544, %v6108
      %6894 = vst.msk [vmem:[%s199 + $0x574] sm:$0xf] %vm6544, %v6109
      %6895 = vst.msk [vmem:[%s199 + $0x578] sm:$0xf] %vm6544, %v6110
      %6896 = vst.msk [vmem:[%s199 + $0x57c] sm:$0xf] %vm6544, %v6111
      %6897 = vst.msk [vmem:[%s199 + $0x580] sm:$0xf] %vm6544, %v6112
      %6898 = vst.msk [vmem:[%s199 + $0x584] sm:$0xf] %vm6544, %v6113
      %6899 = vst.msk [vmem:[%s199 + $0x588] sm:$0xf] %vm6544, %v6114
      %6900 = vst.msk [vmem:[%s199 + $0x58c] sm:$0xf] %vm6544, %v6115
      %6901 = vst.msk [vmem:[%s199 + $0x590] sm:$0xf] %vm6544, %v6116
      %6902 = vst.msk [vmem:[%s199 + $0x594] sm:$0xf] %vm6544, %v6117
      %6903 = vst.msk [vmem:[%s199 + $0x598] sm:$0xf] %vm6544, %v6118
      %6904 = vst.msk [vmem:[%s199 + $0x59c] sm:$0xf] %vm6544, %v6119
      %6905 = vst.msk [vmem:[%s199 + $0x5a0] sm:$0xf] %vm6544, %v6120
      %6906 = vst.msk [vmem:[%s199 + $0x5a4] sm:$0xf] %vm6544, %v6121
      %6907 = vst.msk [vmem:[%s199 + $0x5a8] sm:$0xf] %vm6544, %v6122
      %6908 = vst.msk [vmem:[%s199 + $0x5ac] sm:$0xf] %vm6544, %v6123
      %6909 = vst.msk [vmem:[%s199 + $0x5b0] sm:$0xf] %vm6544, %v6124
      %6910 = vst.msk [vmem:[%s199 + $0x5b4] sm:$0xf] %vm6544, %v6125
      %6911 = vst.msk [vmem:[%s199 + $0x5b8] sm:$0xf] %vm6544, %v6126
      %6912 = vst.msk [vmem:[%s199 + $0x5bc] sm:$0xf] %vm6544, %v6127
      %6913 = vst.msk [vmem:[%s199 + $0x5c0] sm:$0xf] %vm6544, %v6128
      %6914 = vst.msk [vmem:[%s199 + $0x5c4] sm:$0xf] %vm6544, %v6129
      %6915 = vst.msk [vmem:[%s199 + $0x5c8] sm:$0xf] %vm6544, %v6130
      %6916 = vst.msk [vmem:[%s199 + $0x5cc] sm:$0xf] %vm6544, %v6131
      %6917 = vst.msk [vmem:[%s199 + $0x5d0] sm:$0xf] %vm6544, %v6132
      %6918 = vst.msk [vmem:[%s199 + $0x5d4] sm:$0xf] %vm6544, %v6133
      %6919 = vst.msk [vmem:[%s199 + $0x5d8] sm:$0xf] %vm6544, %v6134
      %6920 = vst.msk [vmem:[%s199 + $0x5dc] sm:$0xf] %vm6544, %v6135
      %6921 = vst.msk [vmem:[%s199 + $0x5e0] sm:$0xf] %vm6544, %v6136
      %6922 = vst.msk [vmem:[%s199 + $0x5e4] sm:$0xf] %vm6544, %v6137
      %6923 = vst.msk [vmem:[%s199 + $0x5e8] sm:$0xf] %vm6544, %v6138
      %6924 = vst.msk [vmem:[%s199 + $0x5ec] sm:$0xf] %vm6544, %v6139
      %6925 = vst.msk [vmem:[%s199 + $0x5f0] sm:$0xf] %vm6544, %v6140
      %6926 = vst.msk [vmem:[%s199 + $0x5f4] sm:$0xf] %vm6544, %v6141
      %6927 = vst.msk [vmem:[%s199 + $0x5f8] sm:$0xf] %vm6544, %v6142
      %6928 = vst.msk [vmem:[%s199 + $0x5fc] sm:$0xf] %vm6544, %v6143
      %6929 = vst.msk [vmem:[%s199 + $0x600] sm:$0xf] %vm6544, %v6144
      %6930 = vst.msk [vmem:[%s199 + $0x604] sm:$0xf] %vm6544, %v6145
      %6931 = vst.msk [vmem:[%s199 + $0x608] sm:$0xf] %vm6544, %v6146
      %6932 = vst.msk [vmem:[%s199 + $0x60c] sm:$0xf] %vm6544, %v6147
      %6933 = vst.msk [vmem:[%s199 + $0x610] sm:$0xf] %vm6544, %v6148
      %6934 = vst.msk [vmem:[%s199 + $0x614] sm:$0xf] %vm6544, %v6149
      %6935 = vst.msk [vmem:[%s199 + $0x618] sm:$0xf] %vm6544, %v6150
      %6936 = vst.msk [vmem:[%s199 + $0x61c] sm:$0xf] %vm6544, %v6151
      %s6937 = smul.u32 392, %s15
      %p6938 = scmp.lt.s32.totalorder %s6937, 783
      %s6939 = scalar_select %p6938, %s6937, 783
      %s6940 = smul.addr %s6939, 4
      %s6941 = scalar_lea.vmem %s4, %s6940
      // Predicated region
      $region37: #{tpu_custom_call.1} parent=35 // pred_check
        %p6942 = pneg %p122
      $region38: #{tpu_custom_call.1} parent=35 // pred_check_branch
        %6944 = sbr.rel (%p6942) target = $region40
      $region39: #{tpu_custom_call.1} parent=35 // pred_region
        %s6945 = smul.u32 392, %s15
      $region40: #{tpu_custom_call.1} parent=35 // pred_fallthru
        _
    $region36: #{tpu_custom_call.1} parent=5 // pred_fallthru
      _
    %p6946 = scmp.le.s32.totalorder 2, %s10
    // Predicated region
    $region41: #{tpu_custom_call.1} parent=5 // pred_check
      %p6947 = pneg %p6946
    $region42: #{tpu_custom_call.1} parent=5 // pred_check_branch
      %6949 = sbr.rel (%p6947) target = $region44
    $region43: #{tpu_custom_call.1} parent=5 // pred_region
      %s6950 = ssub.s32 %s10, 2
      // Predicated region
      $region45: #{tpu_custom_call.1} parent=43 // pred_check
        %p6951 = pneg %p128
      $region46: #{tpu_custom_call.1} parent=43 // pred_check_branch
        %6953 = sbr.rel (%p6951) target = $region48
      $region47: #{tpu_custom_call.1} parent=43 // pred_region
        %s6954 = smul.u32 392, %s16
        %p6955 = scmp.lt.s32.totalorder %s6954, 783
        %s6956 = scalar_select %p6955, %s6954, 783
        %s6957 = smul.addr %s6956, 4
        %s6958 = scalar_lea.vmem %s4, %s6957
      $region48: #{tpu_custom_call.1} parent=43 // pred_fallthru
        _
    $region44: #{tpu_custom_call.1} parent=5 // pred_fallthru
      _
  $region6: #{tpu_custom_call.1} parent=0 // loop_footer
    %s14 = sadd.s32 1, %s10
  $region7: #{tpu_custom_call.1} parent=0 // loop_footer_branch
    %9 = sbr.rel target = $region3
  $region8: #{tpu_custom_call.1} parent=0 // loop_exit
    _

</llo_original>
